<compile_context>
chip_gen: v6e
topology: v6e:2x2x1
jax: 0.10.0
libtpu: 0.0.40
codegen_flags: <defaults>
</compile_context>

<pallas_src>
import jax
import jax.numpy as jnp
from jax.experimental import pallas as pl
from jax.experimental.pallas import tpu as pltpu


def _round_up(x, m):
    return ((x + m - 1) // m) * m


def _tpu_vmem_bytes():
    """Physical per-core VMEM capacity; conservative 64 MiB (v7x-like) fallback."""
    try:
        return int(pltpu.get_tpu_info().vmem_capacity_bytes)
    except Exception:
        return 64 << 20


def _choose_tn(n, row_bytes, resident_bytes, vmem_bytes):
    """Batch-tile size.

    * Rows are lane-dense, so row_bytes = C*HW*itemsize is the TRUE VMEM / DMA
      cost (no hidden 128-lane padding) and the budget math is exact.
    * Generation-aware cap: ~12 MiB per streamed (double-buffered) feature buffer
      on 64 MiB parts (v7x, 2 TensorCores), ~24 MiB on 128 MiB parts (v5e/v6e),
      always leaving room for the resident folded weight + bias + output buffers.
    * The grid is only forced to >= 2 steps on the dual-core generation; on
      single-core parts the grid is a serial loop and splitting just adds
      ~0.35 us per step and halves per-step DMA size.
    """
    two_cores = vmem_bytes <= (64 << 20)              # v7x-style budget => 2 TCs
    per_buf_cap = (12 << 20) if two_cores else (24 << 20)
    avail = vmem_bytes - resident_bytes - (4 << 20)
    per_buf_cap = min(per_buf_cap, max(1 << 20, avail // 2))
    cap = max(8, per_buf_cap // max(1, row_bytes))
    if two_cores and n > 8:
        tn = min(pl.cdiv(n, 2), cap)                  # >= 2 steps -> both TCs get work
    else:
        tn = min(n, cap)                              # whole batch in one step if it fits
    if tn < n:
        tn = max(8, (tn // 8) * 8)                    # sublane-aligned partial blocks
    return tn


def _head_kernel(x_ref, w_ref, b_ref, o_ref):
    # x_ref: (TN, K)  lane-dense feature tile (K = C*HW), native dtype (bf16 or f32)
    # w_ref: (K, M)   pool-folded linear weight, same dtype as x (native MXU rate)
    # b_ref: (1, M)   f32 bias
    # o_ref: (TN, M)  f32 logits
    x = jnp.maximum(x_ref[...], 0)                    # ReLU in the streaming dtype
    acc = jnp.dot(x, w_ref[...], preferred_element_type=jnp.float32)  # f32 accumulate
    o_ref[...] = (acc + b_ref[...]).astype(o_ref.dtype)


def _const_spec(shape, index_map, single_buffered):
    """Grid-invariant operand: request a single VMEM buffer (its index_map is
    constant, so it is never re-fetched after step 0); fall back to the default
    double-buffering if pipeline_mode / Buffered(1) is unsupported."""
    if single_buffered:
        try:
            return pl.BlockSpec(shape, index_map, pipeline_mode=pl.Buffered(1))
        except Exception:
            pass
    return pl.BlockSpec(shape, index_map)


def multi_channel_head(feature_nchw, w, b, *, tn=None):
    """ReLU -> global avg pool -> Linear, as one lane-dense Pallas matmul.

    feature_nchw: (N, C, H, W) backbone feature map (f32 or bf16), consumed in NCHW
                  layout directly (reshape to (N, C*H*W) is a free contiguous view).
    w:            (C, M) linear weight (transposed vs torch's (M, C)).
    b:            (M,)   linear bias.
    Returns (N, M) float32 logits.
    """
    N, C, H, W = feature_nchw.shape
    M = w.shape[1]
    HW = H * W
    K = C * HW

    # Lane-dense streamed operand: contiguous view of NCHW, no extra HBM pass.
    x2d = feature_nchw.reshape(N, K)

    # Fold the average pool into the weight. Built in f32 so the fold is numerically
    # the same as pool-then-matmul, then cast to the streaming dtype so the MXU runs
    # at native bf16 rate when the backbone emits bf16.
    # TODO(synk): for very large class counts the (C*HW, M) folded weight may not fit
    #             VMEM; switch to an NHWC (tn, HW, C) pool-then-matmul variant there.
    w_fold = (jnp.repeat(w.astype(jnp.float32), HW, axis=0) / float(HW)).astype(
        feature_nchw.dtype
    )
    b2 = b.reshape(1, M).astype(jnp.float32)

    itemsize = x2d.dtype.itemsize
    vmem_bytes = _tpu_vmem_bytes()
    m_pad = _round_up(M, 128)
    resident_bytes = K * m_pad * w_fold.dtype.itemsize + 8 * m_pad * 4
    if tn is None:
        tn = _choose_tn(N, K * itemsize, resident_bytes, vmem_bytes)
    grid_n = pl.cdiv(N, tn)
    tn_pad = _round_up(tn, 8)

    # VMEM actually needed (feature + output double-buffered; weight/bias counted as
    # double-buffered too so the non-Buffered(1) fallback also fits), with headroom.
    needed = (
        2 * tn_pad * _round_up(K, 128) * itemsize
        + 2 * resident_bytes
        + 2 * tn_pad * m_pad * 4
    )
    vmem_limit = int(min(vmem_bytes, max(32 << 20, needed * 5 // 4)))

    def build(single_buffered):
        return pl.pallas_call(
            _head_kernel,
            out_shape=jax.ShapeDtypeStruct((N, M), jnp.float32),
            grid_spec=pltpu.PrefetchScalarGridSpec(
                num_scalar_prefetch=0,
                grid=(grid_n,),
                in_specs=[
                    # Streamed lane-dense feature tile.
                    pl.BlockSpec((tn, K), lambda n: (n, 0)),
                    # Grid-invariant folded weight / bias, resident in VMEM.
                    _const_spec((K, M), lambda n: (0, 0), single_buffered),
                    _const_spec((1, M), lambda n: (0, 0), single_buffered),
                ],
                out_specs=pl.BlockSpec((tn, M), lambda n: (n, 0)),
            ),
            compiler_params=pltpu.CompilerParams(
                # Batch axis is independent -> shards across dual-TC parts;
                # free on single-core generations.
                dimension_semantics=("parallel",),
                vmem_limit_bytes=vmem_limit,
            ),
        )

    try:
        return build(single_buffered=True)(x2d, w_fold, b2)
    except Exception:
        # Fallback if this jax/Mosaic version rejects pipeline_mode=Buffered(1).
        return build(single_buffered=False)(x2d, w_fold, b2)


def reference_head(feature_nchw, w, b):
    x = jnp.maximum(feature_nchw.astype(jnp.float32), 0.0)
    pooled = jnp.mean(x, axis=(2, 3))              # avg_pool2d(kernel=featmap)
    return pooled @ w.astype(jnp.float32) + b.astype(jnp.float32)[None, :]


if __name__ == "__main__":
    # Small shapes consistent with the module:
    #   inmap = 128 -> featmap = inmap // 32 = 4 (H = W = 4)
    #   planes = 256 (scaled-down stand-in for 512/2048), multi_classes = 4, N = 16.
    N, C, H, W, M = 16, 256, 4, 4, 4

    key = jax.random.PRNGKey(0)
    k_feat, k_w, k_b = jax.random.split(key, 3)

    # Synthetic backbone output, emitted in bf16 (natural TPU backbone dtype).
    feature_bf16 = jax.random.normal(k_feat, (N, C, H, W), dtype=jnp.float32).astype(
        jnp.bfloat16
    )

    # cls weights: weight ~ N(0, 0.01) as in initial_cls_weights (torch stores
    # (classes, planes); we keep the transposed (planes, classes)). The module inits
    # bias to zero; a small nonzero bias is used here so the bias-add path is tested.
    w = 0.01 * jax.random.normal(k_w, (C, M), dtype=jnp.float32)
    b = 0.01 * jax.random.normal(k_b, (M,), dtype=jnp.float32)

    # bf16 streaming path (bf16 ReLU + bf16 MXU inputs, f32 accumulation).
    out_bf16 = jax.block_until_ready(multi_channel_head(feature_bf16, w, b))
    ref_bf16 = reference_head(feature_bf16, w, b)
    assert out_bf16.shape == (N, M)
    assert jnp.allclose(out_bf16, ref_bf16, atol=5e-3, rtol=5e-2), (out_bf16, ref_bf16)

    # f32 path matches the reference tightly.
    feature_f32 = feature_bf16.astype(jnp.float32)
    out_f32 = jax.block_until_ready(multi_channel_head(feature_f32, w, b))
    ref_f32 = reference_head(feature_f32, w, b)
    assert jnp.allclose(out_f32, ref_f32, atol=1e-5, rtol=1e-5), (out_f32, ref_f32)

    print("KERNEL_OK")
</pallas_src>

<mosaic_0001>
module attributes {stable_mosaic.version = 11 : i64} {
  func.func @_head_kernel(%arg0: i32, %arg1: memref<8x4096xbf16, #tpu.memory_space<vmem>>, %arg2: memref<4096x4xbf16, #tpu.memory_space<vmem>>, %arg3: memref<1x4xf32, #tpu.memory_space<vmem>>, %arg4: memref<8x4xf32, #tpu.memory_space<vmem>>) attributes {dimension_semantics = [#tpu.dimension_semantics<parallel>], iteration_bounds = array<i64: 2>, scalar_prefetch = 0 : i64, scratch_operands = 0 : i64, tpu.core_type = #tpu.core_type<tc>, window_params = [{transform_indices = @transform_0, window_bounds = array<i64: 8, 4096>}, {pipeline_mode = #tpu.pipeline_mode<synchronous>, transform_indices = @transform_1, window_bounds = array<i64: 4096, 4>}, {pipeline_mode = #tpu.pipeline_mode<synchronous>, transform_indices = @transform_2, window_bounds = array<i64: 1, 4>}, {transform_indices = @transform_3, window_bounds = array<i64: 8, 4>}]} {
    %c0 = arith.constant 0 : index
    %c0_0 = arith.constant 0 : index
    %0 = vector.load %arg1[%c0, %c0_0] : memref<8x4096xbf16, #tpu.memory_space<vmem>>, vector<8x4096xbf16>
    %cst = arith.constant 0.000000e+00 : bf16
    %1 = vector.broadcast %cst : bf16 to vector<8x4096xbf16>
    %2 = arith.maximumf %0, %1 : vector<8x4096xbf16>
    %c0_1 = arith.constant 0 : index
    %c0_2 = arith.constant 0 : index
    %3 = vector.load %arg2[%c0_1, %c0_2] : memref<4096x4xbf16, #tpu.memory_space<vmem>>, vector<4096x4xbf16>
    %cst_3 = arith.constant dense<0.000000e+00> : vector<8x4xf32>
    %4 = tpu.matmul %2, %3, %cst_3 {dimension_numbers = #tpu.dot_dimension_numbers<[1], [0], [0], [1], [0, 0, 1, 1], [], []>} : vector<8x4096xbf16>, vector<4096x4xbf16>, vector<8x4xf32> -> vector<8x4xf32>
    %c0_4 = arith.constant 0 : index
    %c0_5 = arith.constant 0 : index
    %5 = vector.load %arg3[%c0_4, %c0_5] : memref<1x4xf32, #tpu.memory_space<vmem>>, vector<1x4xf32>
    %6 = vector.broadcast %5 : vector<1x4xf32> to vector<8x4xf32>
    %7 = arith.addf %4, %6 : vector<8x4xf32>
    %c0_6 = arith.constant 0 : index
    %c0_7 = arith.constant 0 : index
    %8 = vector.load %arg4[%c0_6, %c0_7] : memref<8x4xf32, #tpu.memory_space<vmem>>, vector<8x4xf32>
    tpu.vector_store %arg4[%c0_6, %c0_7], %7 {strides = array<i32>} : memref<8x4xf32, #tpu.memory_space<vmem>>, vector<8x4xf32>,
    return
  }
  func.func @transform_0(%arg0: i32) -> (i32, i32) {
    %c0_i32 = arith.constant 0 : i32
    %c0_i32_0 = arith.constant 0 : i32
    return %arg0, %c0_i32 : i32, i32
  }
  func.func @transform_1(%arg0: i32) -> (i32, i32) {
    %c0_i32 = arith.constant 0 : i32
    %c0_i32_0 = arith.constant 0 : i32
    %c0_i32_1 = arith.constant 0 : i32
    return %c0_i32, %c0_i32_0 : i32, i32
  }
  func.func @transform_2(%arg0: i32) -> (i32, i32) {
    %c0_i32 = arith.constant 0 : i32
    %c0_i32_0 = arith.constant 0 : i32
    %c0_i32_1 = arith.constant 0 : i32
    return %c0_i32, %c0_i32_0 : i32, i32
  }
  func.func @transform_3(%arg0: i32) -> (i32, i32) {
    %c0_i32 = arith.constant 0 : i32
    %c0_i32_0 = arith.constant 0 : i32
    return %arg0, %c0_i32 : i32, i32
  }
}

module attributes {stable_mosaic.version = 11 : i64} {
  func.func @_head_kernel(%arg0: i32, %arg1: memref<8x4096xbf16, #tpu.memory_space<vmem>>, %arg2: memref<4096x4xbf16, #tpu.memory_space<vmem>>, %arg3: memref<1x4xf32, #tpu.memory_space<vmem>>, %arg4: memref<8x4xf32, #tpu.memory_space<vmem>>) attributes {dimension_semantics = [#tpu.dimension_semantics<parallel>], iteration_bounds = array<i64: 2>, scalar_prefetch = 0 : i64, scratch_operands = 0 : i64, tpu.core_type = #tpu.core_type<tc>, window_params = [{transform_indices = @transform_0, window_bounds = array<i64: 8, 4096>}, {pipeline_mode = #tpu.pipeline_mode<synchronous>, transform_indices = @transform_1, window_bounds = array<i64: 4096, 4>}, {pipeline_mode = #tpu.pipeline_mode<synchronous>, transform_indices = @transform_2, window_bounds = array<i64: 1, 4>}, {transform_indices = @transform_3, window_bounds = array<i64: 8, 4>}]} {
    %c0 = arith.constant 0 : index
    %c0_0 = arith.constant 0 : index
    %0 = vector.load %arg1[%c0, %c0_0] : memref<8x4096xbf16, #tpu.memory_space<vmem>>, vector<8x4096xbf16>
    %cst = arith.constant 0.000000e+00 : bf16
    %1 = vector.broadcast %cst : bf16 to vector<8x4096xbf16>
    %2 = arith.maximumf %0, %1 : vector<8x4096xbf16>
    %c0_1 = arith.constant 0 : index
    %c0_2 = arith.constant 0 : index
    %3 = vector.load %arg2[%c0_1, %c0_2] : memref<4096x4xbf16, #tpu.memory_space<vmem>>, vector<4096x4xbf16>
    %cst_3 = arith.constant dense<0.000000e+00> : vector<8x4xf32>
    %4 = tpu.matmul %2, %3, %cst_3 {dimension_numbers = #tpu.dot_dimension_numbers<[1], [0], [0], [1], [0, 0, 1, 1], [], []>} : vector<8x4096xbf16>, vector<4096x4xbf16>, vector<8x4xf32> -> vector<8x4xf32>
    %c0_4 = arith.constant 0 : index
    %c0_5 = arith.constant 0 : index
    %5 = vector.load %arg3[%c0_4, %c0_5] : memref<1x4xf32, #tpu.memory_space<vmem>>, vector<1x4xf32>
    %6 = vector.broadcast %5 : vector<1x4xf32> to vector<8x4xf32>
    %7 = arith.addf %4, %6 : vector<8x4xf32>
    %c0_6 = arith.constant 0 : index
    %c0_7 = arith.constant 0 : index
    %8 = vector.load %arg4[%c0_6, %c0_7] : memref<8x4xf32, #tpu.memory_space<vmem>>, vector<8x4xf32>
    tpu.vector_store %arg4[%c0_6, %c0_7], %7 {strides = array<i32>} : memref<8x4xf32, #tpu.memory_space<vmem>>, vector<8x4xf32>,
    return
  }
  func.func @transform_0(%arg0: i32) -> (i32, i32) {
    %c0_i32 = arith.constant 0 : i32
    %c0_i32_0 = arith.constant 0 : i32
    return %arg0, %c0_i32 : i32, i32
  }
  func.func @transform_1(%arg0: i32) -> (i32, i32) {
    %c0_i32 = arith.constant 0 : i32
    %c0_i32_0 = arith.constant 0 : i32
    %c0_i32_1 = arith.constant 0 : i32
    return %c0_i32, %c0_i32_0 : i32, i32
  }
  func.func @transform_2(%arg0: i32) -> (i32, i32) {
    %c0_i32 = arith.constant 0 : i32
    %c0_i32_0 = arith.constant 0 : i32
    %c0_i32_1 = arith.constant 0 : i32
    return %c0_i32, %c0_i32_0 : i32, i32
  }
  func.func @transform_3(%arg0: i32) -> (i32, i32) {
    %c0_i32 = arith.constant 0 : i32
    %c0_i32_0 = arith.constant 0 : i32
    return %arg0, %c0_i32 : i32, i32
  }
}

</mosaic_0001>

<llo_original>
// kernel: tpu_custom_call.1
$region0: #{tpu_custom_call.1}
  #allocation0 [shape = 'u32[]', space=smem, size = 0x4, offset = 0x4, fixed_abs, tag = 'smem constant byte address 0x4 - core index']
  #allocation1 [shape = 'u32[144,128]{1,0:T(1,128)}', space=vmem, size = 0x12000, scoped, tag = 'internal scratch']
  %s0 = inlined_call_operand.vmem [shape: bf16[16,4096], index: 0, kind: input, shape index: {}]
  %s1 = inlined_call_operand.vmem [shape: bf16[4096,4], index: 1, kind: input, shape index: {}]
  %s2 = inlined_call_operand.vmem [shape: f32[1,4], index: 2, kind: input, shape index: {}]
  %s3 = inlined_call_operand.vmem [shape: f32[16,4], index: 3, kind: output, shape index: {}]
  %s4 = sld [smem:[#allocation0]]
  $region45: #{tpu_custom_call.1} parent=0
    _
  %s6 = ssub.s32 1, %s4
  %s7 = scalar_select 0, %s6, %s4
  loop: start=0, step=1, limit=4
  $region2: #{tpu_custom_call.1} parent=0 // loop_pre_header
    _
  $region3: #{tpu_custom_call.1} parent=0 // loop_header
    %s9 = sphi 0, %s13
    %p10 = scmp.ge.s32.totalorder %s9, 4
    %s19 = sphi 0, %s21
    %s22 = sphi 0, %s19
    %s23 = sphi 0, %s22
    %s39 = sphi 0, %s23
    %s43 = sphi 0, %s43
    %s45 = sphi 0, %s43
    %s46 = sphi 0, %s45
    %s60 = sphi 0, %s46
    %s64 = sphi 0, %s64
    %s66 = sphi 0, %s64
    %s67 = sphi 0, %s66
    %s81 = sphi 0, %s67
    %s87 = sphi 0, %s89
    %s90 = sphi 0, %s87
    %s91 = sphi 0, %s90
    %s107 = sphi 0, %s91
  $region4: #{tpu_custom_call.1} parent=0 // loop_header_branch
    %12 = sbr.rel (%p10) target = $region8
  $region5: #{tpu_custom_call.1} parent=0 // loop_body
    %s14 = ssub.s32 %s9, 1
    %s15 = ssub.s32 %s9, 2
    %s16 = sadd.s32 %s9, 1
    %s17 = ssub.s32 %s9, %s16
    %p18 = scmp.eq.s32.totalorder %s17, 0
    %s20 = sadd.s32 %s19, 1
    %s21 = scalar_select %p18, %s19, %s20
    %p24 = pneg %p18
    %p25 = scmp.eq.s32.totalorder %s9, 1
    %p26 = por %p24, %p25
    %p27 = scmp.ne.s32.totalorder %s19, %s22
    %p28 = scmp.eq.s32.totalorder %s9, 0
    %p29 = por %p27, %p28
    %p30 = scmp.ne.s32.totalorder %s19, %s22
    %p31 = scmp.eq.s32.totalorder %s14, 1
    %p32 = por %p30, %p31
    %p33 = scmp.ne.s32.totalorder %s22, %s23
    %p34 = scmp.eq.s32.totalorder %s14, 0
    %p35 = por %p33, %p34
    %p36 = scmp.ne.s32.totalorder %s22, %s23
    %p37 = scmp.eq.s32.totalorder %s15, 1
    %p38 = por %p36, %p37
    %p40 = scmp.ne.s32.totalorder %s23, %s39
    %p41 = scmp.eq.s32.totalorder %s15, 0
    %p42 = por %p40, %p41
    %s44 = sadd.s32 %s43, 1
    %p47 = scmp.eq.s32.totalorder %s9, 1
    %p48 = scmp.ne.s32.totalorder %s43, %s45
    %p49 = scmp.eq.s32.totalorder %s9, 0
    %p50 = por %p48, %p49
    %p51 = scmp.ne.s32.totalorder %s43, %s45
    %p52 = scmp.eq.s32.totalorder %s14, 1
    %p53 = por %p51, %p52
    %p54 = scmp.ne.s32.totalorder %s45, %s46
    %p55 = scmp.eq.s32.totalorder %s14, 0
    %p56 = por %p54, %p55
    %p57 = scmp.ne.s32.totalorder %s45, %s46
    %p58 = scmp.eq.s32.totalorder %s15, 1
    %p59 = por %p57, %p58
    %p61 = scmp.ne.s32.totalorder %s46, %s60
    %p62 = scmp.eq.s32.totalorder %s15, 0
    %p63 = por %p61, %p62
    %s65 = sadd.s32 %s64, 1
    %p68 = scmp.eq.s32.totalorder %s9, 1
    %p69 = scmp.ne.s32.totalorder %s64, %s66
    %p70 = scmp.eq.s32.totalorder %s9, 0
    %p71 = por %p69, %p70
    %p72 = scmp.ne.s32.totalorder %s64, %s66
    %p73 = scmp.eq.s32.totalorder %s14, 1
    %p74 = por %p72, %p73
    %p75 = scmp.ne.s32.totalorder %s66, %s67
    %p76 = scmp.eq.s32.totalorder %s14, 0
    %p77 = por %p75, %p76
    %p78 = scmp.ne.s32.totalorder %s66, %s67
    %p79 = scmp.eq.s32.totalorder %s15, 1
    %p80 = por %p78, %p79
    %p82 = scmp.ne.s32.totalorder %s67, %s81
    %p83 = scmp.eq.s32.totalorder %s15, 0
    %p84 = por %p82, %p83
    %s85 = ssub.s32 %s9, %s16
    %p86 = scmp.eq.s32.totalorder %s85, 0
    %s88 = sadd.s32 %s87, 1
    %s89 = scalar_select %p86, %s87, %s88
    %p92 = pneg %p86
    %p93 = scmp.eq.s32.totalorder %s9, 1
    %p94 = por %p92, %p93
    %p95 = scmp.ne.s32.totalorder %s87, %s90
    %p96 = scmp.eq.s32.totalorder %s9, 0
    %p97 = por %p95, %p96
    %p98 = scmp.ne.s32.totalorder %s87, %s90
    %p99 = scmp.eq.s32.totalorder %s14, 1
    %p100 = por %p98, %p99
    %p101 = scmp.ne.s32.totalorder %s90, %s91
    %p102 = scmp.eq.s32.totalorder %s14, 0
    %p103 = por %p101, %p102
    %p104 = scmp.ne.s32.totalorder %s90, %s91
    %p105 = scmp.eq.s32.totalorder %s15, 1
    %p106 = por %p104, %p105
    %p108 = scmp.ne.s32.totalorder %s91, %s107
    %p109 = scmp.eq.s32.totalorder %s15, 0
    %p110 = por %p108, %p109
    %p111 = scmp.le.s32.totalorder 1, %s9
    %p112 = scmp.lt.s32.totalorder %s9, 3
    %p113 = pnand %p111, %p112
    %p114 = pneg %p113
    // Predicated region
    $region9: #{tpu_custom_call.1} parent=5 // pred_check
      _
    $region10: #{tpu_custom_call.1} parent=5 // pred_check_branch
      %116 = sbr.rel (%p113) target = $region12
    $region11: #{tpu_custom_call.1} parent=5 // pred_region
      %s117 = ssub.s32 %s9, 1
      // Predicated region
      $region13: #{tpu_custom_call.1} parent=11 // pred_check
        %p118 = pneg %p56
      $region14: #{tpu_custom_call.1} parent=11 // pred_check_branch
        %120 = sbr.rel (%p118) target = $region16
      $region15: #{tpu_custom_call.1} parent=11 // pred_region
        _
      $region16: #{tpu_custom_call.1} parent=11 // pred_fallthru
        _
      // Predicated region
      $region17: #{tpu_custom_call.1} parent=11 // pred_check
        %p121 = pneg %p77
      $region18: #{tpu_custom_call.1} parent=11 // pred_check_branch
        %123 = sbr.rel (%p121) target = $region20
      $region19: #{tpu_custom_call.1} parent=11 // pred_region
        _
      $region20: #{tpu_custom_call.1} parent=11 // pred_fallthru
        _
    $region12: #{tpu_custom_call.1} parent=5 // pred_fallthru
      _
    %p124 = scmp.lt.s32.totalorder %s9, 2
    // Predicated region
    $region21: #{tpu_custom_call.1} parent=5 // pred_check
      %p125 = pneg %p124
    $region22: #{tpu_custom_call.1} parent=5 // pred_check_branch
      %127 = sbr.rel (%p125) target = $region24
    $region23: #{tpu_custom_call.1} parent=5 // pred_region
      // Predicated region
      $region25: #{tpu_custom_call.1} parent=23 // pred_check
        %p128 = pneg %p29
      $region26: #{tpu_custom_call.1} parent=23 // pred_check_branch
        %130 = sbr.rel (%p128) target = $region28
      $region27: #{tpu_custom_call.1} parent=23 // pred_region
        %p131 = scmp.lt.s32.totalorder %s9, 1
        %s132 = scalar_select %p131, %s9, 1
        %s133 = smul.addr %s132, 32
        %s134 = smul.addr %s133, 4
        %s135 = scalar_lea.vmem %s0, %s134
      $region28: #{tpu_custom_call.1} parent=23 // pred_fallthru
        _
    $region24: #{tpu_custom_call.1} parent=5 // pred_fallthru
      _
    %p136 = scmp.le.s32.totalorder 1, %s9
    %p137 = scmp.lt.s32.totalorder %s9, 3
    %p138 = pnand %p136, %p137
    %p139 = pneg %p138
    // Predicated region
    $region29: #{tpu_custom_call.1} parent=5 // pred_check
      _
    $region30: #{tpu_custom_call.1} parent=5 // pred_check_branch
      %141 = sbr.rel (%p138) target = $region32
    $region31: #{tpu_custom_call.1} parent=5 // pred_region
      %s142 = ssub.s32 %s9, 1
      %p143 = scmp.lt.s32.totalorder %s14, 1
      %s144 = scalar_select %p143, %s14, 1
      %s145 = smul.addr %s144, 32
      %s146 = smul.addr %s145, 4
      %s147 = scalar_lea.vmem %s0, %s146
      %p148 = pneg %p35
      %p149 = pneg %p32
      %p150 = pneg %p56
      %p151 = pneg %p53
      %p152 = pneg %p77
      %p153 = pneg %p74
      %p154 = pneg %p103
      %p155 = pneg %p100
      %p156 = scmp.lt.s32.totalorder %s14, 1
      %s157 = scalar_select %p156, %s14, 1
      %s158 = smul.addr %s157, 8
      %s159 = scalar_lea.vmem %s3, %s158
      %p160 = scmp.lt.s32.totalorder %s14, 1
      %s161 = scalar_select %p160, %s14, 1
      %s162 = smul.addr %s161, 32
      %s163 = smul.addr %s162, 4
      %s164 = scalar_lea.vmem %s0, %s163
      %p165 = scmp.lt.s32.totalorder %s14, 1
      %s166 = scalar_select %p165, %s14, 1
      %s167 = smul.addr %s166, 8
      %s168 = scalar_lea.vmem %s3, %s167
      %v170 = vld [vmem:[%s164] sm:$0xff]
      %v171 = vld [vmem:[%s164 + $0x8] sm:$0xff]
      %v172 = vld [vmem:[%s164 + $0x10] sm:$0xff]
      %v173 = vld [vmem:[%s164 + $0x18] sm:$0xff]
      %v174 = vld [vmem:[%s164 + $0x20] sm:$0xff]
      %v175 = vld [vmem:[%s164 + $0x28] sm:$0xff]
      %v176 = vld [vmem:[%s164 + $0x30] sm:$0xff]
      %v177 = vld [vmem:[%s164 + $0x38] sm:$0xff]
      %v178 = vld [vmem:[%s164 + $0x40] sm:$0xff]
      %v179 = vld [vmem:[%s164 + $0x48] sm:$0xff]
      %v180 = vld [vmem:[%s164 + $0x50] sm:$0xff]
      %v181 = vld [vmem:[%s164 + $0x58] sm:$0xff]
      %v182 = vld [vmem:[%s164 + $0x60] sm:$0xff]
      %v183 = vld [vmem:[%s164 + $0x68] sm:$0xff]
      %v184 = vld [vmem:[%s164 + $0x70] sm:$0xff]
      %v185 = vld [vmem:[%s164 + $0x78] sm:$0xff]
      %v186 = vmax.bf16 %v170, 0
      %v187 = vmax.bf16 %v171, 0
      %v188 = vmax.bf16 %v172, 0
      %v189 = vmax.bf16 %v173, 0
      %v190 = vmax.bf16 %v174, 0
      %v191 = vmax.bf16 %v175, 0
      %v192 = vmax.bf16 %v176, 0
      %v193 = vmax.bf16 %v177, 0
      %v194 = vmax.bf16 %v178, 0
      %v195 = vmax.bf16 %v179, 0
      %v196 = vmax.bf16 %v180, 0
      %v197 = vmax.bf16 %v181, 0
      %v198 = vmax.bf16 %v182, 0
      %v199 = vmax.bf16 %v183, 0
      %v200 = vmax.bf16 %v184, 0
      %v201 = vmax.bf16 %v185, 0
      %v202 = vld [vmem:[%s1] sm:$0xf]
      %v203 = vld [vmem:[%s1 + $0x4] sm:$0xf]
      %v204 = vld [vmem:[%s1 + $0x8] sm:$0xf]
      %v205 = vld [vmem:[%s1 + $0xc] sm:$0xf]
      %v206 = vld [vmem:[%s1 + $0x10] sm:$0xf]
      %v207 = vld [vmem:[%s1 + $0x14] sm:$0xf]
      %v208 = vld [vmem:[%s1 + $0x18] sm:$0xf]
      %v209 = vld [vmem:[%s1 + $0x1c] sm:$0xf]
      %v210 = vld [vmem:[%s1 + $0x20] sm:$0xf]
      %v211 = vld [vmem:[%s1 + $0x24] sm:$0xf]
      %v212 = vld [vmem:[%s1 + $0x28] sm:$0xf]
      %v213 = vld [vmem:[%s1 + $0x2c] sm:$0xf]
      %v214 = vld [vmem:[%s1 + $0x30] sm:$0xf]
      %v215 = vld [vmem:[%s1 + $0x34] sm:$0xf]
      %v216 = vld [vmem:[%s1 + $0x38] sm:$0xf]
      %v217 = vld [vmem:[%s1 + $0x3c] sm:$0xf]
      %v218 = vld [vmem:[%s1 + $0x40] sm:$0xf]
      %v219 = vld [vmem:[%s1 + $0x44] sm:$0xf]
      %v220 = vld [vmem:[%s1 + $0x48] sm:$0xf]
      %v221 = vld [vmem:[%s1 + $0x4c] sm:$0xf]
      %v222 = vld [vmem:[%s1 + $0x50] sm:$0xf]
      %v223 = vld [vmem:[%s1 + $0x54] sm:$0xf]
      %v224 = vld [vmem:[%s1 + $0x58] sm:$0xf]
      %v225 = vld [vmem:[%s1 + $0x5c] sm:$0xf]
      %v226 = vld [vmem:[%s1 + $0x60] sm:$0xf]
      %v227 = vld [vmem:[%s1 + $0x64] sm:$0xf]
      %v228 = vld [vmem:[%s1 + $0x68] sm:$0xf]
      %v229 = vld [vmem:[%s1 + $0x6c] sm:$0xf]
      %v230 = vld [vmem:[%s1 + $0x70] sm:$0xf]
      %v231 = vld [vmem:[%s1 + $0x74] sm:$0xf]
      %v232 = vld [vmem:[%s1 + $0x78] sm:$0xf]
      %v233 = vld [vmem:[%s1 + $0x7c] sm:$0xf]
      %v234 = vld [vmem:[%s1 + $0x80] sm:$0xf]
      %v235 = vld [vmem:[%s1 + $0x84] sm:$0xf]
      %v236 = vld [vmem:[%s1 + $0x88] sm:$0xf]
      %v237 = vld [vmem:[%s1 + $0x8c] sm:$0xf]
      %v238 = vld [vmem:[%s1 + $0x90] sm:$0xf]
      %v239 = vld [vmem:[%s1 + $0x94] sm:$0xf]
      %v240 = vld [vmem:[%s1 + $0x98] sm:$0xf]
      %v241 = vld [vmem:[%s1 + $0x9c] sm:$0xf]
      %v242 = vld [vmem:[%s1 + $0xa0] sm:$0xf]
      %v243 = vld [vmem:[%s1 + $0xa4] sm:$0xf]
      %v244 = vld [vmem:[%s1 + $0xa8] sm:$0xf]
      %v245 = vld [vmem:[%s1 + $0xac] sm:$0xf]
      %v246 = vld [vmem:[%s1 + $0xb0] sm:$0xf]
      %v247 = vld [vmem:[%s1 + $0xb4] sm:$0xf]
      %v248 = vld [vmem:[%s1 + $0xb8] sm:$0xf]
      %v249 = vld [vmem:[%s1 + $0xbc] sm:$0xf]
      %v250 = vld [vmem:[%s1 + $0xc0] sm:$0xf]
      %v251 = vld [vmem:[%s1 + $0xc4] sm:$0xf]
      %v252 = vld [vmem:[%s1 + $0xc8] sm:$0xf]
      %v253 = vld [vmem:[%s1 + $0xcc] sm:$0xf]
      %v254 = vld [vmem:[%s1 + $0xd0] sm:$0xf]
      %v255 = vld [vmem:[%s1 + $0xd4] sm:$0xf]
      %v256 = vld [vmem:[%s1 + $0xd8] sm:$0xf]
      %v257 = vld [vmem:[%s1 + $0xdc] sm:$0xf]
      %v258 = vld [vmem:[%s1 + $0xe0] sm:$0xf]
      %v259 = vld [vmem:[%s1 + $0xe4] sm:$0xf]
      %v260 = vld [vmem:[%s1 + $0xe8] sm:$0xf]
      %v261 = vld [vmem:[%s1 + $0xec] sm:$0xf]
      %v262 = vld [vmem:[%s1 + $0xf0] sm:$0xf]
      %v263 = vld [vmem:[%s1 + $0xf4] sm:$0xf]
      %v264 = vld [vmem:[%s1 + $0xf8] sm:$0xf]
      %v265 = vld [vmem:[%s1 + $0xfc] sm:$0xf]
      %v266 = vld [vmem:[%s1 + $0x100] sm:$0xf]
      %v267 = vld [vmem:[%s1 + $0x104] sm:$0xf]
      %v268 = vld [vmem:[%s1 + $0x108] sm:$0xf]
      %v269 = vld [vmem:[%s1 + $0x10c] sm:$0xf]
      %v270 = vld [vmem:[%s1 + $0x110] sm:$0xf]
      %v271 = vld [vmem:[%s1 + $0x114] sm:$0xf]
      %v272 = vld [vmem:[%s1 + $0x118] sm:$0xf]
      %v273 = vld [vmem:[%s1 + $0x11c] sm:$0xf]
      %v274 = vld [vmem:[%s1 + $0x120] sm:$0xf]
      %v275 = vld [vmem:[%s1 + $0x124] sm:$0xf]
      %v276 = vld [vmem:[%s1 + $0x128] sm:$0xf]
      %v277 = vld [vmem:[%s1 + $0x12c] sm:$0xf]
      %v278 = vld [vmem:[%s1 + $0x130] sm:$0xf]
      %v279 = vld [vmem:[%s1 + $0x134] sm:$0xf]
      %v280 = vld [vmem:[%s1 + $0x138] sm:$0xf]
      %v281 = vld [vmem:[%s1 + $0x13c] sm:$0xf]
      %v282 = vld [vmem:[%s1 + $0x140] sm:$0xf]
      %v283 = vld [vmem:[%s1 + $0x144] sm:$0xf]
      %v284 = vld [vmem:[%s1 + $0x148] sm:$0xf]
      %v285 = vld [vmem:[%s1 + $0x14c] sm:$0xf]
      %v286 = vld [vmem:[%s1 + $0x150] sm:$0xf]
      %v287 = vld [vmem:[%s1 + $0x154] sm:$0xf]
      %v288 = vld [vmem:[%s1 + $0x158] sm:$0xf]
      %v289 = vld [vmem:[%s1 + $0x15c] sm:$0xf]
      %v290 = vld [vmem:[%s1 + $0x160] sm:$0xf]
      %v291 = vld [vmem:[%s1 + $0x164] sm:$0xf]
      %v292 = vld [vmem:[%s1 + $0x168] sm:$0xf]
      %v293 = vld [vmem:[%s1 + $0x16c] sm:$0xf]
      %v294 = vld [vmem:[%s1 + $0x170] sm:$0xf]
      %v295 = vld [vmem:[%s1 + $0x174] sm:$0xf]
      %v296 = vld [vmem:[%s1 + $0x178] sm:$0xf]
      %v297 = vld [vmem:[%s1 + $0x17c] sm:$0xf]
      %v298 = vld [vmem:[%s1 + $0x180] sm:$0xf]
      %v299 = vld [vmem:[%s1 + $0x184] sm:$0xf]
      %v300 = vld [vmem:[%s1 + $0x188] sm:$0xf]
      %v301 = vld [vmem:[%s1 + $0x18c] sm:$0xf]
      %v302 = vld [vmem:[%s1 + $0x190] sm:$0xf]
      %v303 = vld [vmem:[%s1 + $0x194] sm:$0xf]
      %v304 = vld [vmem:[%s1 + $0x198] sm:$0xf]
      %v305 = vld [vmem:[%s1 + $0x19c] sm:$0xf]
      %v306 = vld [vmem:[%s1 + $0x1a0] sm:$0xf]
      %v307 = vld [vmem:[%s1 + $0x1a4] sm:$0xf]
      %v308 = vld [vmem:[%s1 + $0x1a8] sm:$0xf]
      %v309 = vld [vmem:[%s1 + $0x1ac] sm:$0xf]
      %v310 = vld [vmem:[%s1 + $0x1b0] sm:$0xf]
      %v311 = vld [vmem:[%s1 + $0x1b4] sm:$0xf]
      %v312 = vld [vmem:[%s1 + $0x1b8] sm:$0xf]
      %v313 = vld [vmem:[%s1 + $0x1bc] sm:$0xf]
      %v314 = vld [vmem:[%s1 + $0x1c0] sm:$0xf]
      %v315 = vld [vmem:[%s1 + $0x1c4] sm:$0xf]
      %v316 = vld [vmem:[%s1 + $0x1c8] sm:$0xf]
      %v317 = vld [vmem:[%s1 + $0x1cc] sm:$0xf]
      %v318 = vld [vmem:[%s1 + $0x1d0] sm:$0xf]
      %v319 = vld [vmem:[%s1 + $0x1d4] sm:$0xf]
      %v320 = vld [vmem:[%s1 + $0x1d8] sm:$0xf]
      %v321 = vld [vmem:[%s1 + $0x1dc] sm:$0xf]
      %v322 = vld [vmem:[%s1 + $0x1e0] sm:$0xf]
      %v323 = vld [vmem:[%s1 + $0x1e4] sm:$0xf]
      %v324 = vld [vmem:[%s1 + $0x1e8] sm:$0xf]
      %v325 = vld [vmem:[%s1 + $0x1ec] sm:$0xf]
      %v326 = vld [vmem:[%s1 + $0x1f0] sm:$0xf]
      %v327 = vld [vmem:[%s1 + $0x1f4] sm:$0xf]
      %v328 = vld [vmem:[%s1 + $0x1f8] sm:$0xf]
      %v329 = vld [vmem:[%s1 + $0x1fc] sm:$0xf]
      %v330 = vld [vmem:[%s1 + $0x200] sm:$0xf]
      %v331 = vld [vmem:[%s1 + $0x204] sm:$0xf]
      %v332 = vld [vmem:[%s1 + $0x208] sm:$0xf]
      %v333 = vld [vmem:[%s1 + $0x20c] sm:$0xf]
      %v334 = vld [vmem:[%s1 + $0x210] sm:$0xf]
      %v335 = vld [vmem:[%s1 + $0x214] sm:$0xf]
      %v336 = vld [vmem:[%s1 + $0x218] sm:$0xf]
      %v337 = vld [vmem:[%s1 + $0x21c] sm:$0xf]
      %v338 = vld [vmem:[%s1 + $0x220] sm:$0xf]
      %v339 = vld [vmem:[%s1 + $0x224] sm:$0xf]
      %v340 = vld [vmem:[%s1 + $0x228] sm:$0xf]
      %v341 = vld [vmem:[%s1 + $0x22c] sm:$0xf]
      %v342 = vld [vmem:[%s1 + $0x230] sm:$0xf]
      %v343 = vld [vmem:[%s1 + $0x234] sm:$0xf]
      %v344 = vld [vmem:[%s1 + $0x238] sm:$0xf]
      %v345 = vld [vmem:[%s1 + $0x23c] sm:$0xf]
      %v346 = vld [vmem:[%s1 + $0x240] sm:$0xf]
      %v347 = vld [vmem:[%s1 + $0x244] sm:$0xf]
      %v348 = vld [vmem:[%s1 + $0x248] sm:$0xf]
      %v349 = vld [vmem:[%s1 + $0x24c] sm:$0xf]
      %v350 = vld [vmem:[%s1 + $0x250] sm:$0xf]
      %v351 = vld [vmem:[%s1 + $0x254] sm:$0xf]
      %v352 = vld [vmem:[%s1 + $0x258] sm:$0xf]
      %v353 = vld [vmem:[%s1 + $0x25c] sm:$0xf]
      %v354 = vld [vmem:[%s1 + $0x260] sm:$0xf]
      %v355 = vld [vmem:[%s1 + $0x264] sm:$0xf]
      %v356 = vld [vmem:[%s1 + $0x268] sm:$0xf]
      %v357 = vld [vmem:[%s1 + $0x26c] sm:$0xf]
      %v358 = vld [vmem:[%s1 + $0x270] sm:$0xf]
      %v359 = vld [vmem:[%s1 + $0x274] sm:$0xf]
      %v360 = vld [vmem:[%s1 + $0x278] sm:$0xf]
      %v361 = vld [vmem:[%s1 + $0x27c] sm:$0xf]
      %v362 = vld [vmem:[%s1 + $0x280] sm:$0xf]
      %v363 = vld [vmem:[%s1 + $0x284] sm:$0xf]
      %v364 = vld [vmem:[%s1 + $0x288] sm:$0xf]
      %v365 = vld [vmem:[%s1 + $0x28c] sm:$0xf]
      %v366 = vld [vmem:[%s1 + $0x290] sm:$0xf]
      %v367 = vld [vmem:[%s1 + $0x294] sm:$0xf]
      %v368 = vld [vmem:[%s1 + $0x298] sm:$0xf]
      %v369 = vld [vmem:[%s1 + $0x29c] sm:$0xf]
      %v370 = vld [vmem:[%s1 + $0x2a0] sm:$0xf]
      %v371 = vld [vmem:[%s1 + $0x2a4] sm:$0xf]
      %v372 = vld [vmem:[%s1 + $0x2a8] sm:$0xf]
      %v373 = vld [vmem:[%s1 + $0x2ac] sm:$0xf]
      %v374 = vld [vmem:[%s1 + $0x2b0] sm:$0xf]
      %v375 = vld [vmem:[%s1 + $0x2b4] sm:$0xf]
      %v376 = vld [vmem:[%s1 + $0x2b8] sm:$0xf]
      %v377 = vld [vmem:[%s1 + $0x2bc] sm:$0xf]
      %v378 = vld [vmem:[%s1 + $0x2c0] sm:$0xf]
      %v379 = vld [vmem:[%s1 + $0x2c4] sm:$0xf]
      %v380 = vld [vmem:[%s1 + $0x2c8] sm:$0xf]
      %v381 = vld [vmem:[%s1 + $0x2cc] sm:$0xf]
      %v382 = vld [vmem:[%s1 + $0x2d0] sm:$0xf]
      %v383 = vld [vmem:[%s1 + $0x2d4] sm:$0xf]
      %v384 = vld [vmem:[%s1 + $0x2d8] sm:$0xf]
      %v385 = vld [vmem:[%s1 + $0x2dc] sm:$0xf]
      %v386 = vld [vmem:[%s1 + $0x2e0] sm:$0xf]
      %v387 = vld [vmem:[%s1 + $0x2e4] sm:$0xf]
      %v388 = vld [vmem:[%s1 + $0x2e8] sm:$0xf]
      %v389 = vld [vmem:[%s1 + $0x2ec] sm:$0xf]
      %v390 = vld [vmem:[%s1 + $0x2f0] sm:$0xf]
      %v391 = vld [vmem:[%s1 + $0x2f4] sm:$0xf]
      %v392 = vld [vmem:[%s1 + $0x2f8] sm:$0xf]
      %v393 = vld [vmem:[%s1 + $0x2fc] sm:$0xf]
      %v394 = vld [vmem:[%s1 + $0x300] sm:$0xf]
      %v395 = vld [vmem:[%s1 + $0x304] sm:$0xf]
      %v396 = vld [vmem:[%s1 + $0x308] sm:$0xf]
      %v397 = vld [vmem:[%s1 + $0x30c] sm:$0xf]
      %v398 = vld [vmem:[%s1 + $0x310] sm:$0xf]
      %v399 = vld [vmem:[%s1 + $0x314] sm:$0xf]
      %v400 = vld [vmem:[%s1 + $0x318] sm:$0xf]
      %v401 = vld [vmem:[%s1 + $0x31c] sm:$0xf]
      %v402 = vld [vmem:[%s1 + $0x320] sm:$0xf]
      %v403 = vld [vmem:[%s1 + $0x324] sm:$0xf]
      %v404 = vld [vmem:[%s1 + $0x328] sm:$0xf]
      %v405 = vld [vmem:[%s1 + $0x32c] sm:$0xf]
      %v406 = vld [vmem:[%s1 + $0x330] sm:$0xf]
      %v407 = vld [vmem:[%s1 + $0x334] sm:$0xf]
      %v408 = vld [vmem:[%s1 + $0x338] sm:$0xf]
      %v409 = vld [vmem:[%s1 + $0x33c] sm:$0xf]
      %v410 = vld [vmem:[%s1 + $0x340] sm:$0xf]
      %v411 = vld [vmem:[%s1 + $0x344] sm:$0xf]
      %v412 = vld [vmem:[%s1 + $0x348] sm:$0xf]
      %v413 = vld [vmem:[%s1 + $0x34c] sm:$0xf]
      %v414 = vld [vmem:[%s1 + $0x350] sm:$0xf]
      %v415 = vld [vmem:[%s1 + $0x354] sm:$0xf]
      %v416 = vld [vmem:[%s1 + $0x358] sm:$0xf]
      %v417 = vld [vmem:[%s1 + $0x35c] sm:$0xf]
      %v418 = vld [vmem:[%s1 + $0x360] sm:$0xf]
      %v419 = vld [vmem:[%s1 + $0x364] sm:$0xf]
      %v420 = vld [vmem:[%s1 + $0x368] sm:$0xf]
      %v421 = vld [vmem:[%s1 + $0x36c] sm:$0xf]
      %v422 = vld [vmem:[%s1 + $0x370] sm:$0xf]
      %v423 = vld [vmem:[%s1 + $0x374] sm:$0xf]
      %v424 = vld [vmem:[%s1 + $0x378] sm:$0xf]
      %v425 = vld [vmem:[%s1 + $0x37c] sm:$0xf]
      %v426 = vld [vmem:[%s1 + $0x380] sm:$0xf]
      %v427 = vld [vmem:[%s1 + $0x384] sm:$0xf]
      %v428 = vld [vmem:[%s1 + $0x388] sm:$0xf]
      %v429 = vld [vmem:[%s1 + $0x38c] sm:$0xf]
      %v430 = vld [vmem:[%s1 + $0x390] sm:$0xf]
      %v431 = vld [vmem:[%s1 + $0x394] sm:$0xf]
      %v432 = vld [vmem:[%s1 + $0x398] sm:$0xf]
      %v433 = vld [vmem:[%s1 + $0x39c] sm:$0xf]
      %v434 = vld [vmem:[%s1 + $0x3a0] sm:$0xf]
      %v435 = vld [vmem:[%s1 + $0x3a4] sm:$0xf]
      %v436 = vld [vmem:[%s1 + $0x3a8] sm:$0xf]
      %v437 = vld [vmem:[%s1 + $0x3ac] sm:$0xf]
      %v438 = vld [vmem:[%s1 + $0x3b0] sm:$0xf]
      %v439 = vld [vmem:[%s1 + $0x3b4] sm:$0xf]
      %v440 = vld [vmem:[%s1 + $0x3b8] sm:$0xf]
      %v441 = vld [vmem:[%s1 + $0x3bc] sm:$0xf]
      %v442 = vld [vmem:[%s1 + $0x3c0] sm:$0xf]
      %v443 = vld [vmem:[%s1 + $0x3c4] sm:$0xf]
      %v444 = vld [vmem:[%s1 + $0x3c8] sm:$0xf]
      %v445 = vld [vmem:[%s1 + $0x3cc] sm:$0xf]
      %v446 = vld [vmem:[%s1 + $0x3d0] sm:$0xf]
      %v447 = vld [vmem:[%s1 + $0x3d4] sm:$0xf]
      %v448 = vld [vmem:[%s1 + $0x3d8] sm:$0xf]
      %v449 = vld [vmem:[%s1 + $0x3dc] sm:$0xf]
      %v450 = vld [vmem:[%s1 + $0x3e0] sm:$0xf]
      %v451 = vld [vmem:[%s1 + $0x3e4] sm:$0xf]
      %v452 = vld [vmem:[%s1 + $0x3e8] sm:$0xf]
      %v453 = vld [vmem:[%s1 + $0x3ec] sm:$0xf]
      %v454 = vld [vmem:[%s1 + $0x3f0] sm:$0xf]
      %v455 = vld [vmem:[%s1 + $0x3f4] sm:$0xf]
      %v456 = vld [vmem:[%s1 + $0x3f8] sm:$0xf]
      %v457 = vld [vmem:[%s1 + $0x3fc] sm:$0xf]
      %v458 = vld [vmem:[%s1 + $0x400] sm:$0xf]
      %v459 = vld [vmem:[%s1 + $0x404] sm:$0xf]
      %v460 = vld [vmem:[%s1 + $0x408] sm:$0xf]
      %v461 = vld [vmem:[%s1 + $0x40c] sm:$0xf]
      %v462 = vld [vmem:[%s1 + $0x410] sm:$0xf]
      %v463 = vld [vmem:[%s1 + $0x414] sm:$0xf]
      %v464 = vld [vmem:[%s1 + $0x418] sm:$0xf]
      %v465 = vld [vmem:[%s1 + $0x41c] sm:$0xf]
      %v466 = vld [vmem:[%s1 + $0x420] sm:$0xf]
      %v467 = vld [vmem:[%s1 + $0x424] sm:$0xf]
      %v468 = vld [vmem:[%s1 + $0x428] sm:$0xf]
      %v469 = vld [vmem:[%s1 + $0x42c] sm:$0xf]
      %v470 = vld [vmem:[%s1 + $0x430] sm:$0xf]
      %v471 = vld [vmem:[%s1 + $0x434] sm:$0xf]
      %v472 = vld [vmem:[%s1 + $0x438] sm:$0xf]
      %v473 = vld [vmem:[%s1 + $0x43c] sm:$0xf]
      %v474 = vld [vmem:[%s1 + $0x440] sm:$0xf]
      %v475 = vld [vmem:[%s1 + $0x444] sm:$0xf]
      %v476 = vld [vmem:[%s1 + $0x448] sm:$0xf]
      %v477 = vld [vmem:[%s1 + $0x44c] sm:$0xf]
      %v478 = vld [vmem:[%s1 + $0x450] sm:$0xf]
      %v479 = vld [vmem:[%s1 + $0x454] sm:$0xf]
      %v480 = vld [vmem:[%s1 + $0x458] sm:$0xf]
      %v481 = vld [vmem:[%s1 + $0x45c] sm:$0xf]
      %v482 = vld [vmem:[%s1 + $0x460] sm:$0xf]
      %v483 = vld [vmem:[%s1 + $0x464] sm:$0xf]
      %v484 = vld [vmem:[%s1 + $0x468] sm:$0xf]
      %v485 = vld [vmem:[%s1 + $0x46c] sm:$0xf]
      %v486 = vld [vmem:[%s1 + $0x470] sm:$0xf]
      %v487 = vld [vmem:[%s1 + $0x474] sm:$0xf]
      %v488 = vld [vmem:[%s1 + $0x478] sm:$0xf]
      %v489 = vld [vmem:[%s1 + $0x47c] sm:$0xf]
      %v490 = vld [vmem:[%s1 + $0x480] sm:$0xf]
      %v491 = vld [vmem:[%s1 + $0x484] sm:$0xf]
      %v492 = vld [vmem:[%s1 + $0x488] sm:$0xf]
      %v493 = vld [vmem:[%s1 + $0x48c] sm:$0xf]
      %v494 = vld [vmem:[%s1 + $0x490] sm:$0xf]
      %v495 = vld [vmem:[%s1 + $0x494] sm:$0xf]
      %v496 = vld [vmem:[%s1 + $0x498] sm:$0xf]
      %v497 = vld [vmem:[%s1 + $0x49c] sm:$0xf]
      %v498 = vld [vmem:[%s1 + $0x4a0] sm:$0xf]
      %v499 = vld [vmem:[%s1 + $0x4a4] sm:$0xf]
      %v500 = vld [vmem:[%s1 + $0x4a8] sm:$0xf]
      %v501 = vld [vmem:[%s1 + $0x4ac] sm:$0xf]
      %v502 = vld [vmem:[%s1 + $0x4b0] sm:$0xf]
      %v503 = vld [vmem:[%s1 + $0x4b4] sm:$0xf]
      %v504 = vld [vmem:[%s1 + $0x4b8] sm:$0xf]
      %v505 = vld [vmem:[%s1 + $0x4bc] sm:$0xf]
      %v506 = vld [vmem:[%s1 + $0x4c0] sm:$0xf]
      %v507 = vld [vmem:[%s1 + $0x4c4] sm:$0xf]
      %v508 = vld [vmem:[%s1 + $0x4c8] sm:$0xf]
      %v509 = vld [vmem:[%s1 + $0x4cc] sm:$0xf]
      %v510 = vld [vmem:[%s1 + $0x4d0] sm:$0xf]
      %v511 = vld [vmem:[%s1 + $0x4d4] sm:$0xf]
      %v512 = vld [vmem:[%s1 + $0x4d8] sm:$0xf]
      %v513 = vld [vmem:[%s1 + $0x4dc] sm:$0xf]
      %v514 = vld [vmem:[%s1 + $0x4e0] sm:$0xf]
      %v515 = vld [vmem:[%s1 + $0x4e4] sm:$0xf]
      %v516 = vld [vmem:[%s1 + $0x4e8] sm:$0xf]
      %v517 = vld [vmem:[%s1 + $0x4ec] sm:$0xf]
      %v518 = vld [vmem:[%s1 + $0x4f0] sm:$0xf]
      %v519 = vld [vmem:[%s1 + $0x4f4] sm:$0xf]
      %v520 = vld [vmem:[%s1 + $0x4f8] sm:$0xf]
      %v521 = vld [vmem:[%s1 + $0x4fc] sm:$0xf]
      %v522 = vld [vmem:[%s1 + $0x500] sm:$0xf]
      %v523 = vld [vmem:[%s1 + $0x504] sm:$0xf]
      %v524 = vld [vmem:[%s1 + $0x508] sm:$0xf]
      %v525 = vld [vmem:[%s1 + $0x50c] sm:$0xf]
      %v526 = vld [vmem:[%s1 + $0x510] sm:$0xf]
      %v527 = vld [vmem:[%s1 + $0x514] sm:$0xf]
      %v528 = vld [vmem:[%s1 + $0x518] sm:$0xf]
      %v529 = vld [vmem:[%s1 + $0x51c] sm:$0xf]
      %v530 = vld [vmem:[%s1 + $0x520] sm:$0xf]
      %v531 = vld [vmem:[%s1 + $0x524] sm:$0xf]
      %v532 = vld [vmem:[%s1 + $0x528] sm:$0xf]
      %v533 = vld [vmem:[%s1 + $0x52c] sm:$0xf]
      %v534 = vld [vmem:[%s1 + $0x530] sm:$0xf]
      %v535 = vld [vmem:[%s1 + $0x534] sm:$0xf]
      %v536 = vld [vmem:[%s1 + $0x538] sm:$0xf]
      %v537 = vld [vmem:[%s1 + $0x53c] sm:$0xf]
      %v538 = vld [vmem:[%s1 + $0x540] sm:$0xf]
      %v539 = vld [vmem:[%s1 + $0x544] sm:$0xf]
      %v540 = vld [vmem:[%s1 + $0x548] sm:$0xf]
      %v541 = vld [vmem:[%s1 + $0x54c] sm:$0xf]
      %v542 = vld [vmem:[%s1 + $0x550] sm:$0xf]
      %v543 = vld [vmem:[%s1 + $0x554] sm:$0xf]
      %v544 = vld [vmem:[%s1 + $0x558] sm:$0xf]
      %v545 = vld [vmem:[%s1 + $0x55c] sm:$0xf]
      %v546 = vld [vmem:[%s1 + $0x560] sm:$0xf]
      %v547 = vld [vmem:[%s1 + $0x564] sm:$0xf]
      %v548 = vld [vmem:[%s1 + $0x568] sm:$0xf]
      %v549 = vld [vmem:[%s1 + $0x56c] sm:$0xf]
      %v550 = vld [vmem:[%s1 + $0x570] sm:$0xf]
      %v551 = vld [vmem:[%s1 + $0x574] sm:$0xf]
      %v552 = vld [vmem:[%s1 + $0x578] sm:$0xf]
      %v553 = vld [vmem:[%s1 + $0x57c] sm:$0xf]
      %v554 = vld [vmem:[%s1 + $0x580] sm:$0xf]
      %v555 = vld [vmem:[%s1 + $0x584] sm:$0xf]
      %v556 = vld [vmem:[%s1 + $0x588] sm:$0xf]
      %v557 = vld [vmem:[%s1 + $0x58c] sm:$0xf]
      %v558 = vld [vmem:[%s1 + $0x590] sm:$0xf]
      %v559 = vld [vmem:[%s1 + $0x594] sm:$0xf]
      %v560 = vld [vmem:[%s1 + $0x598] sm:$0xf]
      %v561 = vld [vmem:[%s1 + $0x59c] sm:$0xf]
      %v562 = vld [vmem:[%s1 + $0x5a0] sm:$0xf]
      %v563 = vld [vmem:[%s1 + $0x5a4] sm:$0xf]
      %v564 = vld [vmem:[%s1 + $0x5a8] sm:$0xf]
      %v565 = vld [vmem:[%s1 + $0x5ac] sm:$0xf]
      %v566 = vld [vmem:[%s1 + $0x5b0] sm:$0xf]
      %v567 = vld [vmem:[%s1 + $0x5b4] sm:$0xf]
      %v568 = vld [vmem:[%s1 + $0x5b8] sm:$0xf]
      %v569 = vld [vmem:[%s1 + $0x5bc] sm:$0xf]
      %v570 = vld [vmem:[%s1 + $0x5c0] sm:$0xf]
      %v571 = vld [vmem:[%s1 + $0x5c4] sm:$0xf]
      %v572 = vld [vmem:[%s1 + $0x5c8] sm:$0xf]
      %v573 = vld [vmem:[%s1 + $0x5cc] sm:$0xf]
      %v574 = vld [vmem:[%s1 + $0x5d0] sm:$0xf]
      %v575 = vld [vmem:[%s1 + $0x5d4] sm:$0xf]
      %v576 = vld [vmem:[%s1 + $0x5d8] sm:$0xf]
      %v577 = vld [vmem:[%s1 + $0x5dc] sm:$0xf]
      %v578 = vld [vmem:[%s1 + $0x5e0] sm:$0xf]
      %v579 = vld [vmem:[%s1 + $0x5e4] sm:$0xf]
      %v580 = vld [vmem:[%s1 + $0x5e8] sm:$0xf]
      %v581 = vld [vmem:[%s1 + $0x5ec] sm:$0xf]
      %v582 = vld [vmem:[%s1 + $0x5f0] sm:$0xf]
      %v583 = vld [vmem:[%s1 + $0x5f4] sm:$0xf]
      %v584 = vld [vmem:[%s1 + $0x5f8] sm:$0xf]
      %v585 = vld [vmem:[%s1 + $0x5fc] sm:$0xf]
      %v586 = vld [vmem:[%s1 + $0x600] sm:$0xf]
      %v587 = vld [vmem:[%s1 + $0x604] sm:$0xf]
      %v588 = vld [vmem:[%s1 + $0x608] sm:$0xf]
      %v589 = vld [vmem:[%s1 + $0x60c] sm:$0xf]
      %v590 = vld [vmem:[%s1 + $0x610] sm:$0xf]
      %v591 = vld [vmem:[%s1 + $0x614] sm:$0xf]
      %v592 = vld [vmem:[%s1 + $0x618] sm:$0xf]
      %v593 = vld [vmem:[%s1 + $0x61c] sm:$0xf]
      %v594 = vld [vmem:[%s1 + $0x620] sm:$0xf]
      %v595 = vld [vmem:[%s1 + $0x624] sm:$0xf]
      %v596 = vld [vmem:[%s1 + $0x628] sm:$0xf]
      %v597 = vld [vmem:[%s1 + $0x62c] sm:$0xf]
      %v598 = vld [vmem:[%s1 + $0x630] sm:$0xf]
      %v599 = vld [vmem:[%s1 + $0x634] sm:$0xf]
      %v600 = vld [vmem:[%s1 + $0x638] sm:$0xf]
      %v601 = vld [vmem:[%s1 + $0x63c] sm:$0xf]
      %v602 = vld [vmem:[%s1 + $0x640] sm:$0xf]
      %v603 = vld [vmem:[%s1 + $0x644] sm:$0xf]
      %v604 = vld [vmem:[%s1 + $0x648] sm:$0xf]
      %v605 = vld [vmem:[%s1 + $0x64c] sm:$0xf]
      %v606 = vld [vmem:[%s1 + $0x650] sm:$0xf]
      %v607 = vld [vmem:[%s1 + $0x654] sm:$0xf]
      %v608 = vld [vmem:[%s1 + $0x658] sm:$0xf]
      %v609 = vld [vmem:[%s1 + $0x65c] sm:$0xf]
      %v610 = vld [vmem:[%s1 + $0x660] sm:$0xf]
      %v611 = vld [vmem:[%s1 + $0x664] sm:$0xf]
      %v612 = vld [vmem:[%s1 + $0x668] sm:$0xf]
      %v613 = vld [vmem:[%s1 + $0x66c] sm:$0xf]
      %v614 = vld [vmem:[%s1 + $0x670] sm:$0xf]
      %v615 = vld [vmem:[%s1 + $0x674] sm:$0xf]
      %v616 = vld [vmem:[%s1 + $0x678] sm:$0xf]
      %v617 = vld [vmem:[%s1 + $0x67c] sm:$0xf]
      %v618 = vld [vmem:[%s1 + $0x680] sm:$0xf]
      %v619 = vld [vmem:[%s1 + $0x684] sm:$0xf]
      %v620 = vld [vmem:[%s1 + $0x688] sm:$0xf]
      %v621 = vld [vmem:[%s1 + $0x68c] sm:$0xf]
      %v622 = vld [vmem:[%s1 + $0x690] sm:$0xf]
      %v623 = vld [vmem:[%s1 + $0x694] sm:$0xf]
      %v624 = vld [vmem:[%s1 + $0x698] sm:$0xf]
      %v625 = vld [vmem:[%s1 + $0x69c] sm:$0xf]
      %v626 = vld [vmem:[%s1 + $0x6a0] sm:$0xf]
      %v627 = vld [vmem:[%s1 + $0x6a4] sm:$0xf]
      %v628 = vld [vmem:[%s1 + $0x6a8] sm:$0xf]
      %v629 = vld [vmem:[%s1 + $0x6ac] sm:$0xf]
      %v630 = vld [vmem:[%s1 + $0x6b0] sm:$0xf]
      %v631 = vld [vmem:[%s1 + $0x6b4] sm:$0xf]
      %v632 = vld [vmem:[%s1 + $0x6b8] sm:$0xf]
      %v633 = vld [vmem:[%s1 + $0x6bc] sm:$0xf]
      %v634 = vld [vmem:[%s1 + $0x6c0] sm:$0xf]
      %v635 = vld [vmem:[%s1 + $0x6c4] sm:$0xf]
      %v636 = vld [vmem:[%s1 + $0x6c8] sm:$0xf]
      %v637 = vld [vmem:[%s1 + $0x6cc] sm:$0xf]
      %v638 = vld [vmem:[%s1 + $0x6d0] sm:$0xf]
      %v639 = vld [vmem:[%s1 + $0x6d4] sm:$0xf]
      %v640 = vld [vmem:[%s1 + $0x6d8] sm:$0xf]
      %v641 = vld [vmem:[%s1 + $0x6dc] sm:$0xf]
      %v642 = vld [vmem:[%s1 + $0x6e0] sm:$0xf]
      %v643 = vld [vmem:[%s1 + $0x6e4] sm:$0xf]
      %v644 = vld [vmem:[%s1 + $0x6e8] sm:$0xf]
      %v645 = vld [vmem:[%s1 + $0x6ec] sm:$0xf]
      %v646 = vld [vmem:[%s1 + $0x6f0] sm:$0xf]
      %v647 = vld [vmem:[%s1 + $0x6f4] sm:$0xf]
      %v648 = vld [vmem:[%s1 + $0x6f8] sm:$0xf]
      %v649 = vld [vmem:[%s1 + $0x6fc] sm:$0xf]
      %v650 = vld [vmem:[%s1 + $0x700] sm:$0xf]
      %v651 = vld [vmem:[%s1 + $0x704] sm:$0xf]
      %v652 = vld [vmem:[%s1 + $0x708] sm:$0xf]
      %v653 = vld [vmem:[%s1 + $0x70c] sm:$0xf]
      %v654 = vld [vmem:[%s1 + $0x710] sm:$0xf]
      %v655 = vld [vmem:[%s1 + $0x714] sm:$0xf]
      %v656 = vld [vmem:[%s1 + $0x718] sm:$0xf]
      %v657 = vld [vmem:[%s1 + $0x71c] sm:$0xf]
      %v658 = vld [vmem:[%s1 + $0x720] sm:$0xf]
      %v659 = vld [vmem:[%s1 + $0x724] sm:$0xf]
      %v660 = vld [vmem:[%s1 + $0x728] sm:$0xf]
      %v661 = vld [vmem:[%s1 + $0x72c] sm:$0xf]
      %v662 = vld [vmem:[%s1 + $0x730] sm:$0xf]
      %v663 = vld [vmem:[%s1 + $0x734] sm:$0xf]
      %v664 = vld [vmem:[%s1 + $0x738] sm:$0xf]
      %v665 = vld [vmem:[%s1 + $0x73c] sm:$0xf]
      %v666 = vld [vmem:[%s1 + $0x740] sm:$0xf]
      %v667 = vld [vmem:[%s1 + $0x744] sm:$0xf]
      %v668 = vld [vmem:[%s1 + $0x748] sm:$0xf]
      %v669 = vld [vmem:[%s1 + $0x74c] sm:$0xf]
      %v670 = vld [vmem:[%s1 + $0x750] sm:$0xf]
      %v671 = vld [vmem:[%s1 + $0x754] sm:$0xf]
      %v672 = vld [vmem:[%s1 + $0x758] sm:$0xf]
      %v673 = vld [vmem:[%s1 + $0x75c] sm:$0xf]
      %v674 = vld [vmem:[%s1 + $0x760] sm:$0xf]
      %v675 = vld [vmem:[%s1 + $0x764] sm:$0xf]
      %v676 = vld [vmem:[%s1 + $0x768] sm:$0xf]
      %v677 = vld [vmem:[%s1 + $0x76c] sm:$0xf]
      %v678 = vld [vmem:[%s1 + $0x770] sm:$0xf]
      %v679 = vld [vmem:[%s1 + $0x774] sm:$0xf]
      %v680 = vld [vmem:[%s1 + $0x778] sm:$0xf]
      %v681 = vld [vmem:[%s1 + $0x77c] sm:$0xf]
      %v682 = vld [vmem:[%s1 + $0x780] sm:$0xf]
      %v683 = vld [vmem:[%s1 + $0x784] sm:$0xf]
      %v684 = vld [vmem:[%s1 + $0x788] sm:$0xf]
      %v685 = vld [vmem:[%s1 + $0x78c] sm:$0xf]
      %v686 = vld [vmem:[%s1 + $0x790] sm:$0xf]
      %v687 = vld [vmem:[%s1 + $0x794] sm:$0xf]
      %v688 = vld [vmem:[%s1 + $0x798] sm:$0xf]
      %v689 = vld [vmem:[%s1 + $0x79c] sm:$0xf]
      %v690 = vld [vmem:[%s1 + $0x7a0] sm:$0xf]
      %v691 = vld [vmem:[%s1 + $0x7a4] sm:$0xf]
      %v692 = vld [vmem:[%s1 + $0x7a8] sm:$0xf]
      %v693 = vld [vmem:[%s1 + $0x7ac] sm:$0xf]
      %v694 = vld [vmem:[%s1 + $0x7b0] sm:$0xf]
      %v695 = vld [vmem:[%s1 + $0x7b4] sm:$0xf]
      %v696 = vld [vmem:[%s1 + $0x7b8] sm:$0xf]
      %v697 = vld [vmem:[%s1 + $0x7bc] sm:$0xf]
      %v698 = vld [vmem:[%s1 + $0x7c0] sm:$0xf]
      %v699 = vld [vmem:[%s1 + $0x7c4] sm:$0xf]
      %v700 = vld [vmem:[%s1 + $0x7c8] sm:$0xf]
      %v701 = vld [vmem:[%s1 + $0x7cc] sm:$0xf]
      %v702 = vld [vmem:[%s1 + $0x7d0] sm:$0xf]
      %v703 = vld [vmem:[%s1 + $0x7d4] sm:$0xf]
      %v704 = vld [vmem:[%s1 + $0x7d8] sm:$0xf]
      %v705 = vld [vmem:[%s1 + $0x7dc] sm:$0xf]
      %v706 = vld [vmem:[%s1 + $0x7e0] sm:$0xf]
      %v707 = vld [vmem:[%s1 + $0x7e4] sm:$0xf]
      %v708 = vld [vmem:[%s1 + $0x7e8] sm:$0xf]
      %v709 = vld [vmem:[%s1 + $0x7ec] sm:$0xf]
      %v710 = vld [vmem:[%s1 + $0x7f0] sm:$0xf]
      %v711 = vld [vmem:[%s1 + $0x7f4] sm:$0xf]
      %v712 = vld [vmem:[%s1 + $0x7f8] sm:$0xf]
      %v713 = vld [vmem:[%s1 + $0x7fc] sm:$0xf]
      %v714 = vld [vmem:[%s2] sm:$0x1]
      %v716 = vlaneseq
      %v717 = vshrl.u32 %v716, 7
      %v718 = vsub.s32 0, %v717
      %v719 = vrot.slane %v714, %v718
      %v737 = vunpack.c.l.b16 %v186
      %v738 = vunpack.c.h.b16 %v186
      %v739 = vunpack.c.l.b16 %v187
      %v740 = vunpack.c.h.b16 %v187
      %v741 = vunpack.c.l.b16 %v188
      %v742 = vunpack.c.h.b16 %v188
      %v743 = vunpack.c.l.b16 %v189
      %v744 = vunpack.c.h.b16 %v189
      %v745 = vunpack.c.l.b16 %v190
      %v746 = vunpack.c.h.b16 %v190
      %v747 = vunpack.c.l.b16 %v191
      %v748 = vunpack.c.h.b16 %v191
      %v749 = vunpack.c.l.b16 %v192
      %v750 = vunpack.c.h.b16 %v192
      %v751 = vunpack.c.l.b16 %v193
      %v752 = vunpack.c.h.b16 %v193
      %v753 = vunpack.c.l.b16 %v194
      %v754 = vunpack.c.h.b16 %v194
      %v755 = vunpack.c.l.b16 %v195
      %v756 = vunpack.c.h.b16 %v195
      %v757 = vunpack.c.l.b16 %v196
      %v758 = vunpack.c.h.b16 %v196
      %v759 = vunpack.c.l.b16 %v197
      %v760 = vunpack.c.h.b16 %v197
      %v761 = vunpack.c.l.b16 %v198
      %v762 = vunpack.c.h.b16 %v198
      %v763 = vunpack.c.l.b16 %v199
      %v764 = vunpack.c.h.b16 %v199
      %v765 = vunpack.c.l.b16 %v200
      %v766 = vunpack.c.h.b16 %v200
      %v767 = vunpack.c.l.b16 %v201
      %v768 = vunpack.c.h.b16 %v201
      %v769 = vpack.c.b16 %v737, %v737
      %v770 = vpack.c.b16 %v738, %v738
      %v771 = vpack.c.b16 %v739, %v739
      %v772 = vpack.c.b16 %v740, %v740
      %v773 = vpack.c.b16 %v741, %v741
      %v774 = vpack.c.b16 %v742, %v742
      %v775 = vpack.c.b16 %v743, %v743
      %v776 = vpack.c.b16 %v744, %v744
      %v777 = vpack.c.b16 %v745, %v745
      %v778 = vpack.c.b16 %v746, %v746
      %v779 = vpack.c.b16 %v747, %v747
      %v780 = vpack.c.b16 %v748, %v748
      %v781 = vpack.c.b16 %v749, %v749
      %v782 = vpack.c.b16 %v750, %v750
      %v783 = vpack.c.b16 %v751, %v751
      %v784 = vpack.c.b16 %v752, %v752
      %v785 = vpack.c.b16 %v753, %v753
      %v786 = vpack.c.b16 %v754, %v754
      %v787 = vpack.c.b16 %v755, %v755
      %v788 = vpack.c.b16 %v756, %v756
      %v789 = vpack.c.b16 %v757, %v757
      %v790 = vpack.c.b16 %v758, %v758
      %v791 = vpack.c.b16 %v759, %v759
      %v792 = vpack.c.b16 %v760, %v760
      %v793 = vpack.c.b16 %v761, %v761
      %v794 = vpack.c.b16 %v762, %v762
      %v795 = vpack.c.b16 %v763, %v763
      %v796 = vpack.c.b16 %v764, %v764
      %v797 = vpack.c.b16 %v765, %v765
      %v798 = vpack.c.b16 %v766, %v766
      %v799 = vpack.c.b16 %v767, %v767
      %v800 = vpack.c.b16 %v768, %v768
      %v1345 = vunpack.c.l.b16 %v202
      %v1346 = vunpack.c.l.b16 %v203
      %v1347 = vunpack.c.l.b16 %v204
      %v1348 = vunpack.c.l.b16 %v205
      %v1349 = vunpack.c.l.b16 %v206
      %v1350 = vunpack.c.l.b16 %v207
      %v1351 = vunpack.c.l.b16 %v208
      %v1352 = vunpack.c.l.b16 %v209
      %v1353 = vunpack.c.l.b16 %v210
      %v1354 = vunpack.c.l.b16 %v211
      %v1355 = vunpack.c.l.b16 %v212
      %v1356 = vunpack.c.l.b16 %v213
      %v1357 = vunpack.c.l.b16 %v214
      %v1358 = vunpack.c.l.b16 %v215
      %v1359 = vunpack.c.l.b16 %v216
      %v1360 = vunpack.c.l.b16 %v217
      %v1361 = vunpack.c.l.b16 %v218
      %v1362 = vunpack.c.l.b16 %v219
      %v1363 = vunpack.c.l.b16 %v220
      %v1364 = vunpack.c.l.b16 %v221
      %v1365 = vunpack.c.l.b16 %v222
      %v1366 = vunpack.c.l.b16 %v223
      %v1367 = vunpack.c.l.b16 %v224
      %v1368 = vunpack.c.l.b16 %v225
      %v1369 = vunpack.c.l.b16 %v226
      %v1370 = vunpack.c.l.b16 %v227
      %v1371 = vunpack.c.l.b16 %v228
      %v1372 = vunpack.c.l.b16 %v229
      %v1373 = vunpack.c.l.b16 %v230
      %v1374 = vunpack.c.l.b16 %v231
      %v1375 = vunpack.c.l.b16 %v232
      %v1376 = vunpack.c.l.b16 %v233
      %v1377 = vunpack.c.l.b16 %v234
      %v1378 = vunpack.c.l.b16 %v235
      %v1379 = vunpack.c.l.b16 %v236
      %v1380 = vunpack.c.l.b16 %v237
      %v1381 = vunpack.c.l.b16 %v238
      %v1382 = vunpack.c.l.b16 %v239
      %v1383 = vunpack.c.l.b16 %v240
      %v1384 = vunpack.c.l.b16 %v241
      %v1385 = vunpack.c.l.b16 %v242
      %v1386 = vunpack.c.l.b16 %v243
      %v1387 = vunpack.c.l.b16 %v244
      %v1388 = vunpack.c.l.b16 %v245
      %v1389 = vunpack.c.l.b16 %v246
      %v1390 = vunpack.c.l.b16 %v247
      %v1391 = vunpack.c.l.b16 %v248
      %v1392 = vunpack.c.l.b16 %v249
      %v1393 = vunpack.c.l.b16 %v250
      %v1394 = vunpack.c.l.b16 %v251
      %v1395 = vunpack.c.l.b16 %v252
      %v1396 = vunpack.c.l.b16 %v253
      %v1397 = vunpack.c.l.b16 %v254
      %v1398 = vunpack.c.l.b16 %v255
      %v1399 = vunpack.c.l.b16 %v256
      %v1400 = vunpack.c.l.b16 %v257
      %v1401 = vunpack.c.l.b16 %v258
      %v1402 = vunpack.c.l.b16 %v259
      %v1403 = vunpack.c.l.b16 %v260
      %v1404 = vunpack.c.l.b16 %v261
      %v1405 = vunpack.c.l.b16 %v262
      %v1406 = vunpack.c.l.b16 %v263
      %v1407 = vunpack.c.l.b16 %v264
      %v1408 = vunpack.c.l.b16 %v265
      %v1409 = vunpack.c.l.b16 %v266
      %v1410 = vunpack.c.l.b16 %v267
      %v1411 = vunpack.c.l.b16 %v268
      %v1412 = vunpack.c.l.b16 %v269
      %v1413 = vunpack.c.l.b16 %v270
      %v1414 = vunpack.c.l.b16 %v271
      %v1415 = vunpack.c.l.b16 %v272
      %v1416 = vunpack.c.l.b16 %v273
      %v1417 = vunpack.c.l.b16 %v274
      %v1418 = vunpack.c.l.b16 %v275
      %v1419 = vunpack.c.l.b16 %v276
      %v1420 = vunpack.c.l.b16 %v277
      %v1421 = vunpack.c.l.b16 %v278
      %v1422 = vunpack.c.l.b16 %v279
      %v1423 = vunpack.c.l.b16 %v280
      %v1424 = vunpack.c.l.b16 %v281
      %v1425 = vunpack.c.l.b16 %v282
      %v1426 = vunpack.c.l.b16 %v283
      %v1427 = vunpack.c.l.b16 %v284
      %v1428 = vunpack.c.l.b16 %v285
      %v1429 = vunpack.c.l.b16 %v286
      %v1430 = vunpack.c.l.b16 %v287
      %v1431 = vunpack.c.l.b16 %v288
      %v1432 = vunpack.c.l.b16 %v289
      %v1433 = vunpack.c.l.b16 %v290
      %v1434 = vunpack.c.l.b16 %v291
      %v1435 = vunpack.c.l.b16 %v292
      %v1436 = vunpack.c.l.b16 %v293
      %v1437 = vunpack.c.l.b16 %v294
      %v1438 = vunpack.c.l.b16 %v295
      %v1439 = vunpack.c.l.b16 %v296
      %v1440 = vunpack.c.l.b16 %v297
      %v1441 = vunpack.c.l.b16 %v298
      %v1442 = vunpack.c.l.b16 %v299
      %v1443 = vunpack.c.l.b16 %v300
      %v1444 = vunpack.c.l.b16 %v301
      %v1445 = vunpack.c.l.b16 %v302
      %v1446 = vunpack.c.l.b16 %v303
      %v1447 = vunpack.c.l.b16 %v304
      %v1448 = vunpack.c.l.b16 %v305
      %v1449 = vunpack.c.l.b16 %v306
      %v1450 = vunpack.c.l.b16 %v307
      %v1451 = vunpack.c.l.b16 %v308
      %v1452 = vunpack.c.l.b16 %v309
      %v1453 = vunpack.c.l.b16 %v310
      %v1454 = vunpack.c.l.b16 %v311
      %v1455 = vunpack.c.l.b16 %v312
      %v1456 = vunpack.c.l.b16 %v313
      %v1457 = vunpack.c.l.b16 %v314
      %v1458 = vunpack.c.l.b16 %v315
      %v1459 = vunpack.c.l.b16 %v316
      %v1460 = vunpack.c.l.b16 %v317
      %v1461 = vunpack.c.l.b16 %v318
      %v1462 = vunpack.c.l.b16 %v319
      %v1463 = vunpack.c.l.b16 %v320
      %v1464 = vunpack.c.l.b16 %v321
      %v1465 = vunpack.c.l.b16 %v322
      %v1466 = vunpack.c.l.b16 %v323
      %v1467 = vunpack.c.l.b16 %v324
      %v1468 = vunpack.c.l.b16 %v325
      %v1469 = vunpack.c.l.b16 %v326
      %v1470 = vunpack.c.l.b16 %v327
      %v1471 = vunpack.c.l.b16 %v328
      %v1472 = vunpack.c.l.b16 %v329
      %v1473 = vunpack.c.l.b16 %v330
      %v1474 = vunpack.c.l.b16 %v331
      %v1475 = vunpack.c.l.b16 %v332
      %v1476 = vunpack.c.l.b16 %v333
      %v1477 = vunpack.c.l.b16 %v334
      %v1478 = vunpack.c.l.b16 %v335
      %v1479 = vunpack.c.l.b16 %v336
      %v1480 = vunpack.c.l.b16 %v337
      %v1481 = vunpack.c.l.b16 %v338
      %v1482 = vunpack.c.l.b16 %v339
      %v1483 = vunpack.c.l.b16 %v340
      %v1484 = vunpack.c.l.b16 %v341
      %v1485 = vunpack.c.l.b16 %v342
      %v1486 = vunpack.c.l.b16 %v343
      %v1487 = vunpack.c.l.b16 %v344
      %v1488 = vunpack.c.l.b16 %v345
      %v1489 = vunpack.c.l.b16 %v346
      %v1490 = vunpack.c.l.b16 %v347
      %v1491 = vunpack.c.l.b16 %v348
      %v1492 = vunpack.c.l.b16 %v349
      %v1493 = vunpack.c.l.b16 %v350
      %v1494 = vunpack.c.l.b16 %v351
      %v1495 = vunpack.c.l.b16 %v352
      %v1496 = vunpack.c.l.b16 %v353
      %v1497 = vunpack.c.l.b16 %v354
      %v1498 = vunpack.c.l.b16 %v355
      %v1499 = vunpack.c.l.b16 %v356
      %v1500 = vunpack.c.l.b16 %v357
      %v1501 = vunpack.c.l.b16 %v358
      %v1502 = vunpack.c.l.b16 %v359
      %v1503 = vunpack.c.l.b16 %v360
      %v1504 = vunpack.c.l.b16 %v361
      %v1505 = vunpack.c.l.b16 %v362
      %v1506 = vunpack.c.l.b16 %v363
      %v1507 = vunpack.c.l.b16 %v364
      %v1508 = vunpack.c.l.b16 %v365
      %v1509 = vunpack.c.l.b16 %v366
      %v1510 = vunpack.c.l.b16 %v367
      %v1511 = vunpack.c.l.b16 %v368
      %v1512 = vunpack.c.l.b16 %v369
      %v1513 = vunpack.c.l.b16 %v370
      %v1514 = vunpack.c.l.b16 %v371
      %v1515 = vunpack.c.l.b16 %v372
      %v1516 = vunpack.c.l.b16 %v373
      %v1517 = vunpack.c.l.b16 %v374
      %v1518 = vunpack.c.l.b16 %v375
      %v1519 = vunpack.c.l.b16 %v376
      %v1520 = vunpack.c.l.b16 %v377
      %v1521 = vunpack.c.l.b16 %v378
      %v1522 = vunpack.c.l.b16 %v379
      %v1523 = vunpack.c.l.b16 %v380
      %v1524 = vunpack.c.l.b16 %v381
      %v1525 = vunpack.c.l.b16 %v382
      %v1526 = vunpack.c.l.b16 %v383
      %v1527 = vunpack.c.l.b16 %v384
      %v1528 = vunpack.c.l.b16 %v385
      %v1529 = vunpack.c.l.b16 %v386
      %v1530 = vunpack.c.l.b16 %v387
      %v1531 = vunpack.c.l.b16 %v388
      %v1532 = vunpack.c.l.b16 %v389
      %v1533 = vunpack.c.l.b16 %v390
      %v1534 = vunpack.c.l.b16 %v391
      %v1535 = vunpack.c.l.b16 %v392
      %v1536 = vunpack.c.l.b16 %v393
      %v1537 = vunpack.c.l.b16 %v394
      %v1538 = vunpack.c.l.b16 %v395
      %v1539 = vunpack.c.l.b16 %v396
      %v1540 = vunpack.c.l.b16 %v397
      %v1541 = vunpack.c.l.b16 %v398
      %v1542 = vunpack.c.l.b16 %v399
      %v1543 = vunpack.c.l.b16 %v400
      %v1544 = vunpack.c.l.b16 %v401
      %v1545 = vunpack.c.l.b16 %v402
      %v1546 = vunpack.c.l.b16 %v403
      %v1547 = vunpack.c.l.b16 %v404
      %v1548 = vunpack.c.l.b16 %v405
      %v1549 = vunpack.c.l.b16 %v406
      %v1550 = vunpack.c.l.b16 %v407
      %v1551 = vunpack.c.l.b16 %v408
      %v1552 = vunpack.c.l.b16 %v409
      %v1553 = vunpack.c.l.b16 %v410
      %v1554 = vunpack.c.l.b16 %v411
      %v1555 = vunpack.c.l.b16 %v412
      %v1556 = vunpack.c.l.b16 %v413
      %v1557 = vunpack.c.l.b16 %v414
      %v1558 = vunpack.c.l.b16 %v415
      %v1559 = vunpack.c.l.b16 %v416
      %v1560 = vunpack.c.l.b16 %v417
      %v1561 = vunpack.c.l.b16 %v418
      %v1562 = vunpack.c.l.b16 %v419
      %v1563 = vunpack.c.l.b16 %v420
      %v1564 = vunpack.c.l.b16 %v421
      %v1565 = vunpack.c.l.b16 %v422
      %v1566 = vunpack.c.l.b16 %v423
      %v1567 = vunpack.c.l.b16 %v424
      %v1568 = vunpack.c.l.b16 %v425
      %v1569 = vunpack.c.l.b16 %v426
      %v1570 = vunpack.c.l.b16 %v427
      %v1571 = vunpack.c.l.b16 %v428
      %v1572 = vunpack.c.l.b16 %v429
      %v1573 = vunpack.c.l.b16 %v430
      %v1574 = vunpack.c.l.b16 %v431
      %v1575 = vunpack.c.l.b16 %v432
      %v1576 = vunpack.c.l.b16 %v433
      %v1577 = vunpack.c.l.b16 %v434
      %v1578 = vunpack.c.l.b16 %v435
      %v1579 = vunpack.c.l.b16 %v436
      %v1580 = vunpack.c.l.b16 %v437
      %v1581 = vunpack.c.l.b16 %v438
      %v1582 = vunpack.c.l.b16 %v439
      %v1583 = vunpack.c.l.b16 %v440
      %v1584 = vunpack.c.l.b16 %v441
      %v1585 = vunpack.c.l.b16 %v442
      %v1586 = vunpack.c.l.b16 %v443
      %v1587 = vunpack.c.l.b16 %v444
      %v1588 = vunpack.c.l.b16 %v445
      %v1589 = vunpack.c.l.b16 %v446
      %v1590 = vunpack.c.l.b16 %v447
      %v1591 = vunpack.c.l.b16 %v448
      %v1592 = vunpack.c.l.b16 %v449
      %v1593 = vunpack.c.l.b16 %v450
      %v1594 = vunpack.c.l.b16 %v451
      %v1595 = vunpack.c.l.b16 %v452
      %v1596 = vunpack.c.l.b16 %v453
      %v1597 = vunpack.c.l.b16 %v454
      %v1598 = vunpack.c.l.b16 %v455
      %v1599 = vunpack.c.l.b16 %v456
      %v1600 = vunpack.c.l.b16 %v457
      %v1601 = vunpack.c.l.b16 %v458
      %v1602 = vunpack.c.l.b16 %v459
      %v1603 = vunpack.c.l.b16 %v460
      %v1604 = vunpack.c.l.b16 %v461
      %v1605 = vunpack.c.l.b16 %v462
      %v1606 = vunpack.c.l.b16 %v463
      %v1607 = vunpack.c.l.b16 %v464
      %v1608 = vunpack.c.l.b16 %v465
      %v1609 = vunpack.c.l.b16 %v466
      %v1610 = vunpack.c.l.b16 %v467
      %v1611 = vunpack.c.l.b16 %v468
      %v1612 = vunpack.c.l.b16 %v469
      %v1613 = vunpack.c.l.b16 %v470
      %v1614 = vunpack.c.l.b16 %v471
      %v1615 = vunpack.c.l.b16 %v472
      %v1616 = vunpack.c.l.b16 %v473
      %v1617 = vunpack.c.l.b16 %v474
      %v1618 = vunpack.c.l.b16 %v475
      %v1619 = vunpack.c.l.b16 %v476
      %v1620 = vunpack.c.l.b16 %v477
      %v1621 = vunpack.c.l.b16 %v478
      %v1622 = vunpack.c.l.b16 %v479
      %v1623 = vunpack.c.l.b16 %v480
      %v1624 = vunpack.c.l.b16 %v481
      %v1625 = vunpack.c.l.b16 %v482
      %v1626 = vunpack.c.l.b16 %v483
      %v1627 = vunpack.c.l.b16 %v484
      %v1628 = vunpack.c.l.b16 %v485
      %v1629 = vunpack.c.l.b16 %v486
      %v1630 = vunpack.c.l.b16 %v487
      %v1631 = vunpack.c.l.b16 %v488
      %v1632 = vunpack.c.l.b16 %v489
      %v1633 = vunpack.c.l.b16 %v490
      %v1634 = vunpack.c.l.b16 %v491
      %v1635 = vunpack.c.l.b16 %v492
      %v1636 = vunpack.c.l.b16 %v493
      %v1637 = vunpack.c.l.b16 %v494
      %v1638 = vunpack.c.l.b16 %v495
      %v1639 = vunpack.c.l.b16 %v496
      %v1640 = vunpack.c.l.b16 %v497
      %v1641 = vunpack.c.l.b16 %v498
      %v1642 = vunpack.c.l.b16 %v499
      %v1643 = vunpack.c.l.b16 %v500
      %v1644 = vunpack.c.l.b16 %v501
      %v1645 = vunpack.c.l.b16 %v502
      %v1646 = vunpack.c.l.b16 %v503
      %v1647 = vunpack.c.l.b16 %v504
      %v1648 = vunpack.c.l.b16 %v505
      %v1649 = vunpack.c.l.b16 %v506
      %v1650 = vunpack.c.l.b16 %v507
      %v1651 = vunpack.c.l.b16 %v508
      %v1652 = vunpack.c.l.b16 %v509
      %v1653 = vunpack.c.l.b16 %v510
      %v1654 = vunpack.c.l.b16 %v511
      %v1655 = vunpack.c.l.b16 %v512
      %v1656 = vunpack.c.l.b16 %v513
      %v1657 = vunpack.c.l.b16 %v514
      %v1658 = vunpack.c.l.b16 %v515
      %v1659 = vunpack.c.l.b16 %v516
      %v1660 = vunpack.c.l.b16 %v517
      %v1661 = vunpack.c.l.b16 %v518
      %v1662 = vunpack.c.l.b16 %v519
      %v1663 = vunpack.c.l.b16 %v520
      %v1664 = vunpack.c.l.b16 %v521
      %v1665 = vunpack.c.l.b16 %v522
      %v1666 = vunpack.c.l.b16 %v523
      %v1667 = vunpack.c.l.b16 %v524
      %v1668 = vunpack.c.l.b16 %v525
      %v1669 = vunpack.c.l.b16 %v526
      %v1670 = vunpack.c.l.b16 %v527
      %v1671 = vunpack.c.l.b16 %v528
      %v1672 = vunpack.c.l.b16 %v529
      %v1673 = vunpack.c.l.b16 %v530
      %v1674 = vunpack.c.l.b16 %v531
      %v1675 = vunpack.c.l.b16 %v532
      %v1676 = vunpack.c.l.b16 %v533
      %v1677 = vunpack.c.l.b16 %v534
      %v1678 = vunpack.c.l.b16 %v535
      %v1679 = vunpack.c.l.b16 %v536
      %v1680 = vunpack.c.l.b16 %v537
      %v1681 = vunpack.c.l.b16 %v538
      %v1682 = vunpack.c.l.b16 %v539
      %v1683 = vunpack.c.l.b16 %v540
      %v1684 = vunpack.c.l.b16 %v541
      %v1685 = vunpack.c.l.b16 %v542
      %v1686 = vunpack.c.l.b16 %v543
      %v1687 = vunpack.c.l.b16 %v544
      %v1688 = vunpack.c.l.b16 %v545
      %v1689 = vunpack.c.l.b16 %v546
      %v1690 = vunpack.c.l.b16 %v547
      %v1691 = vunpack.c.l.b16 %v548
      %v1692 = vunpack.c.l.b16 %v549
      %v1693 = vunpack.c.l.b16 %v550
      %v1694 = vunpack.c.l.b16 %v551
      %v1695 = vunpack.c.l.b16 %v552
      %v1696 = vunpack.c.l.b16 %v553
      %v1697 = vunpack.c.l.b16 %v554
      %v1698 = vunpack.c.l.b16 %v555
      %v1699 = vunpack.c.l.b16 %v556
      %v1700 = vunpack.c.l.b16 %v557
      %v1701 = vunpack.c.l.b16 %v558
      %v1702 = vunpack.c.l.b16 %v559
      %v1703 = vunpack.c.l.b16 %v560
      %v1704 = vunpack.c.l.b16 %v561
      %v1705 = vunpack.c.l.b16 %v562
      %v1706 = vunpack.c.l.b16 %v563
      %v1707 = vunpack.c.l.b16 %v564
      %v1708 = vunpack.c.l.b16 %v565
      %v1709 = vunpack.c.l.b16 %v566
      %v1710 = vunpack.c.l.b16 %v567
      %v1711 = vunpack.c.l.b16 %v568
      %v1712 = vunpack.c.l.b16 %v569
      %v1713 = vunpack.c.l.b16 %v570
      %v1714 = vunpack.c.l.b16 %v571
      %v1715 = vunpack.c.l.b16 %v572
      %v1716 = vunpack.c.l.b16 %v573
      %v1717 = vunpack.c.l.b16 %v574
      %v1718 = vunpack.c.l.b16 %v575
      %v1719 = vunpack.c.l.b16 %v576
      %v1720 = vunpack.c.l.b16 %v577
      %v1721 = vunpack.c.l.b16 %v578
      %v1722 = vunpack.c.l.b16 %v579
      %v1723 = vunpack.c.l.b16 %v580
      %v1724 = vunpack.c.l.b16 %v581
      %v1725 = vunpack.c.l.b16 %v582
      %v1726 = vunpack.c.l.b16 %v583
      %v1727 = vunpack.c.l.b16 %v584
      %v1728 = vunpack.c.l.b16 %v585
      %v1729 = vunpack.c.l.b16 %v586
      %v1730 = vunpack.c.l.b16 %v587
      %v1731 = vunpack.c.l.b16 %v588
      %v1732 = vunpack.c.l.b16 %v589
      %v1733 = vunpack.c.l.b16 %v590
      %v1734 = vunpack.c.l.b16 %v591
      %v1735 = vunpack.c.l.b16 %v592
      %v1736 = vunpack.c.l.b16 %v593
      %v1737 = vunpack.c.l.b16 %v594
      %v1738 = vunpack.c.l.b16 %v595
      %v1739 = vunpack.c.l.b16 %v596
      %v1740 = vunpack.c.l.b16 %v597
      %v1741 = vunpack.c.l.b16 %v598
      %v1742 = vunpack.c.l.b16 %v599
      %v1743 = vunpack.c.l.b16 %v600
      %v1744 = vunpack.c.l.b16 %v601
      %v1745 = vunpack.c.l.b16 %v602
      %v1746 = vunpack.c.l.b16 %v603
      %v1747 = vunpack.c.l.b16 %v604
      %v1748 = vunpack.c.l.b16 %v605
      %v1749 = vunpack.c.l.b16 %v606
      %v1750 = vunpack.c.l.b16 %v607
      %v1751 = vunpack.c.l.b16 %v608
      %v1752 = vunpack.c.l.b16 %v609
      %v1753 = vunpack.c.l.b16 %v610
      %v1754 = vunpack.c.l.b16 %v611
      %v1755 = vunpack.c.l.b16 %v612
      %v1756 = vunpack.c.l.b16 %v613
      %v1757 = vunpack.c.l.b16 %v614
      %v1758 = vunpack.c.l.b16 %v615
      %v1759 = vunpack.c.l.b16 %v616
      %v1760 = vunpack.c.l.b16 %v617
      %v1761 = vunpack.c.l.b16 %v618
      %v1762 = vunpack.c.l.b16 %v619
      %v1763 = vunpack.c.l.b16 %v620
      %v1764 = vunpack.c.l.b16 %v621
      %v1765 = vunpack.c.l.b16 %v622
      %v1766 = vunpack.c.l.b16 %v623
      %v1767 = vunpack.c.l.b16 %v624
      %v1768 = vunpack.c.l.b16 %v625
      %v1769 = vunpack.c.l.b16 %v626
      %v1770 = vunpack.c.l.b16 %v627
      %v1771 = vunpack.c.l.b16 %v628
      %v1772 = vunpack.c.l.b16 %v629
      %v1773 = vunpack.c.l.b16 %v630
      %v1774 = vunpack.c.l.b16 %v631
      %v1775 = vunpack.c.l.b16 %v632
      %v1776 = vunpack.c.l.b16 %v633
      %v1777 = vunpack.c.l.b16 %v634
      %v1778 = vunpack.c.l.b16 %v635
      %v1779 = vunpack.c.l.b16 %v636
      %v1780 = vunpack.c.l.b16 %v637
      %v1781 = vunpack.c.l.b16 %v638
      %v1782 = vunpack.c.l.b16 %v639
      %v1783 = vunpack.c.l.b16 %v640
      %v1784 = vunpack.c.l.b16 %v641
      %v1785 = vunpack.c.l.b16 %v642
      %v1786 = vunpack.c.l.b16 %v643
      %v1787 = vunpack.c.l.b16 %v644
      %v1788 = vunpack.c.l.b16 %v645
      %v1789 = vunpack.c.l.b16 %v646
      %v1790 = vunpack.c.l.b16 %v647
      %v1791 = vunpack.c.l.b16 %v648
      %v1792 = vunpack.c.l.b16 %v649
      %v1793 = vunpack.c.l.b16 %v650
      %v1794 = vunpack.c.l.b16 %v651
      %v1795 = vunpack.c.l.b16 %v652
      %v1796 = vunpack.c.l.b16 %v653
      %v1797 = vunpack.c.l.b16 %v654
      %v1798 = vunpack.c.l.b16 %v655
      %v1799 = vunpack.c.l.b16 %v656
      %v1800 = vunpack.c.l.b16 %v657
      %v1801 = vunpack.c.l.b16 %v658
      %v1802 = vunpack.c.l.b16 %v659
      %v1803 = vunpack.c.l.b16 %v660
      %v1804 = vunpack.c.l.b16 %v661
      %v1805 = vunpack.c.l.b16 %v662
      %v1806 = vunpack.c.l.b16 %v663
      %v1807 = vunpack.c.l.b16 %v664
      %v1808 = vunpack.c.l.b16 %v665
      %v1809 = vunpack.c.l.b16 %v666
      %v1810 = vunpack.c.l.b16 %v667
      %v1811 = vunpack.c.l.b16 %v668
      %v1812 = vunpack.c.l.b16 %v669
      %v1813 = vunpack.c.l.b16 %v670
      %v1814 = vunpack.c.l.b16 %v671
      %v1815 = vunpack.c.l.b16 %v672
      %v1816 = vunpack.c.l.b16 %v673
      %v1817 = vunpack.c.l.b16 %v674
      %v1818 = vunpack.c.l.b16 %v675
      %v1819 = vunpack.c.l.b16 %v676
      %v1820 = vunpack.c.l.b16 %v677
      %v1821 = vunpack.c.l.b16 %v678
      %v1822 = vunpack.c.l.b16 %v679
      %v1823 = vunpack.c.l.b16 %v680
      %v1824 = vunpack.c.l.b16 %v681
      %v1825 = vunpack.c.l.b16 %v682
      %v1826 = vunpack.c.l.b16 %v683
      %v1827 = vunpack.c.l.b16 %v684
      %v1828 = vunpack.c.l.b16 %v685
      %v1829 = vunpack.c.l.b16 %v686
      %v1830 = vunpack.c.l.b16 %v687
      %v1831 = vunpack.c.l.b16 %v688
      %v1832 = vunpack.c.l.b16 %v689
      %v1833 = vunpack.c.l.b16 %v690
      %v1834 = vunpack.c.l.b16 %v691
      %v1835 = vunpack.c.l.b16 %v692
      %v1836 = vunpack.c.l.b16 %v693
      %v1837 = vunpack.c.l.b16 %v694
      %v1838 = vunpack.c.l.b16 %v695
      %v1839 = vunpack.c.l.b16 %v696
      %v1840 = vunpack.c.l.b16 %v697
      %v1841 = vunpack.c.l.b16 %v698
      %v1842 = vunpack.c.l.b16 %v699
      %v1843 = vunpack.c.l.b16 %v700
      %v1844 = vunpack.c.l.b16 %v701
      %v1845 = vunpack.c.l.b16 %v702
      %v1846 = vunpack.c.l.b16 %v703
      %v1847 = vunpack.c.l.b16 %v704
      %v1848 = vunpack.c.l.b16 %v705
      %v1849 = vunpack.c.l.b16 %v706
      %v1850 = vunpack.c.l.b16 %v707
      %v1851 = vunpack.c.l.b16 %v708
      %v1852 = vunpack.c.l.b16 %v709
      %v1853 = vunpack.c.l.b16 %v710
      %v1854 = vunpack.c.l.b16 %v711
      %v1855 = vunpack.c.l.b16 %v712
      %v1856 = vunpack.c.l.b16 %v713
      %v1857 = vpack.c.b16 %v1346, %v1345
      %v1858 = vpack.c.b16 %v1348, %v1347
      %v1859 = vpack.c.b16 %v1350, %v1349
      %v1860 = vpack.c.b16 %v1352, %v1351
      %v1861 = vpack.c.b16 %v1354, %v1353
      %v1862 = vpack.c.b16 %v1356, %v1355
      %v1863 = vpack.c.b16 %v1358, %v1357
      %v1864 = vpack.c.b16 %v1360, %v1359
      %v1865 = vpack.c.b16 %v1362, %v1361
      %v1866 = vpack.c.b16 %v1364, %v1363
      %v1867 = vpack.c.b16 %v1366, %v1365
      %v1868 = vpack.c.b16 %v1368, %v1367
      %v1869 = vpack.c.b16 %v1370, %v1369
      %v1870 = vpack.c.b16 %v1372, %v1371
      %v1871 = vpack.c.b16 %v1374, %v1373
      %v1872 = vpack.c.b16 %v1376, %v1375
      %v1873 = vpack.c.b16 %v1378, %v1377
      %v1874 = vpack.c.b16 %v1380, %v1379
      %v1875 = vpack.c.b16 %v1382, %v1381
      %v1876 = vpack.c.b16 %v1384, %v1383
      %v1877 = vpack.c.b16 %v1386, %v1385
      %v1878 = vpack.c.b16 %v1388, %v1387
      %v1879 = vpack.c.b16 %v1390, %v1389
      %v1880 = vpack.c.b16 %v1392, %v1391
      %v1881 = vpack.c.b16 %v1394, %v1393
      %v1882 = vpack.c.b16 %v1396, %v1395
      %v1883 = vpack.c.b16 %v1398, %v1397
      %v1884 = vpack.c.b16 %v1400, %v1399
      %v1885 = vpack.c.b16 %v1402, %v1401
      %v1886 = vpack.c.b16 %v1404, %v1403
      %v1887 = vpack.c.b16 %v1406, %v1405
      %v1888 = vpack.c.b16 %v1408, %v1407
      %v1889 = vpack.c.b16 %v1410, %v1409
      %v1890 = vpack.c.b16 %v1412, %v1411
      %v1891 = vpack.c.b16 %v1414, %v1413
      %v1892 = vpack.c.b16 %v1416, %v1415
      %v1893 = vpack.c.b16 %v1418, %v1417
      %v1894 = vpack.c.b16 %v1420, %v1419
      %v1895 = vpack.c.b16 %v1422, %v1421
      %v1896 = vpack.c.b16 %v1424, %v1423
      %v1897 = vpack.c.b16 %v1426, %v1425
      %v1898 = vpack.c.b16 %v1428, %v1427
      %v1899 = vpack.c.b16 %v1430, %v1429
      %v1900 = vpack.c.b16 %v1432, %v1431
      %v1901 = vpack.c.b16 %v1434, %v1433
      %v1902 = vpack.c.b16 %v1436, %v1435
      %v1903 = vpack.c.b16 %v1438, %v1437
      %v1904 = vpack.c.b16 %v1440, %v1439
      %v1905 = vpack.c.b16 %v1442, %v1441
      %v1906 = vpack.c.b16 %v1444, %v1443
      %v1907 = vpack.c.b16 %v1446, %v1445
      %v1908 = vpack.c.b16 %v1448, %v1447
      %v1909 = vpack.c.b16 %v1450, %v1449
      %v1910 = vpack.c.b16 %v1452, %v1451
      %v1911 = vpack.c.b16 %v1454, %v1453
      %v1912 = vpack.c.b16 %v1456, %v1455
      %v1913 = vpack.c.b16 %v1458, %v1457
      %v1914 = vpack.c.b16 %v1460, %v1459
      %v1915 = vpack.c.b16 %v1462, %v1461
      %v1916 = vpack.c.b16 %v1464, %v1463
      %v1917 = vpack.c.b16 %v1466, %v1465
      %v1918 = vpack.c.b16 %v1468, %v1467
      %v1919 = vpack.c.b16 %v1470, %v1469
      %v1920 = vpack.c.b16 %v1472, %v1471
      %v1921 = vpack.c.b16 %v1474, %v1473
      %v1922 = vpack.c.b16 %v1476, %v1475
      %v1923 = vpack.c.b16 %v1478, %v1477
      %v1924 = vpack.c.b16 %v1480, %v1479
      %v1925 = vpack.c.b16 %v1482, %v1481
      %v1926 = vpack.c.b16 %v1484, %v1483
      %v1927 = vpack.c.b16 %v1486, %v1485
      %v1928 = vpack.c.b16 %v1488, %v1487
      %v1929 = vpack.c.b16 %v1490, %v1489
      %v1930 = vpack.c.b16 %v1492, %v1491
      %v1931 = vpack.c.b16 %v1494, %v1493
      %v1932 = vpack.c.b16 %v1496, %v1495
      %v1933 = vpack.c.b16 %v1498, %v1497
      %v1934 = vpack.c.b16 %v1500, %v1499
      %v1935 = vpack.c.b16 %v1502, %v1501
      %v1936 = vpack.c.b16 %v1504, %v1503
      %v1937 = vpack.c.b16 %v1506, %v1505
      %v1938 = vpack.c.b16 %v1508, %v1507
      %v1939 = vpack.c.b16 %v1510, %v1509
      %v1940 = vpack.c.b16 %v1512, %v1511
      %v1941 = vpack.c.b16 %v1514, %v1513
      %v1942 = vpack.c.b16 %v1516, %v1515
      %v1943 = vpack.c.b16 %v1518, %v1517
      %v1944 = vpack.c.b16 %v1520, %v1519
      %v1945 = vpack.c.b16 %v1522, %v1521
      %v1946 = vpack.c.b16 %v1524, %v1523
      %v1947 = vpack.c.b16 %v1526, %v1525
      %v1948 = vpack.c.b16 %v1528, %v1527
      %v1949 = vpack.c.b16 %v1530, %v1529
      %v1950 = vpack.c.b16 %v1532, %v1531
      %v1951 = vpack.c.b16 %v1534, %v1533
      %v1952 = vpack.c.b16 %v1536, %v1535
      %v1953 = vpack.c.b16 %v1538, %v1537
      %v1954 = vpack.c.b16 %v1540, %v1539
      %v1955 = vpack.c.b16 %v1542, %v1541
      %v1956 = vpack.c.b16 %v1544, %v1543
      %v1957 = vpack.c.b16 %v1546, %v1545
      %v1958 = vpack.c.b16 %v1548, %v1547
      %v1959 = vpack.c.b16 %v1550, %v1549
      %v1960 = vpack.c.b16 %v1552, %v1551
      %v1961 = vpack.c.b16 %v1554, %v1553
      %v1962 = vpack.c.b16 %v1556, %v1555
      %v1963 = vpack.c.b16 %v1558, %v1557
      %v1964 = vpack.c.b16 %v1560, %v1559
      %v1965 = vpack.c.b16 %v1562, %v1561
      %v1966 = vpack.c.b16 %v1564, %v1563
      %v1967 = vpack.c.b16 %v1566, %v1565
      %v1968 = vpack.c.b16 %v1568, %v1567
      %v1969 = vpack.c.b16 %v1570, %v1569
      %v1970 = vpack.c.b16 %v1572, %v1571
      %v1971 = vpack.c.b16 %v1574, %v1573
      %v1972 = vpack.c.b16 %v1576, %v1575
      %v1973 = vpack.c.b16 %v1578, %v1577
      %v1974 = vpack.c.b16 %v1580, %v1579
      %v1975 = vpack.c.b16 %v1582, %v1581
      %v1976 = vpack.c.b16 %v1584, %v1583
      %v1977 = vpack.c.b16 %v1586, %v1585
      %v1978 = vpack.c.b16 %v1588, %v1587
      %v1979 = vpack.c.b16 %v1590, %v1589
      %v1980 = vpack.c.b16 %v1592, %v1591
      %v1981 = vpack.c.b16 %v1594, %v1593
      %v1982 = vpack.c.b16 %v1596, %v1595
      %v1983 = vpack.c.b16 %v1598, %v1597
      %v1984 = vpack.c.b16 %v1600, %v1599
      %v1985 = vpack.c.b16 %v1602, %v1601
      %v1986 = vpack.c.b16 %v1604, %v1603
      %v1987 = vpack.c.b16 %v1606, %v1605
      %v1988 = vpack.c.b16 %v1608, %v1607
      %v1989 = vpack.c.b16 %v1610, %v1609
      %v1990 = vpack.c.b16 %v1612, %v1611
      %v1991 = vpack.c.b16 %v1614, %v1613
      %v1992 = vpack.c.b16 %v1616, %v1615
      %v1993 = vpack.c.b16 %v1618, %v1617
      %v1994 = vpack.c.b16 %v1620, %v1619
      %v1995 = vpack.c.b16 %v1622, %v1621
      %v1996 = vpack.c.b16 %v1624, %v1623
      %v1997 = vpack.c.b16 %v1626, %v1625
      %v1998 = vpack.c.b16 %v1628, %v1627
      %v1999 = vpack.c.b16 %v1630, %v1629
      %v2000 = vpack.c.b16 %v1632, %v1631
      %v2001 = vpack.c.b16 %v1634, %v1633
      %v2002 = vpack.c.b16 %v1636, %v1635
      %v2003 = vpack.c.b16 %v1638, %v1637
      %v2004 = vpack.c.b16 %v1640, %v1639
      %v2005 = vpack.c.b16 %v1642, %v1641
      %v2006 = vpack.c.b16 %v1644, %v1643
      %v2007 = vpack.c.b16 %v1646, %v1645
      %v2008 = vpack.c.b16 %v1648, %v1647
      %v2009 = vpack.c.b16 %v1650, %v1649
      %v2010 = vpack.c.b16 %v1652, %v1651
      %v2011 = vpack.c.b16 %v1654, %v1653
      %v2012 = vpack.c.b16 %v1656, %v1655
      %v2013 = vpack.c.b16 %v1658, %v1657
      %v2014 = vpack.c.b16 %v1660, %v1659
      %v2015 = vpack.c.b16 %v1662, %v1661
      %v2016 = vpack.c.b16 %v1664, %v1663
      %v2017 = vpack.c.b16 %v1666, %v1665
      %v2018 = vpack.c.b16 %v1668, %v1667
      %v2019 = vpack.c.b16 %v1670, %v1669
      %v2020 = vpack.c.b16 %v1672, %v1671
      %v2021 = vpack.c.b16 %v1674, %v1673
      %v2022 = vpack.c.b16 %v1676, %v1675
      %v2023 = vpack.c.b16 %v1678, %v1677
      %v2024 = vpack.c.b16 %v1680, %v1679
      %v2025 = vpack.c.b16 %v1682, %v1681
      %v2026 = vpack.c.b16 %v1684, %v1683
      %v2027 = vpack.c.b16 %v1686, %v1685
      %v2028 = vpack.c.b16 %v1688, %v1687
      %v2029 = vpack.c.b16 %v1690, %v1689
      %v2030 = vpack.c.b16 %v1692, %v1691
      %v2031 = vpack.c.b16 %v1694, %v1693
      %v2032 = vpack.c.b16 %v1696, %v1695
      %v2033 = vpack.c.b16 %v1698, %v1697
      %v2034 = vpack.c.b16 %v1700, %v1699
      %v2035 = vpack.c.b16 %v1702, %v1701
      %v2036 = vpack.c.b16 %v1704, %v1703
      %v2037 = vpack.c.b16 %v1706, %v1705
      %v2038 = vpack.c.b16 %v1708, %v1707
      %v2039 = vpack.c.b16 %v1710, %v1709
      %v2040 = vpack.c.b16 %v1712, %v1711
      %v2041 = vpack.c.b16 %v1714, %v1713
      %v2042 = vpack.c.b16 %v1716, %v1715
      %v2043 = vpack.c.b16 %v1718, %v1717
      %v2044 = vpack.c.b16 %v1720, %v1719
      %v2045 = vpack.c.b16 %v1722, %v1721
      %v2046 = vpack.c.b16 %v1724, %v1723
      %v2047 = vpack.c.b16 %v1726, %v1725
      %v2048 = vpack.c.b16 %v1728, %v1727
      %v2049 = vpack.c.b16 %v1730, %v1729
      %v2050 = vpack.c.b16 %v1732, %v1731
      %v2051 = vpack.c.b16 %v1734, %v1733
      %v2052 = vpack.c.b16 %v1736, %v1735
      %v2053 = vpack.c.b16 %v1738, %v1737
      %v2054 = vpack.c.b16 %v1740, %v1739
      %v2055 = vpack.c.b16 %v1742, %v1741
      %v2056 = vpack.c.b16 %v1744, %v1743
      %v2057 = vpack.c.b16 %v1746, %v1745
      %v2058 = vpack.c.b16 %v1748, %v1747
      %v2059 = vpack.c.b16 %v1750, %v1749
      %v2060 = vpack.c.b16 %v1752, %v1751
      %v2061 = vpack.c.b16 %v1754, %v1753
      %v2062 = vpack.c.b16 %v1756, %v1755
      %v2063 = vpack.c.b16 %v1758, %v1757
      %v2064 = vpack.c.b16 %v1760, %v1759
      %v2065 = vpack.c.b16 %v1762, %v1761
      %v2066 = vpack.c.b16 %v1764, %v1763
      %v2067 = vpack.c.b16 %v1766, %v1765
      %v2068 = vpack.c.b16 %v1768, %v1767
      %v2069 = vpack.c.b16 %v1770, %v1769
      %v2070 = vpack.c.b16 %v1772, %v1771
      %v2071 = vpack.c.b16 %v1774, %v1773
      %v2072 = vpack.c.b16 %v1776, %v1775
      %v2073 = vpack.c.b16 %v1778, %v1777
      %v2074 = vpack.c.b16 %v1780, %v1779
      %v2075 = vpack.c.b16 %v1782, %v1781
      %v2076 = vpack.c.b16 %v1784, %v1783
      %v2077 = vpack.c.b16 %v1786, %v1785
      %v2078 = vpack.c.b16 %v1788, %v1787
      %v2079 = vpack.c.b16 %v1790, %v1789
      %v2080 = vpack.c.b16 %v1792, %v1791
      %v2081 = vpack.c.b16 %v1794, %v1793
      %v2082 = vpack.c.b16 %v1796, %v1795
      %v2083 = vpack.c.b16 %v1798, %v1797
      %v2084 = vpack.c.b16 %v1800, %v1799
      %v2085 = vpack.c.b16 %v1802, %v1801
      %v2086 = vpack.c.b16 %v1804, %v1803
      %v2087 = vpack.c.b16 %v1806, %v1805
      %v2088 = vpack.c.b16 %v1808, %v1807
      %v2089 = vpack.c.b16 %v1810, %v1809
      %v2090 = vpack.c.b16 %v1812, %v1811
      %v2091 = vpack.c.b16 %v1814, %v1813
      %v2092 = vpack.c.b16 %v1816, %v1815
      %v2093 = vpack.c.b16 %v1818, %v1817
      %v2094 = vpack.c.b16 %v1820, %v1819
      %v2095 = vpack.c.b16 %v1822, %v1821
      %v2096 = vpack.c.b16 %v1824, %v1823
      %v2097 = vpack.c.b16 %v1826, %v1825
      %v2098 = vpack.c.b16 %v1828, %v1827
      %v2099 = vpack.c.b16 %v1830, %v1829
      %v2100 = vpack.c.b16 %v1832, %v1831
      %v2101 = vpack.c.b16 %v1834, %v1833
      %v2102 = vpack.c.b16 %v1836, %v1835
      %v2103 = vpack.c.b16 %v1838, %v1837
      %v2104 = vpack.c.b16 %v1840, %v1839
      %v2105 = vpack.c.b16 %v1842, %v1841
      %v2106 = vpack.c.b16 %v1844, %v1843
      %v2107 = vpack.c.b16 %v1846, %v1845
      %v2108 = vpack.c.b16 %v1848, %v1847
      %v2109 = vpack.c.b16 %v1850, %v1849
      %v2110 = vpack.c.b16 %v1852, %v1851
      %v2111 = vpack.c.b16 %v1854, %v1853
      %v2112 = vpack.c.b16 %v1856, %v1855
      %2369 = vmatprep.subr.bf16.mxu0 0
      %2370 = vmatpush1.bf16.msra.mxu0 %v1864
      %2371 = vmatprep.subr.bf16.mxu0 0
      %2372 = vmatpush1.bf16.msra.mxu0 %v1863
      %2373 = vmatprep.subr.bf16.mxu0 0
      %2374 = vmatpush1.bf16.msra.mxu0 %v1862
      %2375 = vmatprep.subr.bf16.mxu0 0
      %2376 = vmatpush1.bf16.msra.mxu0 %v1861
      %2377 = vmatprep.subr.bf16.mxu0 0
      %2378 = vmatpush1.bf16.msra.mxu0 %v1860
      %2379 = vmatprep.subr.bf16.mxu0 0
      %2380 = vmatpush1.bf16.msra.mxu0 %v1859
      %2381 = vmatprep.subr.bf16.mxu0 0
      %2382 = vmatpush1.bf16.msra.mxu0 %v1858
      %2383 = vmatprep.subr.bf16.mxu0 0
      %2384 = vmatpush1.bf16.msra.mxu0 %v1857
      %2385 = vmatprep.subr.bf16.mxu0 0
      %2386 = vmatpush2.bf16.msra.mxu0 %v1872
      %2387 = vmatprep.subr.bf16.mxu0 0
      %2388 = vmatpush2.bf16.msra.mxu0 %v1871
      %2389 = vmatprep.subr.bf16.mxu0 0
      %2390 = vmatpush2.bf16.msra.mxu0 %v1870
      %2391 = vmatprep.subr.bf16.mxu0 0
      %2392 = vmatpush2.bf16.msra.mxu0 %v1869
      %2393 = vmatprep.subr.bf16.mxu0 0
      %2394 = vmatpush2.bf16.msra.mxu0 %v1868
      %2395 = vmatprep.subr.bf16.mxu0 0
      %2396 = vmatpush2.bf16.msra.mxu0 %v1867
      %2397 = vmatprep.subr.bf16.mxu0 0
      %2398 = vmatpush2.bf16.msra.mxu0 %v1866
      %2399 = vmatprep.subr.bf16.mxu0 0
      %2400 = vmatpush2.bf16.msra.mxu0 %v1865
      %2401 = vmatprep.mubr.bf16.mxu0 %v770
      %2402 = vmatmul.mubr.bf16.gmra.mxu0 %v769
      %v2403 = vpop.f32.mrf.mxu0
      %v2404 = vadd.f32 %v719, %v2403
      %v2405 = vpop.f32.mrf.mxu0
      %v2406 = vpop.f32.mrf.mxu0
      %v2407 = vpop.f32.mrf.mxu0
      %2408 = vdwg.mxu0
      %2409 = vmatprep.subr.bf16.mxu0 0
      %2410 = vmatpush1.bf16.msra.mxu0 %v1880
      %2411 = vmatprep.subr.bf16.mxu0 0
      %2412 = vmatpush1.bf16.msra.mxu0 %v1879
      %2413 = vmatprep.subr.bf16.mxu0 0
      %2414 = vmatpush1.bf16.msra.mxu0 %v1878
      %2415 = vmatprep.subr.bf16.mxu0 0
      %2416 = vmatpush1.bf16.msra.mxu0 %v1877
      %2417 = vmatprep.subr.bf16.mxu0 0
      %2418 = vmatpush1.bf16.msra.mxu0 %v1876
      %2419 = vmatprep.subr.bf16.mxu0 0
      %2420 = vmatpush1.bf16.msra.mxu0 %v1875
      %2421 = vmatprep.subr.bf16.mxu0 0
      %2422 = vmatpush1.bf16.msra.mxu0 %v1874
      %2423 = vmatprep.subr.bf16.mxu0 0
      %2424 = vmatpush1.bf16.msra.mxu0 %v1873
      %2425 = vmatprep.subr.bf16.mxu0 0
      %2426 = vmatpush2.bf16.msra.mxu0 %v1888
      %2427 = vmatprep.subr.bf16.mxu0 0
      %2428 = vmatpush2.bf16.msra.mxu0 %v1887
      %2429 = vmatprep.subr.bf16.mxu0 0
      %2430 = vmatpush2.bf16.msra.mxu0 %v1886
      %2431 = vmatprep.subr.bf16.mxu0 0
      %2432 = vmatpush2.bf16.msra.mxu0 %v1885
      %2433 = vmatprep.subr.bf16.mxu0 0
      %2434 = vmatpush2.bf16.msra.mxu0 %v1884
      %2435 = vmatprep.subr.bf16.mxu0 0
      %2436 = vmatpush2.bf16.msra.mxu0 %v1883
      %2437 = vmatprep.subr.bf16.mxu0 0
      %2438 = vmatpush2.bf16.msra.mxu0 %v1882
      %2439 = vmatprep.subr.bf16.mxu0 0
      %2440 = vmatpush2.bf16.msra.mxu0 %v1881
      %2441 = vmatprep.mubr.bf16.mxu0 %v772
      %2442 = vmatmul.mubr.bf16.gmra.mxu0 %v771
      %v2443 = vpop.f32.mrf.mxu0
      %v2444 = vadd.f32 %v2404, %v2443
      %v2445 = vpop.f32.mrf.mxu0
      %v2446 = vpop.f32.mrf.mxu0
      %v2447 = vpop.f32.mrf.mxu0
      %2448 = vdwg.mxu0
      %2449 = vmatprep.subr.bf16.mxu0 0
      %2450 = vmatpush1.bf16.msra.mxu0 %v1896
      %2451 = vmatprep.subr.bf16.mxu0 0
      %2452 = vmatpush1.bf16.msra.mxu0 %v1895
      %2453 = vmatprep.subr.bf16.mxu0 0
      %2454 = vmatpush1.bf16.msra.mxu0 %v1894
      %2455 = vmatprep.subr.bf16.mxu0 0
      %2456 = vmatpush1.bf16.msra.mxu0 %v1893
      %2457 = vmatprep.subr.bf16.mxu0 0
      %2458 = vmatpush1.bf16.msra.mxu0 %v1892
      %2459 = vmatprep.subr.bf16.mxu0 0
      %2460 = vmatpush1.bf16.msra.mxu0 %v1891
      %2461 = vmatprep.subr.bf16.mxu0 0
      %2462 = vmatpush1.bf16.msra.mxu0 %v1890
      %2463 = vmatprep.subr.bf16.mxu0 0
      %2464 = vmatpush1.bf16.msra.mxu0 %v1889
      %2465 = vmatprep.subr.bf16.mxu0 0
      %2466 = vmatpush2.bf16.msra.mxu0 %v1904
      %2467 = vmatprep.subr.bf16.mxu0 0
      %2468 = vmatpush2.bf16.msra.mxu0 %v1903
      %2469 = vmatprep.subr.bf16.mxu0 0
      %2470 = vmatpush2.bf16.msra.mxu0 %v1902
      %2471 = vmatprep.subr.bf16.mxu0 0
      %2472 = vmatpush2.bf16.msra.mxu0 %v1901
      %2473 = vmatprep.subr.bf16.mxu0 0
      %2474 = vmatpush2.bf16.msra.mxu0 %v1900
      %2475 = vmatprep.subr.bf16.mxu0 0
      %2476 = vmatpush2.bf16.msra.mxu0 %v1899
      %2477 = vmatprep.subr.bf16.mxu0 0
      %2478 = vmatpush2.bf16.msra.mxu0 %v1898
      %2479 = vmatprep.subr.bf16.mxu0 0
      %2480 = vmatpush2.bf16.msra.mxu0 %v1897
      %2481 = vmatprep.mubr.bf16.mxu0 %v774
      %2482 = vmatmul.mubr.bf16.gmra.mxu0 %v773
      %v2483 = vpop.f32.mrf.mxu0
      %v2484 = vadd.f32 %v2444, %v2483
      %v2485 = vpop.f32.mrf.mxu0
      %v2486 = vpop.f32.mrf.mxu0
      %v2487 = vpop.f32.mrf.mxu0
      %2488 = vdwg.mxu0
      %2489 = vmatprep.subr.bf16.mxu0 0
      %2490 = vmatpush1.bf16.msra.mxu0 %v1912
      %2491 = vmatprep.subr.bf16.mxu0 0
      %2492 = vmatpush1.bf16.msra.mxu0 %v1911
      %2493 = vmatprep.subr.bf16.mxu0 0
      %2494 = vmatpush1.bf16.msra.mxu0 %v1910
      %2495 = vmatprep.subr.bf16.mxu0 0
      %2496 = vmatpush1.bf16.msra.mxu0 %v1909
      %2497 = vmatprep.subr.bf16.mxu0 0
      %2498 = vmatpush1.bf16.msra.mxu0 %v1908
      %2499 = vmatprep.subr.bf16.mxu0 0
      %2500 = vmatpush1.bf16.msra.mxu0 %v1907
      %2501 = vmatprep.subr.bf16.mxu0 0
      %2502 = vmatpush1.bf16.msra.mxu0 %v1906
      %2503 = vmatprep.subr.bf16.mxu0 0
      %2504 = vmatpush1.bf16.msra.mxu0 %v1905
      %2505 = vmatprep.subr.bf16.mxu0 0
      %2506 = vmatpush2.bf16.msra.mxu0 %v1920
      %2507 = vmatprep.subr.bf16.mxu0 0
      %2508 = vmatpush2.bf16.msra.mxu0 %v1919
      %2509 = vmatprep.subr.bf16.mxu0 0
      %2510 = vmatpush2.bf16.msra.mxu0 %v1918
      %2511 = vmatprep.subr.bf16.mxu0 0
      %2512 = vmatpush2.bf16.msra.mxu0 %v1917
      %2513 = vmatprep.subr.bf16.mxu0 0
      %2514 = vmatpush2.bf16.msra.mxu0 %v1916
      %2515 = vmatprep.subr.bf16.mxu0 0
      %2516 = vmatpush2.bf16.msra.mxu0 %v1915
      %2517 = vmatprep.subr.bf16.mxu0 0
      %2518 = vmatpush2.bf16.msra.mxu0 %v1914
      %2519 = vmatprep.subr.bf16.mxu0 0
      %2520 = vmatpush2.bf16.msra.mxu0 %v1913
      %2521 = vmatprep.mubr.bf16.mxu0 %v776
      %2522 = vmatmul.mubr.bf16.gmra.mxu0 %v775
      %v2523 = vpop.f32.mrf.mxu0
      %v2524 = vadd.f32 %v2484, %v2523
      %v2525 = vpop.f32.mrf.mxu0
      %v2526 = vpop.f32.mrf.mxu0
      %v2527 = vpop.f32.mrf.mxu0
      %2528 = vdwg.mxu0
      %2529 = vmatprep.subr.bf16.mxu0 0
      %2530 = vmatpush1.bf16.msra.mxu0 %v1928
      %2531 = vmatprep.subr.bf16.mxu0 0
      %2532 = vmatpush1.bf16.msra.mxu0 %v1927
      %2533 = vmatprep.subr.bf16.mxu0 0
      %2534 = vmatpush1.bf16.msra.mxu0 %v1926
      %2535 = vmatprep.subr.bf16.mxu0 0
      %2536 = vmatpush1.bf16.msra.mxu0 %v1925
      %2537 = vmatprep.subr.bf16.mxu0 0
      %2538 = vmatpush1.bf16.msra.mxu0 %v1924
      %2539 = vmatprep.subr.bf16.mxu0 0
      %2540 = vmatpush1.bf16.msra.mxu0 %v1923
      %2541 = vmatprep.subr.bf16.mxu0 0
      %2542 = vmatpush1.bf16.msra.mxu0 %v1922
      %2543 = vmatprep.subr.bf16.mxu0 0
      %2544 = vmatpush1.bf16.msra.mxu0 %v1921
      %2545 = vmatprep.subr.bf16.mxu0 0
      %2546 = vmatpush2.bf16.msra.mxu0 %v1936
      %2547 = vmatprep.subr.bf16.mxu0 0
      %2548 = vmatpush2.bf16.msra.mxu0 %v1935
      %2549 = vmatprep.subr.bf16.mxu0 0
      %2550 = vmatpush2.bf16.msra.mxu0 %v1934
      %2551 = vmatprep.subr.bf16.mxu0 0
      %2552 = vmatpush2.bf16.msra.mxu0 %v1933
      %2553 = vmatprep.subr.bf16.mxu0 0
      %2554 = vmatpush2.bf16.msra.mxu0 %v1932
      %2555 = vmatprep.subr.bf16.mxu0 0
      %2556 = vmatpush2.bf16.msra.mxu0 %v1931
      %2557 = vmatprep.subr.bf16.mxu0 0
      %2558 = vmatpush2.bf16.msra.mxu0 %v1930
      %2559 = vmatprep.subr.bf16.mxu0 0
      %2560 = vmatpush2.bf16.msra.mxu0 %v1929
      %2561 = vmatprep.mubr.bf16.mxu0 %v778
      %2562 = vmatmul.mubr.bf16.gmra.mxu0 %v777
      %v2563 = vpop.f32.mrf.mxu0
      %v2564 = vadd.f32 %v2524, %v2563
      %v2565 = vpop.f32.mrf.mxu0
      %v2566 = vpop.f32.mrf.mxu0
      %v2567 = vpop.f32.mrf.mxu0
      %2568 = vdwg.mxu0
      %2569 = vmatprep.subr.bf16.mxu0 0
      %2570 = vmatpush1.bf16.msra.mxu0 %v1944
      %2571 = vmatprep.subr.bf16.mxu0 0
      %2572 = vmatpush1.bf16.msra.mxu0 %v1943
      %2573 = vmatprep.subr.bf16.mxu0 0
      %2574 = vmatpush1.bf16.msra.mxu0 %v1942
      %2575 = vmatprep.subr.bf16.mxu0 0
      %2576 = vmatpush1.bf16.msra.mxu0 %v1941
      %2577 = vmatprep.subr.bf16.mxu0 0
      %2578 = vmatpush1.bf16.msra.mxu0 %v1940
      %2579 = vmatprep.subr.bf16.mxu0 0
      %2580 = vmatpush1.bf16.msra.mxu0 %v1939
      %2581 = vmatprep.subr.bf16.mxu0 0
      %2582 = vmatpush1.bf16.msra.mxu0 %v1938
      %2583 = vmatprep.subr.bf16.mxu0 0
      %2584 = vmatpush1.bf16.msra.mxu0 %v1937
      %2585 = vmatprep.subr.bf16.mxu0 0
      %2586 = vmatpush2.bf16.msra.mxu0 %v1952
      %2587 = vmatprep.subr.bf16.mxu0 0
      %2588 = vmatpush2.bf16.msra.mxu0 %v1951
      %2589 = vmatprep.subr.bf16.mxu0 0
      %2590 = vmatpush2.bf16.msra.mxu0 %v1950
      %2591 = vmatprep.subr.bf16.mxu0 0
      %2592 = vmatpush2.bf16.msra.mxu0 %v1949
      %2593 = vmatprep.subr.bf16.mxu0 0
      %2594 = vmatpush2.bf16.msra.mxu0 %v1948
      %2595 = vmatprep.subr.bf16.mxu0 0
      %2596 = vmatpush2.bf16.msra.mxu0 %v1947
      %2597 = vmatprep.subr.bf16.mxu0 0
      %2598 = vmatpush2.bf16.msra.mxu0 %v1946
      %2599 = vmatprep.subr.bf16.mxu0 0
      %2600 = vmatpush2.bf16.msra.mxu0 %v1945
      %2601 = vmatprep.mubr.bf16.mxu0 %v780
      %2602 = vmatmul.mubr.bf16.gmra.mxu0 %v779
      %v2603 = vpop.f32.mrf.mxu0
      %v2604 = vadd.f32 %v2564, %v2603
      %v2605 = vpop.f32.mrf.mxu0
      %v2606 = vpop.f32.mrf.mxu0
      %v2607 = vpop.f32.mrf.mxu0
      %2608 = vdwg.mxu0
      %2609 = vmatprep.subr.bf16.mxu0 0
      %2610 = vmatpush1.bf16.msra.mxu0 %v1960
      %2611 = vmatprep.subr.bf16.mxu0 0
      %2612 = vmatpush1.bf16.msra.mxu0 %v1959
      %2613 = vmatprep.subr.bf16.mxu0 0
      %2614 = vmatpush1.bf16.msra.mxu0 %v1958
      %2615 = vmatprep.subr.bf16.mxu0 0
      %2616 = vmatpush1.bf16.msra.mxu0 %v1957
      %2617 = vmatprep.subr.bf16.mxu0 0
      %2618 = vmatpush1.bf16.msra.mxu0 %v1956
      %2619 = vmatprep.subr.bf16.mxu0 0
      %2620 = vmatpush1.bf16.msra.mxu0 %v1955
      %2621 = vmatprep.subr.bf16.mxu0 0
      %2622 = vmatpush1.bf16.msra.mxu0 %v1954
      %2623 = vmatprep.subr.bf16.mxu0 0
      %2624 = vmatpush1.bf16.msra.mxu0 %v1953
      %2625 = vmatprep.subr.bf16.mxu0 0
      %2626 = vmatpush2.bf16.msra.mxu0 %v1968
      %2627 = vmatprep.subr.bf16.mxu0 0
      %2628 = vmatpush2.bf16.msra.mxu0 %v1967
      %2629 = vmatprep.subr.bf16.mxu0 0
      %2630 = vmatpush2.bf16.msra.mxu0 %v1966
      %2631 = vmatprep.subr.bf16.mxu0 0
      %2632 = vmatpush2.bf16.msra.mxu0 %v1965
      %2633 = vmatprep.subr.bf16.mxu0 0
      %2634 = vmatpush2.bf16.msra.mxu0 %v1964
      %2635 = vmatprep.subr.bf16.mxu0 0
      %2636 = vmatpush2.bf16.msra.mxu0 %v1963
      %2637 = vmatprep.subr.bf16.mxu0 0
      %2638 = vmatpush2.bf16.msra.mxu0 %v1962
      %2639 = vmatprep.subr.bf16.mxu0 0
      %2640 = vmatpush2.bf16.msra.mxu0 %v1961
      %2641 = vmatprep.mubr.bf16.mxu0 %v782
      %2642 = vmatmul.mubr.bf16.gmra.mxu0 %v781
      %v2643 = vpop.f32.mrf.mxu0
      %v2644 = vadd.f32 %v2604, %v2643
      %v2645 = vpop.f32.mrf.mxu0
      %v2646 = vpop.f32.mrf.mxu0
      %v2647 = vpop.f32.mrf.mxu0
      %2648 = vdwg.mxu0
      %2649 = vmatprep.subr.bf16.mxu0 0
      %2650 = vmatpush1.bf16.msra.mxu0 %v1976
      %2651 = vmatprep.subr.bf16.mxu0 0
      %2652 = vmatpush1.bf16.msra.mxu0 %v1975
      %2653 = vmatprep.subr.bf16.mxu0 0
      %2654 = vmatpush1.bf16.msra.mxu0 %v1974
      %2655 = vmatprep.subr.bf16.mxu0 0
      %2656 = vmatpush1.bf16.msra.mxu0 %v1973
      %2657 = vmatprep.subr.bf16.mxu0 0
      %2658 = vmatpush1.bf16.msra.mxu0 %v1972
      %2659 = vmatprep.subr.bf16.mxu0 0
      %2660 = vmatpush1.bf16.msra.mxu0 %v1971
      %2661 = vmatprep.subr.bf16.mxu0 0
      %2662 = vmatpush1.bf16.msra.mxu0 %v1970
      %2663 = vmatprep.subr.bf16.mxu0 0
      %2664 = vmatpush1.bf16.msra.mxu0 %v1969
      %2665 = vmatprep.subr.bf16.mxu0 0
      %2666 = vmatpush2.bf16.msra.mxu0 %v1984
      %2667 = vmatprep.subr.bf16.mxu0 0
      %2668 = vmatpush2.bf16.msra.mxu0 %v1983
      %2669 = vmatprep.subr.bf16.mxu0 0
      %2670 = vmatpush2.bf16.msra.mxu0 %v1982
      %2671 = vmatprep.subr.bf16.mxu0 0
      %2672 = vmatpush2.bf16.msra.mxu0 %v1981
      %2673 = vmatprep.subr.bf16.mxu0 0
      %2674 = vmatpush2.bf16.msra.mxu0 %v1980
      %2675 = vmatprep.subr.bf16.mxu0 0
      %2676 = vmatpush2.bf16.msra.mxu0 %v1979
      %2677 = vmatprep.subr.bf16.mxu0 0
      %2678 = vmatpush2.bf16.msra.mxu0 %v1978
      %2679 = vmatprep.subr.bf16.mxu0 0
      %2680 = vmatpush2.bf16.msra.mxu0 %v1977
      %2681 = vmatprep.mubr.bf16.mxu0 %v784
      %2682 = vmatmul.mubr.bf16.gmra.mxu0 %v783
      %v2683 = vpop.f32.mrf.mxu0
      %v2684 = vadd.f32 %v2644, %v2683
      %v2685 = vpop.f32.mrf.mxu0
      %v2686 = vpop.f32.mrf.mxu0
      %v2687 = vpop.f32.mrf.mxu0
      %2688 = vdwg.mxu0
      %2689 = vmatprep.subr.bf16.mxu0 0
      %2690 = vmatpush1.bf16.msra.mxu0 %v1992
      %2691 = vmatprep.subr.bf16.mxu0 0
      %2692 = vmatpush1.bf16.msra.mxu0 %v1991
      %2693 = vmatprep.subr.bf16.mxu0 0
      %2694 = vmatpush1.bf16.msra.mxu0 %v1990
      %2695 = vmatprep.subr.bf16.mxu0 0
      %2696 = vmatpush1.bf16.msra.mxu0 %v1989
      %2697 = vmatprep.subr.bf16.mxu0 0
      %2698 = vmatpush1.bf16.msra.mxu0 %v1988
      %2699 = vmatprep.subr.bf16.mxu0 0
      %2700 = vmatpush1.bf16.msra.mxu0 %v1987
      %2701 = vmatprep.subr.bf16.mxu0 0
      %2702 = vmatpush1.bf16.msra.mxu0 %v1986
      %2703 = vmatprep.subr.bf16.mxu0 0
      %2704 = vmatpush1.bf16.msra.mxu0 %v1985
      %2705 = vmatprep.subr.bf16.mxu0 0
      %2706 = vmatpush2.bf16.msra.mxu0 %v2000
      %2707 = vmatprep.subr.bf16.mxu0 0
      %2708 = vmatpush2.bf16.msra.mxu0 %v1999
      %2709 = vmatprep.subr.bf16.mxu0 0
      %2710 = vmatpush2.bf16.msra.mxu0 %v1998
      %2711 = vmatprep.subr.bf16.mxu0 0
      %2712 = vmatpush2.bf16.msra.mxu0 %v1997
      %2713 = vmatprep.subr.bf16.mxu0 0
      %2714 = vmatpush2.bf16.msra.mxu0 %v1996
      %2715 = vmatprep.subr.bf16.mxu0 0
      %2716 = vmatpush2.bf16.msra.mxu0 %v1995
      %2717 = vmatprep.subr.bf16.mxu0 0
      %2718 = vmatpush2.bf16.msra.mxu0 %v1994
      %2719 = vmatprep.subr.bf16.mxu0 0
      %2720 = vmatpush2.bf16.msra.mxu0 %v1993
      %2721 = vmatprep.mubr.bf16.mxu0 %v786
      %2722 = vmatmul.mubr.bf16.gmra.mxu0 %v785
      %v2723 = vpop.f32.mrf.mxu0
      %v2724 = vadd.f32 %v2684, %v2723
      %v2725 = vpop.f32.mrf.mxu0
      %v2726 = vpop.f32.mrf.mxu0
      %v2727 = vpop.f32.mrf.mxu0
      %2728 = vdwg.mxu0
      %2729 = vmatprep.subr.bf16.mxu0 0
      %2730 = vmatpush1.bf16.msra.mxu0 %v2008
      %2731 = vmatprep.subr.bf16.mxu0 0
      %2732 = vmatpush1.bf16.msra.mxu0 %v2007
      %2733 = vmatprep.subr.bf16.mxu0 0
      %2734 = vmatpush1.bf16.msra.mxu0 %v2006
      %2735 = vmatprep.subr.bf16.mxu0 0
      %2736 = vmatpush1.bf16.msra.mxu0 %v2005
      %2737 = vmatprep.subr.bf16.mxu0 0
      %2738 = vmatpush1.bf16.msra.mxu0 %v2004
      %2739 = vmatprep.subr.bf16.mxu0 0
      %2740 = vmatpush1.bf16.msra.mxu0 %v2003
      %2741 = vmatprep.subr.bf16.mxu0 0
      %2742 = vmatpush1.bf16.msra.mxu0 %v2002
      %2743 = vmatprep.subr.bf16.mxu0 0
      %2744 = vmatpush1.bf16.msra.mxu0 %v2001
      %2745 = vmatprep.subr.bf16.mxu0 0
      %2746 = vmatpush2.bf16.msra.mxu0 %v2016
      %2747 = vmatprep.subr.bf16.mxu0 0
      %2748 = vmatpush2.bf16.msra.mxu0 %v2015
      %2749 = vmatprep.subr.bf16.mxu0 0
      %2750 = vmatpush2.bf16.msra.mxu0 %v2014
      %2751 = vmatprep.subr.bf16.mxu0 0
      %2752 = vmatpush2.bf16.msra.mxu0 %v2013
      %2753 = vmatprep.subr.bf16.mxu0 0
      %2754 = vmatpush2.bf16.msra.mxu0 %v2012
      %2755 = vmatprep.subr.bf16.mxu0 0
      %2756 = vmatpush2.bf16.msra.mxu0 %v2011
      %2757 = vmatprep.subr.bf16.mxu0 0
      %2758 = vmatpush2.bf16.msra.mxu0 %v2010
      %2759 = vmatprep.subr.bf16.mxu0 0
      %2760 = vmatpush2.bf16.msra.mxu0 %v2009
      %2761 = vmatprep.mubr.bf16.mxu0 %v788
      %2762 = vmatmul.mubr.bf16.gmra.mxu0 %v787
      %v2763 = vpop.f32.mrf.mxu0
      %v2764 = vadd.f32 %v2724, %v2763
      %v2765 = vpop.f32.mrf.mxu0
      %v2766 = vpop.f32.mrf.mxu0
      %v2767 = vpop.f32.mrf.mxu0
      %2768 = vdwg.mxu0
      %2769 = vmatprep.subr.bf16.mxu0 0
      %2770 = vmatpush1.bf16.msra.mxu0 %v2024
      %2771 = vmatprep.subr.bf16.mxu0 0
      %2772 = vmatpush1.bf16.msra.mxu0 %v2023
      %2773 = vmatprep.subr.bf16.mxu0 0
      %2774 = vmatpush1.bf16.msra.mxu0 %v2022
      %2775 = vmatprep.subr.bf16.mxu0 0
      %2776 = vmatpush1.bf16.msra.mxu0 %v2021
      %2777 = vmatprep.subr.bf16.mxu0 0
      %2778 = vmatpush1.bf16.msra.mxu0 %v2020
      %2779 = vmatprep.subr.bf16.mxu0 0
      %2780 = vmatpush1.bf16.msra.mxu0 %v2019
      %2781 = vmatprep.subr.bf16.mxu0 0
      %2782 = vmatpush1.bf16.msra.mxu0 %v2018
      %2783 = vmatprep.subr.bf16.mxu0 0
      %2784 = vmatpush1.bf16.msra.mxu0 %v2017
      %2785 = vmatprep.subr.bf16.mxu0 0
      %2786 = vmatpush2.bf16.msra.mxu0 %v2032
      %2787 = vmatprep.subr.bf16.mxu0 0
      %2788 = vmatpush2.bf16.msra.mxu0 %v2031
      %2789 = vmatprep.subr.bf16.mxu0 0
      %2790 = vmatpush2.bf16.msra.mxu0 %v2030
      %2791 = vmatprep.subr.bf16.mxu0 0
      %2792 = vmatpush2.bf16.msra.mxu0 %v2029
      %2793 = vmatprep.subr.bf16.mxu0 0
      %2794 = vmatpush2.bf16.msra.mxu0 %v2028
      %2795 = vmatprep.subr.bf16.mxu0 0
      %2796 = vmatpush2.bf16.msra.mxu0 %v2027
      %2797 = vmatprep.subr.bf16.mxu0 0
      %2798 = vmatpush2.bf16.msra.mxu0 %v2026
      %2799 = vmatprep.subr.bf16.mxu0 0
      %2800 = vmatpush2.bf16.msra.mxu0 %v2025
      %2801 = vmatprep.mubr.bf16.mxu0 %v790
      %2802 = vmatmul.mubr.bf16.gmra.mxu0 %v789
      %v2803 = vpop.f32.mrf.mxu0
      %v2804 = vadd.f32 %v2764, %v2803
      %v2805 = vpop.f32.mrf.mxu0
      %v2806 = vpop.f32.mrf.mxu0
      %v2807 = vpop.f32.mrf.mxu0
      %2808 = vdwg.mxu0
      %2809 = vmatprep.subr.bf16.mxu0 0
      %2810 = vmatpush1.bf16.msra.mxu0 %v2040
      %2811 = vmatprep.subr.bf16.mxu0 0
      %2812 = vmatpush1.bf16.msra.mxu0 %v2039
      %2813 = vmatprep.subr.bf16.mxu0 0
      %2814 = vmatpush1.bf16.msra.mxu0 %v2038
      %2815 = vmatprep.subr.bf16.mxu0 0
      %2816 = vmatpush1.bf16.msra.mxu0 %v2037
      %2817 = vmatprep.subr.bf16.mxu0 0
      %2818 = vmatpush1.bf16.msra.mxu0 %v2036
      %2819 = vmatprep.subr.bf16.mxu0 0
      %2820 = vmatpush1.bf16.msra.mxu0 %v2035
      %2821 = vmatprep.subr.bf16.mxu0 0
      %2822 = vmatpush1.bf16.msra.mxu0 %v2034
      %2823 = vmatprep.subr.bf16.mxu0 0
      %2824 = vmatpush1.bf16.msra.mxu0 %v2033
      %2825 = vmatprep.subr.bf16.mxu0 0
      %2826 = vmatpush2.bf16.msra.mxu0 %v2048
      %2827 = vmatprep.subr.bf16.mxu0 0
      %2828 = vmatpush2.bf16.msra.mxu0 %v2047
      %2829 = vmatprep.subr.bf16.mxu0 0
      %2830 = vmatpush2.bf16.msra.mxu0 %v2046
      %2831 = vmatprep.subr.bf16.mxu0 0
      %2832 = vmatpush2.bf16.msra.mxu0 %v2045
      %2833 = vmatprep.subr.bf16.mxu0 0
      %2834 = vmatpush2.bf16.msra.mxu0 %v2044
      %2835 = vmatprep.subr.bf16.mxu0 0
      %2836 = vmatpush2.bf16.msra.mxu0 %v2043
      %2837 = vmatprep.subr.bf16.mxu0 0
      %2838 = vmatpush2.bf16.msra.mxu0 %v2042
      %2839 = vmatprep.subr.bf16.mxu0 0
      %2840 = vmatpush2.bf16.msra.mxu0 %v2041
      %2841 = vmatprep.mubr.bf16.mxu0 %v792
      %2842 = vmatmul.mubr.bf16.gmra.mxu0 %v791
      %v2843 = vpop.f32.mrf.mxu0
      %v2844 = vadd.f32 %v2804, %v2843
      %v2845 = vpop.f32.mrf.mxu0
      %v2846 = vpop.f32.mrf.mxu0
      %v2847 = vpop.f32.mrf.mxu0
      %2848 = vdwg.mxu0
      %2849 = vmatprep.subr.bf16.mxu0 0
      %2850 = vmatpush1.bf16.msra.mxu0 %v2056
      %2851 = vmatprep.subr.bf16.mxu0 0
      %2852 = vmatpush1.bf16.msra.mxu0 %v2055
      %2853 = vmatprep.subr.bf16.mxu0 0
      %2854 = vmatpush1.bf16.msra.mxu0 %v2054
      %2855 = vmatprep.subr.bf16.mxu0 0
      %2856 = vmatpush1.bf16.msra.mxu0 %v2053
      %2857 = vmatprep.subr.bf16.mxu0 0
      %2858 = vmatpush1.bf16.msra.mxu0 %v2052
      %2859 = vmatprep.subr.bf16.mxu0 0
      %2860 = vmatpush1.bf16.msra.mxu0 %v2051
      %2861 = vmatprep.subr.bf16.mxu0 0
      %2862 = vmatpush1.bf16.msra.mxu0 %v2050
      %2863 = vmatprep.subr.bf16.mxu0 0
      %2864 = vmatpush1.bf16.msra.mxu0 %v2049
      %2865 = vmatprep.subr.bf16.mxu0 0
      %2866 = vmatpush2.bf16.msra.mxu0 %v2064
      %2867 = vmatprep.subr.bf16.mxu0 0
      %2868 = vmatpush2.bf16.msra.mxu0 %v2063
      %2869 = vmatprep.subr.bf16.mxu0 0
      %2870 = vmatpush2.bf16.msra.mxu0 %v2062
      %2871 = vmatprep.subr.bf16.mxu0 0
      %2872 = vmatpush2.bf16.msra.mxu0 %v2061
      %2873 = vmatprep.subr.bf16.mxu0 0
      %2874 = vmatpush2.bf16.msra.mxu0 %v2060
      %2875 = vmatprep.subr.bf16.mxu0 0
      %2876 = vmatpush2.bf16.msra.mxu0 %v2059
      %2877 = vmatprep.subr.bf16.mxu0 0
      %2878 = vmatpush2.bf16.msra.mxu0 %v2058
      %2879 = vmatprep.subr.bf16.mxu0 0
      %2880 = vmatpush2.bf16.msra.mxu0 %v2057
      %2881 = vmatprep.mubr.bf16.mxu0 %v794
      %2882 = vmatmul.mubr.bf16.gmra.mxu0 %v793
      %v2883 = vpop.f32.mrf.mxu0
      %v2884 = vadd.f32 %v2844, %v2883
      %v2885 = vpop.f32.mrf.mxu0
      %v2886 = vpop.f32.mrf.mxu0
      %v2887 = vpop.f32.mrf.mxu0
      %2888 = vdwg.mxu0
      %2889 = vmatprep.subr.bf16.mxu0 0
      %2890 = vmatpush1.bf16.msra.mxu0 %v2072
      %2891 = vmatprep.subr.bf16.mxu0 0
      %2892 = vmatpush1.bf16.msra.mxu0 %v2071
      %2893 = vmatprep.subr.bf16.mxu0 0
      %2894 = vmatpush1.bf16.msra.mxu0 %v2070
      %2895 = vmatprep.subr.bf16.mxu0 0
      %2896 = vmatpush1.bf16.msra.mxu0 %v2069
      %2897 = vmatprep.subr.bf16.mxu0 0
      %2898 = vmatpush1.bf16.msra.mxu0 %v2068
      %2899 = vmatprep.subr.bf16.mxu0 0
      %2900 = vmatpush1.bf16.msra.mxu0 %v2067
      %2901 = vmatprep.subr.bf16.mxu0 0
      %2902 = vmatpush1.bf16.msra.mxu0 %v2066
      %2903 = vmatprep.subr.bf16.mxu0 0
      %2904 = vmatpush1.bf16.msra.mxu0 %v2065
      %2905 = vmatprep.subr.bf16.mxu0 0
      %2906 = vmatpush2.bf16.msra.mxu0 %v2080
      %2907 = vmatprep.subr.bf16.mxu0 0
      %2908 = vmatpush2.bf16.msra.mxu0 %v2079
      %2909 = vmatprep.subr.bf16.mxu0 0
      %2910 = vmatpush2.bf16.msra.mxu0 %v2078
      %2911 = vmatprep.subr.bf16.mxu0 0
      %2912 = vmatpush2.bf16.msra.mxu0 %v2077
      %2913 = vmatprep.subr.bf16.mxu0 0
      %2914 = vmatpush2.bf16.msra.mxu0 %v2076
      %2915 = vmatprep.subr.bf16.mxu0 0
      %2916 = vmatpush2.bf16.msra.mxu0 %v2075
      %2917 = vmatprep.subr.bf16.mxu0 0
      %2918 = vmatpush2.bf16.msra.mxu0 %v2074
      %2919 = vmatprep.subr.bf16.mxu0 0
      %2920 = vmatpush2.bf16.msra.mxu0 %v2073
      %2921 = vmatprep.mubr.bf16.mxu0 %v796
      %2922 = vmatmul.mubr.bf16.gmra.mxu0 %v795
      %v2923 = vpop.f32.mrf.mxu0
      %v2924 = vadd.f32 %v2884, %v2923
      %v2925 = vpop.f32.mrf.mxu0
      %v2926 = vpop.f32.mrf.mxu0
      %v2927 = vpop.f32.mrf.mxu0
      %2928 = vdwg.mxu0
      %2929 = vmatprep.subr.bf16.mxu0 0
      %2930 = vmatpush1.bf16.msra.mxu0 %v2088
      %2931 = vmatprep.subr.bf16.mxu0 0
      %2932 = vmatpush1.bf16.msra.mxu0 %v2087
      %2933 = vmatprep.subr.bf16.mxu0 0
      %2934 = vmatpush1.bf16.msra.mxu0 %v2086
      %2935 = vmatprep.subr.bf16.mxu0 0
      %2936 = vmatpush1.bf16.msra.mxu0 %v2085
      %2937 = vmatprep.subr.bf16.mxu0 0
      %2938 = vmatpush1.bf16.msra.mxu0 %v2084
      %2939 = vmatprep.subr.bf16.mxu0 0
      %2940 = vmatpush1.bf16.msra.mxu0 %v2083
      %2941 = vmatprep.subr.bf16.mxu0 0
      %2942 = vmatpush1.bf16.msra.mxu0 %v2082
      %2943 = vmatprep.subr.bf16.mxu0 0
      %2944 = vmatpush1.bf16.msra.mxu0 %v2081
      %2945 = vmatprep.subr.bf16.mxu0 0
      %2946 = vmatpush2.bf16.msra.mxu0 %v2096
      %2947 = vmatprep.subr.bf16.mxu0 0
      %2948 = vmatpush2.bf16.msra.mxu0 %v2095
      %2949 = vmatprep.subr.bf16.mxu0 0
      %2950 = vmatpush2.bf16.msra.mxu0 %v2094
      %2951 = vmatprep.subr.bf16.mxu0 0
      %2952 = vmatpush2.bf16.msra.mxu0 %v2093
      %2953 = vmatprep.subr.bf16.mxu0 0
      %2954 = vmatpush2.bf16.msra.mxu0 %v2092
      %2955 = vmatprep.subr.bf16.mxu0 0
      %2956 = vmatpush2.bf16.msra.mxu0 %v2091
      %2957 = vmatprep.subr.bf16.mxu0 0
      %2958 = vmatpush2.bf16.msra.mxu0 %v2090
      %2959 = vmatprep.subr.bf16.mxu0 0
      %2960 = vmatpush2.bf16.msra.mxu0 %v2089
      %2961 = vmatprep.mubr.bf16.mxu0 %v798
      %2962 = vmatmul.mubr.bf16.gmra.mxu0 %v797
      %v2963 = vpop.f32.mrf.mxu0
      %v2964 = vadd.f32 %v2924, %v2963
      %v2965 = vpop.f32.mrf.mxu0
      %v2966 = vpop.f32.mrf.mxu0
      %v2967 = vpop.f32.mrf.mxu0
      %2968 = vdwg.mxu0
      %2969 = vmatprep.subr.bf16.mxu0 0
      %2970 = vmatpush1.bf16.msra.mxu0 %v2104
      %2971 = vmatprep.subr.bf16.mxu0 0
      %2972 = vmatpush1.bf16.msra.mxu0 %v2103
      %2973 = vmatprep.subr.bf16.mxu0 0
      %2974 = vmatpush1.bf16.msra.mxu0 %v2102
      %2975 = vmatprep.subr.bf16.mxu0 0
      %2976 = vmatpush1.bf16.msra.mxu0 %v2101
      %2977 = vmatprep.subr.bf16.mxu0 0
      %2978 = vmatpush1.bf16.msra.mxu0 %v2100
      %2979 = vmatprep.subr.bf16.mxu0 0
      %2980 = vmatpush1.bf16.msra.mxu0 %v2099
      %2981 = vmatprep.subr.bf16.mxu0 0
      %2982 = vmatpush1.bf16.msra.mxu0 %v2098
      %2983 = vmatprep.subr.bf16.mxu0 0
      %2984 = vmatpush1.bf16.msra.mxu0 %v2097
      %2985 = vmatprep.subr.bf16.mxu0 0
      %2986 = vmatpush2.bf16.msra.mxu0 %v2112
      %2987 = vmatprep.subr.bf16.mxu0 0
      %2988 = vmatpush2.bf16.msra.mxu0 %v2111
      %2989 = vmatprep.subr.bf16.mxu0 0
      %2990 = vmatpush2.bf16.msra.mxu0 %v2110
      %2991 = vmatprep.subr.bf16.mxu0 0
      %2992 = vmatpush2.bf16.msra.mxu0 %v2109
      %2993 = vmatprep.subr.bf16.mxu0 0
      %2994 = vmatpush2.bf16.msra.mxu0 %v2108
      %2995 = vmatprep.subr.bf16.mxu0 0
      %2996 = vmatpush2.bf16.msra.mxu0 %v2107
      %2997 = vmatprep.subr.bf16.mxu0 0
      %2998 = vmatpush2.bf16.msra.mxu0 %v2106
      %2999 = vmatprep.subr.bf16.mxu0 0
      %3000 = vmatpush2.bf16.msra.mxu0 %v2105
      %3001 = vmatprep.mubr.bf16.mxu0 %v800
      %3002 = vmatmul.mubr.bf16.gmra.mxu0 %v799
      %v3003 = vpop.f32.mrf.mxu0
      %v3004 = vadd.f32 %v2964, %v3003
      %v3005 = vpop.f32.mrf.mxu0
      %v3006 = vpop.f32.mrf.mxu0
      %v3007 = vpop.f32.mrf.mxu0
      %3008 = vdwg.mxu0
      %vm3009 = vcmask 31744
      %3010 = vst.msk [vmem:[%s168] sm:$0xff] %vm3009, %v3004
      %p3011 = scmp.lt.s32.totalorder %s14, 1
      %s3012 = scalar_select %p3011, %s14, 1
      %s3013 = smul.addr %s3012, 8
      %s3014 = scalar_lea.vmem %s3, %s3013
      // Predicated region
      $region33: #{tpu_custom_call.1} parent=31 // pred_check
        %p3015 = pneg %p100
      $region34: #{tpu_custom_call.1} parent=31 // pred_check_branch
        %3017 = sbr.rel (%p3015) target = $region36
      $region35: #{tpu_custom_call.1} parent=31 // pred_region
        _
      $region36: #{tpu_custom_call.1} parent=31 // pred_fallthru
        _
    $region32: #{tpu_custom_call.1} parent=5 // pred_fallthru
      _
    %p3018 = scmp.le.s32.totalorder 2, %s9
    // Predicated region
    $region37: #{tpu_custom_call.1} parent=5 // pred_check
      %p3019 = pneg %p3018
    $region38: #{tpu_custom_call.1} parent=5 // pred_check_branch
      %3021 = sbr.rel (%p3019) target = $region40
    $region39: #{tpu_custom_call.1} parent=5 // pred_region
      %s3022 = ssub.s32 %s9, 2
      // Predicated region
      $region41: #{tpu_custom_call.1} parent=39 // pred_check
        %p3023 = pneg %p106
      $region42: #{tpu_custom_call.1} parent=39 // pred_check_branch
        %3025 = sbr.rel (%p3023) target = $region44
      $region43: #{tpu_custom_call.1} parent=39 // pred_region
        %p3026 = scmp.lt.s32.totalorder %s15, 1
        %s3027 = scalar_select %p3026, %s15, 1
        %s3028 = smul.addr %s3027, 8
        %s3029 = scalar_lea.vmem %s3, %s3028
      $region44: #{tpu_custom_call.1} parent=39 // pred_fallthru
        _
    $region40: #{tpu_custom_call.1} parent=5 // pred_fallthru
      _
  $region6: #{tpu_custom_call.1} parent=0 // loop_footer
    %s13 = sadd.s32 1, %s9
  $region7: #{tpu_custom_call.1} parent=0 // loop_footer_branch
    %8 = sbr.rel target = $region3
  $region8: #{tpu_custom_call.1} parent=0 // loop_exit
    _

// kernel: tpu_custom_call.1
$region0: #{tpu_custom_call.1}
  #allocation0 [shape = 'u32[]', space=smem, size = 0x4, offset = 0x4, fixed_abs, tag = 'smem constant byte address 0x4 - core index']
  #allocation1 [shape = 'u32[144,128]{1,0:T(1,128)}', space=vmem, size = 0x12000, scoped, tag = 'internal scratch']
  %s0 = inlined_call_operand.vmem [shape: bf16[16,4096], index: 0, kind: input, shape index: {}]
  %s1 = inlined_call_operand.vmem [shape: bf16[4096,4], index: 1, kind: input, shape index: {}]
  %s2 = inlined_call_operand.vmem [shape: f32[1,4], index: 2, kind: input, shape index: {}]
  %s3 = inlined_call_operand.vmem [shape: f32[16,4], index: 3, kind: output, shape index: {}]
  %s4 = sld [smem:[#allocation0]]
  $region45: #{tpu_custom_call.1} parent=0
    _
  %s6 = ssub.s32 1, %s4
  %s7 = scalar_select 0, %s6, %s4
  loop: start=0, step=1, limit=4
  $region2: #{tpu_custom_call.1} parent=0 // loop_pre_header
    _
  $region3: #{tpu_custom_call.1} parent=0 // loop_header
    %s9 = sphi 0, %s13
    %p10 = scmp.ge.s32.totalorder %s9, 4
    %s19 = sphi 0, %s21
    %s22 = sphi 0, %s19
    %s23 = sphi 0, %s22
    %s39 = sphi 0, %s23
    %s43 = sphi 0, %s43
    %s45 = sphi 0, %s43
    %s46 = sphi 0, %s45
    %s60 = sphi 0, %s46
    %s64 = sphi 0, %s64
    %s66 = sphi 0, %s64
    %s67 = sphi 0, %s66
    %s81 = sphi 0, %s67
    %s87 = sphi 0, %s89
    %s90 = sphi 0, %s87
    %s91 = sphi 0, %s90
    %s107 = sphi 0, %s91
  $region4: #{tpu_custom_call.1} parent=0 // loop_header_branch
    %12 = sbr.rel (%p10) target = $region8
  $region5: #{tpu_custom_call.1} parent=0 // loop_body
    %s14 = ssub.s32 %s9, 1
    %s15 = ssub.s32 %s9, 2
    %s16 = sadd.s32 %s9, 1
    %s17 = ssub.s32 %s9, %s16
    %p18 = scmp.eq.s32.totalorder %s17, 0
    %s20 = sadd.s32 %s19, 1
    %s21 = scalar_select %p18, %s19, %s20
    %p24 = pneg %p18
    %p25 = scmp.eq.s32.totalorder %s9, 1
    %p26 = por %p24, %p25
    %p27 = scmp.ne.s32.totalorder %s19, %s22
    %p28 = scmp.eq.s32.totalorder %s9, 0
    %p29 = por %p27, %p28
    %p30 = scmp.ne.s32.totalorder %s19, %s22
    %p31 = scmp.eq.s32.totalorder %s14, 1
    %p32 = por %p30, %p31
    %p33 = scmp.ne.s32.totalorder %s22, %s23
    %p34 = scmp.eq.s32.totalorder %s14, 0
    %p35 = por %p33, %p34
    %p36 = scmp.ne.s32.totalorder %s22, %s23
    %p37 = scmp.eq.s32.totalorder %s15, 1
    %p38 = por %p36, %p37
    %p40 = scmp.ne.s32.totalorder %s23, %s39
    %p41 = scmp.eq.s32.totalorder %s15, 0
    %p42 = por %p40, %p41
    %s44 = sadd.s32 %s43, 1
    %p47 = scmp.eq.s32.totalorder %s9, 1
    %p48 = scmp.ne.s32.totalorder %s43, %s45
    %p49 = scmp.eq.s32.totalorder %s9, 0
    %p50 = por %p48, %p49
    %p51 = scmp.ne.s32.totalorder %s43, %s45
    %p52 = scmp.eq.s32.totalorder %s14, 1
    %p53 = por %p51, %p52
    %p54 = scmp.ne.s32.totalorder %s45, %s46
    %p55 = scmp.eq.s32.totalorder %s14, 0
    %p56 = por %p54, %p55
    %p57 = scmp.ne.s32.totalorder %s45, %s46
    %p58 = scmp.eq.s32.totalorder %s15, 1
    %p59 = por %p57, %p58
    %p61 = scmp.ne.s32.totalorder %s46, %s60
    %p62 = scmp.eq.s32.totalorder %s15, 0
    %p63 = por %p61, %p62
    %s65 = sadd.s32 %s64, 1
    %p68 = scmp.eq.s32.totalorder %s9, 1
    %p69 = scmp.ne.s32.totalorder %s64, %s66
    %p70 = scmp.eq.s32.totalorder %s9, 0
    %p71 = por %p69, %p70
    %p72 = scmp.ne.s32.totalorder %s64, %s66
    %p73 = scmp.eq.s32.totalorder %s14, 1
    %p74 = por %p72, %p73
    %p75 = scmp.ne.s32.totalorder %s66, %s67
    %p76 = scmp.eq.s32.totalorder %s14, 0
    %p77 = por %p75, %p76
    %p78 = scmp.ne.s32.totalorder %s66, %s67
    %p79 = scmp.eq.s32.totalorder %s15, 1
    %p80 = por %p78, %p79
    %p82 = scmp.ne.s32.totalorder %s67, %s81
    %p83 = scmp.eq.s32.totalorder %s15, 0
    %p84 = por %p82, %p83
    %s85 = ssub.s32 %s9, %s16
    %p86 = scmp.eq.s32.totalorder %s85, 0
    %s88 = sadd.s32 %s87, 1
    %s89 = scalar_select %p86, %s87, %s88
    %p92 = pneg %p86
    %p93 = scmp.eq.s32.totalorder %s9, 1
    %p94 = por %p92, %p93
    %p95 = scmp.ne.s32.totalorder %s87, %s90
    %p96 = scmp.eq.s32.totalorder %s9, 0
    %p97 = por %p95, %p96
    %p98 = scmp.ne.s32.totalorder %s87, %s90
    %p99 = scmp.eq.s32.totalorder %s14, 1
    %p100 = por %p98, %p99
    %p101 = scmp.ne.s32.totalorder %s90, %s91
    %p102 = scmp.eq.s32.totalorder %s14, 0
    %p103 = por %p101, %p102
    %p104 = scmp.ne.s32.totalorder %s90, %s91
    %p105 = scmp.eq.s32.totalorder %s15, 1
    %p106 = por %p104, %p105
    %p108 = scmp.ne.s32.totalorder %s91, %s107
    %p109 = scmp.eq.s32.totalorder %s15, 0
    %p110 = por %p108, %p109
    %p111 = scmp.le.s32.totalorder 1, %s9
    %p112 = scmp.lt.s32.totalorder %s9, 3
    %p113 = pnand %p111, %p112
    %p114 = pneg %p113
    // Predicated region
    $region9: #{tpu_custom_call.1} parent=5 // pred_check
      _
    $region10: #{tpu_custom_call.1} parent=5 // pred_check_branch
      %116 = sbr.rel (%p113) target = $region12
    $region11: #{tpu_custom_call.1} parent=5 // pred_region
      %s117 = ssub.s32 %s9, 1
      // Predicated region
      $region13: #{tpu_custom_call.1} parent=11 // pred_check
        %p118 = pneg %p56
      $region14: #{tpu_custom_call.1} parent=11 // pred_check_branch
        %120 = sbr.rel (%p118) target = $region16
      $region15: #{tpu_custom_call.1} parent=11 // pred_region
        _
      $region16: #{tpu_custom_call.1} parent=11 // pred_fallthru
        _
      // Predicated region
      $region17: #{tpu_custom_call.1} parent=11 // pred_check
        %p121 = pneg %p77
      $region18: #{tpu_custom_call.1} parent=11 // pred_check_branch
        %123 = sbr.rel (%p121) target = $region20
      $region19: #{tpu_custom_call.1} parent=11 // pred_region
        _
      $region20: #{tpu_custom_call.1} parent=11 // pred_fallthru
        _
    $region12: #{tpu_custom_call.1} parent=5 // pred_fallthru
      _
    %p124 = scmp.lt.s32.totalorder %s9, 2
    // Predicated region
    $region21: #{tpu_custom_call.1} parent=5 // pred_check
      %p125 = pneg %p124
    $region22: #{tpu_custom_call.1} parent=5 // pred_check_branch
      %127 = sbr.rel (%p125) target = $region24
    $region23: #{tpu_custom_call.1} parent=5 // pred_region
      // Predicated region
      $region25: #{tpu_custom_call.1} parent=23 // pred_check
        %p128 = pneg %p29
      $region26: #{tpu_custom_call.1} parent=23 // pred_check_branch
        %130 = sbr.rel (%p128) target = $region28
      $region27: #{tpu_custom_call.1} parent=23 // pred_region
        %p131 = scmp.lt.s32.totalorder %s9, 1
        %s132 = scalar_select %p131, %s9, 1
        %s133 = smul.addr %s132, 32
        %s134 = smul.addr %s133, 4
        %s135 = scalar_lea.vmem %s0, %s134
      $region28: #{tpu_custom_call.1} parent=23 // pred_fallthru
        _
    $region24: #{tpu_custom_call.1} parent=5 // pred_fallthru
      _
    %p136 = scmp.le.s32.totalorder 1, %s9
    %p137 = scmp.lt.s32.totalorder %s9, 3
    %p138 = pnand %p136, %p137
    %p139 = pneg %p138
    // Predicated region
    $region29: #{tpu_custom_call.1} parent=5 // pred_check
      _
    $region30: #{tpu_custom_call.1} parent=5 // pred_check_branch
      %141 = sbr.rel (%p138) target = $region32
    $region31: #{tpu_custom_call.1} parent=5 // pred_region
      %s142 = ssub.s32 %s9, 1
      %p143 = scmp.lt.s32.totalorder %s14, 1
      %s144 = scalar_select %p143, %s14, 1
      %s145 = smul.addr %s144, 32
      %s146 = smul.addr %s145, 4
      %s147 = scalar_lea.vmem %s0, %s146
      %p148 = pneg %p35
      %p149 = pneg %p32
      %p150 = pneg %p56
      %p151 = pneg %p53
      %p152 = pneg %p77
      %p153 = pneg %p74
      %p154 = pneg %p103
      %p155 = pneg %p100
      %p156 = scmp.lt.s32.totalorder %s14, 1
      %s157 = scalar_select %p156, %s14, 1
      %s158 = smul.addr %s157, 8
      %s159 = scalar_lea.vmem %s3, %s158
      %p160 = scmp.lt.s32.totalorder %s14, 1
      %s161 = scalar_select %p160, %s14, 1
      %s162 = smul.addr %s161, 32
      %s163 = smul.addr %s162, 4
      %s164 = scalar_lea.vmem %s0, %s163
      %p165 = scmp.lt.s32.totalorder %s14, 1
      %s166 = scalar_select %p165, %s14, 1
      %s167 = smul.addr %s166, 8
      %s168 = scalar_lea.vmem %s3, %s167
      %v170 = vld [vmem:[%s164] sm:$0xff]
      %v171 = vld [vmem:[%s164 + $0x8] sm:$0xff]
      %v172 = vld [vmem:[%s164 + $0x10] sm:$0xff]
      %v173 = vld [vmem:[%s164 + $0x18] sm:$0xff]
      %v174 = vld [vmem:[%s164 + $0x20] sm:$0xff]
      %v175 = vld [vmem:[%s164 + $0x28] sm:$0xff]
      %v176 = vld [vmem:[%s164 + $0x30] sm:$0xff]
      %v177 = vld [vmem:[%s164 + $0x38] sm:$0xff]
      %v178 = vld [vmem:[%s164 + $0x40] sm:$0xff]
      %v179 = vld [vmem:[%s164 + $0x48] sm:$0xff]
      %v180 = vld [vmem:[%s164 + $0x50] sm:$0xff]
      %v181 = vld [vmem:[%s164 + $0x58] sm:$0xff]
      %v182 = vld [vmem:[%s164 + $0x60] sm:$0xff]
      %v183 = vld [vmem:[%s164 + $0x68] sm:$0xff]
      %v184 = vld [vmem:[%s164 + $0x70] sm:$0xff]
      %v185 = vld [vmem:[%s164 + $0x78] sm:$0xff]
      %v186 = vmax.bf16 %v170, 0
      %v187 = vmax.bf16 %v171, 0
      %v188 = vmax.bf16 %v172, 0
      %v189 = vmax.bf16 %v173, 0
      %v190 = vmax.bf16 %v174, 0
      %v191 = vmax.bf16 %v175, 0
      %v192 = vmax.bf16 %v176, 0
      %v193 = vmax.bf16 %v177, 0
      %v194 = vmax.bf16 %v178, 0
      %v195 = vmax.bf16 %v179, 0
      %v196 = vmax.bf16 %v180, 0
      %v197 = vmax.bf16 %v181, 0
      %v198 = vmax.bf16 %v182, 0
      %v199 = vmax.bf16 %v183, 0
      %v200 = vmax.bf16 %v184, 0
      %v201 = vmax.bf16 %v185, 0
      %v202 = vld [vmem:[%s1] sm:$0xf]
      %v203 = vld [vmem:[%s1 + $0x4] sm:$0xf]
      %v204 = vld [vmem:[%s1 + $0x8] sm:$0xf]
      %v205 = vld [vmem:[%s1 + $0xc] sm:$0xf]
      %v206 = vld [vmem:[%s1 + $0x10] sm:$0xf]
      %v207 = vld [vmem:[%s1 + $0x14] sm:$0xf]
      %v208 = vld [vmem:[%s1 + $0x18] sm:$0xf]
      %v209 = vld [vmem:[%s1 + $0x1c] sm:$0xf]
      %v210 = vld [vmem:[%s1 + $0x20] sm:$0xf]
      %v211 = vld [vmem:[%s1 + $0x24] sm:$0xf]
      %v212 = vld [vmem:[%s1 + $0x28] sm:$0xf]
      %v213 = vld [vmem:[%s1 + $0x2c] sm:$0xf]
      %v214 = vld [vmem:[%s1 + $0x30] sm:$0xf]
      %v215 = vld [vmem:[%s1 + $0x34] sm:$0xf]
      %v216 = vld [vmem:[%s1 + $0x38] sm:$0xf]
      %v217 = vld [vmem:[%s1 + $0x3c] sm:$0xf]
      %v218 = vld [vmem:[%s1 + $0x40] sm:$0xf]
      %v219 = vld [vmem:[%s1 + $0x44] sm:$0xf]
      %v220 = vld [vmem:[%s1 + $0x48] sm:$0xf]
      %v221 = vld [vmem:[%s1 + $0x4c] sm:$0xf]
      %v222 = vld [vmem:[%s1 + $0x50] sm:$0xf]
      %v223 = vld [vmem:[%s1 + $0x54] sm:$0xf]
      %v224 = vld [vmem:[%s1 + $0x58] sm:$0xf]
      %v225 = vld [vmem:[%s1 + $0x5c] sm:$0xf]
      %v226 = vld [vmem:[%s1 + $0x60] sm:$0xf]
      %v227 = vld [vmem:[%s1 + $0x64] sm:$0xf]
      %v228 = vld [vmem:[%s1 + $0x68] sm:$0xf]
      %v229 = vld [vmem:[%s1 + $0x6c] sm:$0xf]
      %v230 = vld [vmem:[%s1 + $0x70] sm:$0xf]
      %v231 = vld [vmem:[%s1 + $0x74] sm:$0xf]
      %v232 = vld [vmem:[%s1 + $0x78] sm:$0xf]
      %v233 = vld [vmem:[%s1 + $0x7c] sm:$0xf]
      %v234 = vld [vmem:[%s1 + $0x80] sm:$0xf]
      %v235 = vld [vmem:[%s1 + $0x84] sm:$0xf]
      %v236 = vld [vmem:[%s1 + $0x88] sm:$0xf]
      %v237 = vld [vmem:[%s1 + $0x8c] sm:$0xf]
      %v238 = vld [vmem:[%s1 + $0x90] sm:$0xf]
      %v239 = vld [vmem:[%s1 + $0x94] sm:$0xf]
      %v240 = vld [vmem:[%s1 + $0x98] sm:$0xf]
      %v241 = vld [vmem:[%s1 + $0x9c] sm:$0xf]
      %v242 = vld [vmem:[%s1 + $0xa0] sm:$0xf]
      %v243 = vld [vmem:[%s1 + $0xa4] sm:$0xf]
      %v244 = vld [vmem:[%s1 + $0xa8] sm:$0xf]
      %v245 = vld [vmem:[%s1 + $0xac] sm:$0xf]
      %v246 = vld [vmem:[%s1 + $0xb0] sm:$0xf]
      %v247 = vld [vmem:[%s1 + $0xb4] sm:$0xf]
      %v248 = vld [vmem:[%s1 + $0xb8] sm:$0xf]
      %v249 = vld [vmem:[%s1 + $0xbc] sm:$0xf]
      %v250 = vld [vmem:[%s1 + $0xc0] sm:$0xf]
      %v251 = vld [vmem:[%s1 + $0xc4] sm:$0xf]
      %v252 = vld [vmem:[%s1 + $0xc8] sm:$0xf]
      %v253 = vld [vmem:[%s1 + $0xcc] sm:$0xf]
      %v254 = vld [vmem:[%s1 + $0xd0] sm:$0xf]
      %v255 = vld [vmem:[%s1 + $0xd4] sm:$0xf]
      %v256 = vld [vmem:[%s1 + $0xd8] sm:$0xf]
      %v257 = vld [vmem:[%s1 + $0xdc] sm:$0xf]
      %v258 = vld [vmem:[%s1 + $0xe0] sm:$0xf]
      %v259 = vld [vmem:[%s1 + $0xe4] sm:$0xf]
      %v260 = vld [vmem:[%s1 + $0xe8] sm:$0xf]
      %v261 = vld [vmem:[%s1 + $0xec] sm:$0xf]
      %v262 = vld [vmem:[%s1 + $0xf0] sm:$0xf]
      %v263 = vld [vmem:[%s1 + $0xf4] sm:$0xf]
      %v264 = vld [vmem:[%s1 + $0xf8] sm:$0xf]
      %v265 = vld [vmem:[%s1 + $0xfc] sm:$0xf]
      %v266 = vld [vmem:[%s1 + $0x100] sm:$0xf]
      %v267 = vld [vmem:[%s1 + $0x104] sm:$0xf]
      %v268 = vld [vmem:[%s1 + $0x108] sm:$0xf]
      %v269 = vld [vmem:[%s1 + $0x10c] sm:$0xf]
      %v270 = vld [vmem:[%s1 + $0x110] sm:$0xf]
      %v271 = vld [vmem:[%s1 + $0x114] sm:$0xf]
      %v272 = vld [vmem:[%s1 + $0x118] sm:$0xf]
      %v273 = vld [vmem:[%s1 + $0x11c] sm:$0xf]
      %v274 = vld [vmem:[%s1 + $0x120] sm:$0xf]
      %v275 = vld [vmem:[%s1 + $0x124] sm:$0xf]
      %v276 = vld [vmem:[%s1 + $0x128] sm:$0xf]
      %v277 = vld [vmem:[%s1 + $0x12c] sm:$0xf]
      %v278 = vld [vmem:[%s1 + $0x130] sm:$0xf]
      %v279 = vld [vmem:[%s1 + $0x134] sm:$0xf]
      %v280 = vld [vmem:[%s1 + $0x138] sm:$0xf]
      %v281 = vld [vmem:[%s1 + $0x13c] sm:$0xf]
      %v282 = vld [vmem:[%s1 + $0x140] sm:$0xf]
      %v283 = vld [vmem:[%s1 + $0x144] sm:$0xf]
      %v284 = vld [vmem:[%s1 + $0x148] sm:$0xf]
      %v285 = vld [vmem:[%s1 + $0x14c] sm:$0xf]
      %v286 = vld [vmem:[%s1 + $0x150] sm:$0xf]
      %v287 = vld [vmem:[%s1 + $0x154] sm:$0xf]
      %v288 = vld [vmem:[%s1 + $0x158] sm:$0xf]
      %v289 = vld [vmem:[%s1 + $0x15c] sm:$0xf]
      %v290 = vld [vmem:[%s1 + $0x160] sm:$0xf]
      %v291 = vld [vmem:[%s1 + $0x164] sm:$0xf]
      %v292 = vld [vmem:[%s1 + $0x168] sm:$0xf]
      %v293 = vld [vmem:[%s1 + $0x16c] sm:$0xf]
      %v294 = vld [vmem:[%s1 + $0x170] sm:$0xf]
      %v295 = vld [vmem:[%s1 + $0x174] sm:$0xf]
      %v296 = vld [vmem:[%s1 + $0x178] sm:$0xf]
      %v297 = vld [vmem:[%s1 + $0x17c] sm:$0xf]
      %v298 = vld [vmem:[%s1 + $0x180] sm:$0xf]
      %v299 = vld [vmem:[%s1 + $0x184] sm:$0xf]
      %v300 = vld [vmem:[%s1 + $0x188] sm:$0xf]
      %v301 = vld [vmem:[%s1 + $0x18c] sm:$0xf]
      %v302 = vld [vmem:[%s1 + $0x190] sm:$0xf]
      %v303 = vld [vmem:[%s1 + $0x194] sm:$0xf]
      %v304 = vld [vmem:[%s1 + $0x198] sm:$0xf]
      %v305 = vld [vmem:[%s1 + $0x19c] sm:$0xf]
      %v306 = vld [vmem:[%s1 + $0x1a0] sm:$0xf]
      %v307 = vld [vmem:[%s1 + $0x1a4] sm:$0xf]
      %v308 = vld [vmem:[%s1 + $0x1a8] sm:$0xf]
      %v309 = vld [vmem:[%s1 + $0x1ac] sm:$0xf]
      %v310 = vld [vmem:[%s1 + $0x1b0] sm:$0xf]
      %v311 = vld [vmem:[%s1 + $0x1b4] sm:$0xf]
      %v312 = vld [vmem:[%s1 + $0x1b8] sm:$0xf]
      %v313 = vld [vmem:[%s1 + $0x1bc] sm:$0xf]
      %v314 = vld [vmem:[%s1 + $0x1c0] sm:$0xf]
      %v315 = vld [vmem:[%s1 + $0x1c4] sm:$0xf]
      %v316 = vld [vmem:[%s1 + $0x1c8] sm:$0xf]
      %v317 = vld [vmem:[%s1 + $0x1cc] sm:$0xf]
      %v318 = vld [vmem:[%s1 + $0x1d0] sm:$0xf]
      %v319 = vld [vmem:[%s1 + $0x1d4] sm:$0xf]
      %v320 = vld [vmem:[%s1 + $0x1d8] sm:$0xf]
      %v321 = vld [vmem:[%s1 + $0x1dc] sm:$0xf]
      %v322 = vld [vmem:[%s1 + $0x1e0] sm:$0xf]
      %v323 = vld [vmem:[%s1 + $0x1e4] sm:$0xf]
      %v324 = vld [vmem:[%s1 + $0x1e8] sm:$0xf]
      %v325 = vld [vmem:[%s1 + $0x1ec] sm:$0xf]
      %v326 = vld [vmem:[%s1 + $0x1f0] sm:$0xf]
      %v327 = vld [vmem:[%s1 + $0x1f4] sm:$0xf]
      %v328 = vld [vmem:[%s1 + $0x1f8] sm:$0xf]
      %v329 = vld [vmem:[%s1 + $0x1fc] sm:$0xf]
      %v330 = vld [vmem:[%s1 + $0x200] sm:$0xf]
      %v331 = vld [vmem:[%s1 + $0x204] sm:$0xf]
      %v332 = vld [vmem:[%s1 + $0x208] sm:$0xf]
      %v333 = vld [vmem:[%s1 + $0x20c] sm:$0xf]
      %v334 = vld [vmem:[%s1 + $0x210] sm:$0xf]
      %v335 = vld [vmem:[%s1 + $0x214] sm:$0xf]
      %v336 = vld [vmem:[%s1 + $0x218] sm:$0xf]
      %v337 = vld [vmem:[%s1 + $0x21c] sm:$0xf]
      %v338 = vld [vmem:[%s1 + $0x220] sm:$0xf]
      %v339 = vld [vmem:[%s1 + $0x224] sm:$0xf]
      %v340 = vld [vmem:[%s1 + $0x228] sm:$0xf]
      %v341 = vld [vmem:[%s1 + $0x22c] sm:$0xf]
      %v342 = vld [vmem:[%s1 + $0x230] sm:$0xf]
      %v343 = vld [vmem:[%s1 + $0x234] sm:$0xf]
      %v344 = vld [vmem:[%s1 + $0x238] sm:$0xf]
      %v345 = vld [vmem:[%s1 + $0x23c] sm:$0xf]
      %v346 = vld [vmem:[%s1 + $0x240] sm:$0xf]
      %v347 = vld [vmem:[%s1 + $0x244] sm:$0xf]
      %v348 = vld [vmem:[%s1 + $0x248] sm:$0xf]
      %v349 = vld [vmem:[%s1 + $0x24c] sm:$0xf]
      %v350 = vld [vmem:[%s1 + $0x250] sm:$0xf]
      %v351 = vld [vmem:[%s1 + $0x254] sm:$0xf]
      %v352 = vld [vmem:[%s1 + $0x258] sm:$0xf]
      %v353 = vld [vmem:[%s1 + $0x25c] sm:$0xf]
      %v354 = vld [vmem:[%s1 + $0x260] sm:$0xf]
      %v355 = vld [vmem:[%s1 + $0x264] sm:$0xf]
      %v356 = vld [vmem:[%s1 + $0x268] sm:$0xf]
      %v357 = vld [vmem:[%s1 + $0x26c] sm:$0xf]
      %v358 = vld [vmem:[%s1 + $0x270] sm:$0xf]
      %v359 = vld [vmem:[%s1 + $0x274] sm:$0xf]
      %v360 = vld [vmem:[%s1 + $0x278] sm:$0xf]
      %v361 = vld [vmem:[%s1 + $0x27c] sm:$0xf]
      %v362 = vld [vmem:[%s1 + $0x280] sm:$0xf]
      %v363 = vld [vmem:[%s1 + $0x284] sm:$0xf]
      %v364 = vld [vmem:[%s1 + $0x288] sm:$0xf]
      %v365 = vld [vmem:[%s1 + $0x28c] sm:$0xf]
      %v366 = vld [vmem:[%s1 + $0x290] sm:$0xf]
      %v367 = vld [vmem:[%s1 + $0x294] sm:$0xf]
      %v368 = vld [vmem:[%s1 + $0x298] sm:$0xf]
      %v369 = vld [vmem:[%s1 + $0x29c] sm:$0xf]
      %v370 = vld [vmem:[%s1 + $0x2a0] sm:$0xf]
      %v371 = vld [vmem:[%s1 + $0x2a4] sm:$0xf]
      %v372 = vld [vmem:[%s1 + $0x2a8] sm:$0xf]
      %v373 = vld [vmem:[%s1 + $0x2ac] sm:$0xf]
      %v374 = vld [vmem:[%s1 + $0x2b0] sm:$0xf]
      %v375 = vld [vmem:[%s1 + $0x2b4] sm:$0xf]
      %v376 = vld [vmem:[%s1 + $0x2b8] sm:$0xf]
      %v377 = vld [vmem:[%s1 + $0x2bc] sm:$0xf]
      %v378 = vld [vmem:[%s1 + $0x2c0] sm:$0xf]
      %v379 = vld [vmem:[%s1 + $0x2c4] sm:$0xf]
      %v380 = vld [vmem:[%s1 + $0x2c8] sm:$0xf]
      %v381 = vld [vmem:[%s1 + $0x2cc] sm:$0xf]
      %v382 = vld [vmem:[%s1 + $0x2d0] sm:$0xf]
      %v383 = vld [vmem:[%s1 + $0x2d4] sm:$0xf]
      %v384 = vld [vmem:[%s1 + $0x2d8] sm:$0xf]
      %v385 = vld [vmem:[%s1 + $0x2dc] sm:$0xf]
      %v386 = vld [vmem:[%s1 + $0x2e0] sm:$0xf]
      %v387 = vld [vmem:[%s1 + $0x2e4] sm:$0xf]
      %v388 = vld [vmem:[%s1 + $0x2e8] sm:$0xf]
      %v389 = vld [vmem:[%s1 + $0x2ec] sm:$0xf]
      %v390 = vld [vmem:[%s1 + $0x2f0] sm:$0xf]
      %v391 = vld [vmem:[%s1 + $0x2f4] sm:$0xf]
      %v392 = vld [vmem:[%s1 + $0x2f8] sm:$0xf]
      %v393 = vld [vmem:[%s1 + $0x2fc] sm:$0xf]
      %v394 = vld [vmem:[%s1 + $0x300] sm:$0xf]
      %v395 = vld [vmem:[%s1 + $0x304] sm:$0xf]
      %v396 = vld [vmem:[%s1 + $0x308] sm:$0xf]
      %v397 = vld [vmem:[%s1 + $0x30c] sm:$0xf]
      %v398 = vld [vmem:[%s1 + $0x310] sm:$0xf]
      %v399 = vld [vmem:[%s1 + $0x314] sm:$0xf]
      %v400 = vld [vmem:[%s1 + $0x318] sm:$0xf]
      %v401 = vld [vmem:[%s1 + $0x31c] sm:$0xf]
      %v402 = vld [vmem:[%s1 + $0x320] sm:$0xf]
      %v403 = vld [vmem:[%s1 + $0x324] sm:$0xf]
      %v404 = vld [vmem:[%s1 + $0x328] sm:$0xf]
      %v405 = vld [vmem:[%s1 + $0x32c] sm:$0xf]
      %v406 = vld [vmem:[%s1 + $0x330] sm:$0xf]
      %v407 = vld [vmem:[%s1 + $0x334] sm:$0xf]
      %v408 = vld [vmem:[%s1 + $0x338] sm:$0xf]
      %v409 = vld [vmem:[%s1 + $0x33c] sm:$0xf]
      %v410 = vld [vmem:[%s1 + $0x340] sm:$0xf]
      %v411 = vld [vmem:[%s1 + $0x344] sm:$0xf]
      %v412 = vld [vmem:[%s1 + $0x348] sm:$0xf]
      %v413 = vld [vmem:[%s1 + $0x34c] sm:$0xf]
      %v414 = vld [vmem:[%s1 + $0x350] sm:$0xf]
      %v415 = vld [vmem:[%s1 + $0x354] sm:$0xf]
      %v416 = vld [vmem:[%s1 + $0x358] sm:$0xf]
      %v417 = vld [vmem:[%s1 + $0x35c] sm:$0xf]
      %v418 = vld [vmem:[%s1 + $0x360] sm:$0xf]
      %v419 = vld [vmem:[%s1 + $0x364] sm:$0xf]
      %v420 = vld [vmem:[%s1 + $0x368] sm:$0xf]
      %v421 = vld [vmem:[%s1 + $0x36c] sm:$0xf]
      %v422 = vld [vmem:[%s1 + $0x370] sm:$0xf]
      %v423 = vld [vmem:[%s1 + $0x374] sm:$0xf]
      %v424 = vld [vmem:[%s1 + $0x378] sm:$0xf]
      %v425 = vld [vmem:[%s1 + $0x37c] sm:$0xf]
      %v426 = vld [vmem:[%s1 + $0x380] sm:$0xf]
      %v427 = vld [vmem:[%s1 + $0x384] sm:$0xf]
      %v428 = vld [vmem:[%s1 + $0x388] sm:$0xf]
      %v429 = vld [vmem:[%s1 + $0x38c] sm:$0xf]
      %v430 = vld [vmem:[%s1 + $0x390] sm:$0xf]
      %v431 = vld [vmem:[%s1 + $0x394] sm:$0xf]
      %v432 = vld [vmem:[%s1 + $0x398] sm:$0xf]
      %v433 = vld [vmem:[%s1 + $0x39c] sm:$0xf]
      %v434 = vld [vmem:[%s1 + $0x3a0] sm:$0xf]
      %v435 = vld [vmem:[%s1 + $0x3a4] sm:$0xf]
      %v436 = vld [vmem:[%s1 + $0x3a8] sm:$0xf]
      %v437 = vld [vmem:[%s1 + $0x3ac] sm:$0xf]
      %v438 = vld [vmem:[%s1 + $0x3b0] sm:$0xf]
      %v439 = vld [vmem:[%s1 + $0x3b4] sm:$0xf]
      %v440 = vld [vmem:[%s1 + $0x3b8] sm:$0xf]
      %v441 = vld [vmem:[%s1 + $0x3bc] sm:$0xf]
      %v442 = vld [vmem:[%s1 + $0x3c0] sm:$0xf]
      %v443 = vld [vmem:[%s1 + $0x3c4] sm:$0xf]
      %v444 = vld [vmem:[%s1 + $0x3c8] sm:$0xf]
      %v445 = vld [vmem:[%s1 + $0x3cc] sm:$0xf]
      %v446 = vld [vmem:[%s1 + $0x3d0] sm:$0xf]
      %v447 = vld [vmem:[%s1 + $0x3d4] sm:$0xf]
      %v448 = vld [vmem:[%s1 + $0x3d8] sm:$0xf]
      %v449 = vld [vmem:[%s1 + $0x3dc] sm:$0xf]
      %v450 = vld [vmem:[%s1 + $0x3e0] sm:$0xf]
      %v451 = vld [vmem:[%s1 + $0x3e4] sm:$0xf]
      %v452 = vld [vmem:[%s1 + $0x3e8] sm:$0xf]
      %v453 = vld [vmem:[%s1 + $0x3ec] sm:$0xf]
      %v454 = vld [vmem:[%s1 + $0x3f0] sm:$0xf]
      %v455 = vld [vmem:[%s1 + $0x3f4] sm:$0xf]
      %v456 = vld [vmem:[%s1 + $0x3f8] sm:$0xf]
      %v457 = vld [vmem:[%s1 + $0x3fc] sm:$0xf]
      %v458 = vld [vmem:[%s1 + $0x400] sm:$0xf]
      %v459 = vld [vmem:[%s1 + $0x404] sm:$0xf]
      %v460 = vld [vmem:[%s1 + $0x408] sm:$0xf]
      %v461 = vld [vmem:[%s1 + $0x40c] sm:$0xf]
      %v462 = vld [vmem:[%s1 + $0x410] sm:$0xf]
      %v463 = vld [vmem:[%s1 + $0x414] sm:$0xf]
      %v464 = vld [vmem:[%s1 + $0x418] sm:$0xf]
      %v465 = vld [vmem:[%s1 + $0x41c] sm:$0xf]
      %v466 = vld [vmem:[%s1 + $0x420] sm:$0xf]
      %v467 = vld [vmem:[%s1 + $0x424] sm:$0xf]
      %v468 = vld [vmem:[%s1 + $0x428] sm:$0xf]
      %v469 = vld [vmem:[%s1 + $0x42c] sm:$0xf]
      %v470 = vld [vmem:[%s1 + $0x430] sm:$0xf]
      %v471 = vld [vmem:[%s1 + $0x434] sm:$0xf]
      %v472 = vld [vmem:[%s1 + $0x438] sm:$0xf]
      %v473 = vld [vmem:[%s1 + $0x43c] sm:$0xf]
      %v474 = vld [vmem:[%s1 + $0x440] sm:$0xf]
      %v475 = vld [vmem:[%s1 + $0x444] sm:$0xf]
      %v476 = vld [vmem:[%s1 + $0x448] sm:$0xf]
      %v477 = vld [vmem:[%s1 + $0x44c] sm:$0xf]
      %v478 = vld [vmem:[%s1 + $0x450] sm:$0xf]
      %v479 = vld [vmem:[%s1 + $0x454] sm:$0xf]
      %v480 = vld [vmem:[%s1 + $0x458] sm:$0xf]
      %v481 = vld [vmem:[%s1 + $0x45c] sm:$0xf]
      %v482 = vld [vmem:[%s1 + $0x460] sm:$0xf]
      %v483 = vld [vmem:[%s1 + $0x464] sm:$0xf]
      %v484 = vld [vmem:[%s1 + $0x468] sm:$0xf]
      %v485 = vld [vmem:[%s1 + $0x46c] sm:$0xf]
      %v486 = vld [vmem:[%s1 + $0x470] sm:$0xf]
      %v487 = vld [vmem:[%s1 + $0x474] sm:$0xf]
      %v488 = vld [vmem:[%s1 + $0x478] sm:$0xf]
      %v489 = vld [vmem:[%s1 + $0x47c] sm:$0xf]
      %v490 = vld [vmem:[%s1 + $0x480] sm:$0xf]
      %v491 = vld [vmem:[%s1 + $0x484] sm:$0xf]
      %v492 = vld [vmem:[%s1 + $0x488] sm:$0xf]
      %v493 = vld [vmem:[%s1 + $0x48c] sm:$0xf]
      %v494 = vld [vmem:[%s1 + $0x490] sm:$0xf]
      %v495 = vld [vmem:[%s1 + $0x494] sm:$0xf]
      %v496 = vld [vmem:[%s1 + $0x498] sm:$0xf]
      %v497 = vld [vmem:[%s1 + $0x49c] sm:$0xf]
      %v498 = vld [vmem:[%s1 + $0x4a0] sm:$0xf]
      %v499 = vld [vmem:[%s1 + $0x4a4] sm:$0xf]
      %v500 = vld [vmem:[%s1 + $0x4a8] sm:$0xf]
      %v501 = vld [vmem:[%s1 + $0x4ac] sm:$0xf]
      %v502 = vld [vmem:[%s1 + $0x4b0] sm:$0xf]
      %v503 = vld [vmem:[%s1 + $0x4b4] sm:$0xf]
      %v504 = vld [vmem:[%s1 + $0x4b8] sm:$0xf]
      %v505 = vld [vmem:[%s1 + $0x4bc] sm:$0xf]
      %v506 = vld [vmem:[%s1 + $0x4c0] sm:$0xf]
      %v507 = vld [vmem:[%s1 + $0x4c4] sm:$0xf]
      %v508 = vld [vmem:[%s1 + $0x4c8] sm:$0xf]
      %v509 = vld [vmem:[%s1 + $0x4cc] sm:$0xf]
      %v510 = vld [vmem:[%s1 + $0x4d0] sm:$0xf]
      %v511 = vld [vmem:[%s1 + $0x4d4] sm:$0xf]
      %v512 = vld [vmem:[%s1 + $0x4d8] sm:$0xf]
      %v513 = vld [vmem:[%s1 + $0x4dc] sm:$0xf]
      %v514 = vld [vmem:[%s1 + $0x4e0] sm:$0xf]
      %v515 = vld [vmem:[%s1 + $0x4e4] sm:$0xf]
      %v516 = vld [vmem:[%s1 + $0x4e8] sm:$0xf]
      %v517 = vld [vmem:[%s1 + $0x4ec] sm:$0xf]
      %v518 = vld [vmem:[%s1 + $0x4f0] sm:$0xf]
      %v519 = vld [vmem:[%s1 + $0x4f4] sm:$0xf]
      %v520 = vld [vmem:[%s1 + $0x4f8] sm:$0xf]
      %v521 = vld [vmem:[%s1 + $0x4fc] sm:$0xf]
      %v522 = vld [vmem:[%s1 + $0x500] sm:$0xf]
      %v523 = vld [vmem:[%s1 + $0x504] sm:$0xf]
      %v524 = vld [vmem:[%s1 + $0x508] sm:$0xf]
      %v525 = vld [vmem:[%s1 + $0x50c] sm:$0xf]
      %v526 = vld [vmem:[%s1 + $0x510] sm:$0xf]
      %v527 = vld [vmem:[%s1 + $0x514] sm:$0xf]
      %v528 = vld [vmem:[%s1 + $0x518] sm:$0xf]
      %v529 = vld [vmem:[%s1 + $0x51c] sm:$0xf]
      %v530 = vld [vmem:[%s1 + $0x520] sm:$0xf]
      %v531 = vld [vmem:[%s1 + $0x524] sm:$0xf]
      %v532 = vld [vmem:[%s1 + $0x528] sm:$0xf]
      %v533 = vld [vmem:[%s1 + $0x52c] sm:$0xf]
      %v534 = vld [vmem:[%s1 + $0x530] sm:$0xf]
      %v535 = vld [vmem:[%s1 + $0x534] sm:$0xf]
      %v536 = vld [vmem:[%s1 + $0x538] sm:$0xf]
      %v537 = vld [vmem:[%s1 + $0x53c] sm:$0xf]
      %v538 = vld [vmem:[%s1 + $0x540] sm:$0xf]
      %v539 = vld [vmem:[%s1 + $0x544] sm:$0xf]
      %v540 = vld [vmem:[%s1 + $0x548] sm:$0xf]
      %v541 = vld [vmem:[%s1 + $0x54c] sm:$0xf]
      %v542 = vld [vmem:[%s1 + $0x550] sm:$0xf]
      %v543 = vld [vmem:[%s1 + $0x554] sm:$0xf]
      %v544 = vld [vmem:[%s1 + $0x558] sm:$0xf]
      %v545 = vld [vmem:[%s1 + $0x55c] sm:$0xf]
      %v546 = vld [vmem:[%s1 + $0x560] sm:$0xf]
      %v547 = vld [vmem:[%s1 + $0x564] sm:$0xf]
      %v548 = vld [vmem:[%s1 + $0x568] sm:$0xf]
      %v549 = vld [vmem:[%s1 + $0x56c] sm:$0xf]
      %v550 = vld [vmem:[%s1 + $0x570] sm:$0xf]
      %v551 = vld [vmem:[%s1 + $0x574] sm:$0xf]
      %v552 = vld [vmem:[%s1 + $0x578] sm:$0xf]
      %v553 = vld [vmem:[%s1 + $0x57c] sm:$0xf]
      %v554 = vld [vmem:[%s1 + $0x580] sm:$0xf]
      %v555 = vld [vmem:[%s1 + $0x584] sm:$0xf]
      %v556 = vld [vmem:[%s1 + $0x588] sm:$0xf]
      %v557 = vld [vmem:[%s1 + $0x58c] sm:$0xf]
      %v558 = vld [vmem:[%s1 + $0x590] sm:$0xf]
      %v559 = vld [vmem:[%s1 + $0x594] sm:$0xf]
      %v560 = vld [vmem:[%s1 + $0x598] sm:$0xf]
      %v561 = vld [vmem:[%s1 + $0x59c] sm:$0xf]
      %v562 = vld [vmem:[%s1 + $0x5a0] sm:$0xf]
      %v563 = vld [vmem:[%s1 + $0x5a4] sm:$0xf]
      %v564 = vld [vmem:[%s1 + $0x5a8] sm:$0xf]
      %v565 = vld [vmem:[%s1 + $0x5ac] sm:$0xf]
      %v566 = vld [vmem:[%s1 + $0x5b0] sm:$0xf]
      %v567 = vld [vmem:[%s1 + $0x5b4] sm:$0xf]
      %v568 = vld [vmem:[%s1 + $0x5b8] sm:$0xf]
      %v569 = vld [vmem:[%s1 + $0x5bc] sm:$0xf]
      %v570 = vld [vmem:[%s1 + $0x5c0] sm:$0xf]
      %v571 = vld [vmem:[%s1 + $0x5c4] sm:$0xf]
      %v572 = vld [vmem:[%s1 + $0x5c8] sm:$0xf]
      %v573 = vld [vmem:[%s1 + $0x5cc] sm:$0xf]
      %v574 = vld [vmem:[%s1 + $0x5d0] sm:$0xf]
      %v575 = vld [vmem:[%s1 + $0x5d4] sm:$0xf]
      %v576 = vld [vmem:[%s1 + $0x5d8] sm:$0xf]
      %v577 = vld [vmem:[%s1 + $0x5dc] sm:$0xf]
      %v578 = vld [vmem:[%s1 + $0x5e0] sm:$0xf]
      %v579 = vld [vmem:[%s1 + $0x5e4] sm:$0xf]
      %v580 = vld [vmem:[%s1 + $0x5e8] sm:$0xf]
      %v581 = vld [vmem:[%s1 + $0x5ec] sm:$0xf]
      %v582 = vld [vmem:[%s1 + $0x5f0] sm:$0xf]
      %v583 = vld [vmem:[%s1 + $0x5f4] sm:$0xf]
      %v584 = vld [vmem:[%s1 + $0x5f8] sm:$0xf]
      %v585 = vld [vmem:[%s1 + $0x5fc] sm:$0xf]
      %v586 = vld [vmem:[%s1 + $0x600] sm:$0xf]
      %v587 = vld [vmem:[%s1 + $0x604] sm:$0xf]
      %v588 = vld [vmem:[%s1 + $0x608] sm:$0xf]
      %v589 = vld [vmem:[%s1 + $0x60c] sm:$0xf]
      %v590 = vld [vmem:[%s1 + $0x610] sm:$0xf]
      %v591 = vld [vmem:[%s1 + $0x614] sm:$0xf]
      %v592 = vld [vmem:[%s1 + $0x618] sm:$0xf]
      %v593 = vld [vmem:[%s1 + $0x61c] sm:$0xf]
      %v594 = vld [vmem:[%s1 + $0x620] sm:$0xf]
      %v595 = vld [vmem:[%s1 + $0x624] sm:$0xf]
      %v596 = vld [vmem:[%s1 + $0x628] sm:$0xf]
      %v597 = vld [vmem:[%s1 + $0x62c] sm:$0xf]
      %v598 = vld [vmem:[%s1 + $0x630] sm:$0xf]
      %v599 = vld [vmem:[%s1 + $0x634] sm:$0xf]
      %v600 = vld [vmem:[%s1 + $0x638] sm:$0xf]
      %v601 = vld [vmem:[%s1 + $0x63c] sm:$0xf]
      %v602 = vld [vmem:[%s1 + $0x640] sm:$0xf]
      %v603 = vld [vmem:[%s1 + $0x644] sm:$0xf]
      %v604 = vld [vmem:[%s1 + $0x648] sm:$0xf]
      %v605 = vld [vmem:[%s1 + $0x64c] sm:$0xf]
      %v606 = vld [vmem:[%s1 + $0x650] sm:$0xf]
      %v607 = vld [vmem:[%s1 + $0x654] sm:$0xf]
      %v608 = vld [vmem:[%s1 + $0x658] sm:$0xf]
      %v609 = vld [vmem:[%s1 + $0x65c] sm:$0xf]
      %v610 = vld [vmem:[%s1 + $0x660] sm:$0xf]
      %v611 = vld [vmem:[%s1 + $0x664] sm:$0xf]
      %v612 = vld [vmem:[%s1 + $0x668] sm:$0xf]
      %v613 = vld [vmem:[%s1 + $0x66c] sm:$0xf]
      %v614 = vld [vmem:[%s1 + $0x670] sm:$0xf]
      %v615 = vld [vmem:[%s1 + $0x674] sm:$0xf]
      %v616 = vld [vmem:[%s1 + $0x678] sm:$0xf]
      %v617 = vld [vmem:[%s1 + $0x67c] sm:$0xf]
      %v618 = vld [vmem:[%s1 + $0x680] sm:$0xf]
      %v619 = vld [vmem:[%s1 + $0x684] sm:$0xf]
      %v620 = vld [vmem:[%s1 + $0x688] sm:$0xf]
      %v621 = vld [vmem:[%s1 + $0x68c] sm:$0xf]
      %v622 = vld [vmem:[%s1 + $0x690] sm:$0xf]
      %v623 = vld [vmem:[%s1 + $0x694] sm:$0xf]
      %v624 = vld [vmem:[%s1 + $0x698] sm:$0xf]
      %v625 = vld [vmem:[%s1 + $0x69c] sm:$0xf]
      %v626 = vld [vmem:[%s1 + $0x6a0] sm:$0xf]
      %v627 = vld [vmem:[%s1 + $0x6a4] sm:$0xf]
      %v628 = vld [vmem:[%s1 + $0x6a8] sm:$0xf]
      %v629 = vld [vmem:[%s1 + $0x6ac] sm:$0xf]
      %v630 = vld [vmem:[%s1 + $0x6b0] sm:$0xf]
      %v631 = vld [vmem:[%s1 + $0x6b4] sm:$0xf]
      %v632 = vld [vmem:[%s1 + $0x6b8] sm:$0xf]
      %v633 = vld [vmem:[%s1 + $0x6bc] sm:$0xf]
      %v634 = vld [vmem:[%s1 + $0x6c0] sm:$0xf]
      %v635 = vld [vmem:[%s1 + $0x6c4] sm:$0xf]
      %v636 = vld [vmem:[%s1 + $0x6c8] sm:$0xf]
      %v637 = vld [vmem:[%s1 + $0x6cc] sm:$0xf]
      %v638 = vld [vmem:[%s1 + $0x6d0] sm:$0xf]
      %v639 = vld [vmem:[%s1 + $0x6d4] sm:$0xf]
      %v640 = vld [vmem:[%s1 + $0x6d8] sm:$0xf]
      %v641 = vld [vmem:[%s1 + $0x6dc] sm:$0xf]
      %v642 = vld [vmem:[%s1 + $0x6e0] sm:$0xf]
      %v643 = vld [vmem:[%s1 + $0x6e4] sm:$0xf]
      %v644 = vld [vmem:[%s1 + $0x6e8] sm:$0xf]
      %v645 = vld [vmem:[%s1 + $0x6ec] sm:$0xf]
      %v646 = vld [vmem:[%s1 + $0x6f0] sm:$0xf]
      %v647 = vld [vmem:[%s1 + $0x6f4] sm:$0xf]
      %v648 = vld [vmem:[%s1 + $0x6f8] sm:$0xf]
      %v649 = vld [vmem:[%s1 + $0x6fc] sm:$0xf]
      %v650 = vld [vmem:[%s1 + $0x700] sm:$0xf]
      %v651 = vld [vmem:[%s1 + $0x704] sm:$0xf]
      %v652 = vld [vmem:[%s1 + $0x708] sm:$0xf]
      %v653 = vld [vmem:[%s1 + $0x70c] sm:$0xf]
      %v654 = vld [vmem:[%s1 + $0x710] sm:$0xf]
      %v655 = vld [vmem:[%s1 + $0x714] sm:$0xf]
      %v656 = vld [vmem:[%s1 + $0x718] sm:$0xf]
      %v657 = vld [vmem:[%s1 + $0x71c] sm:$0xf]
      %v658 = vld [vmem:[%s1 + $0x720] sm:$0xf]
      %v659 = vld [vmem:[%s1 + $0x724] sm:$0xf]
      %v660 = vld [vmem:[%s1 + $0x728] sm:$0xf]
      %v661 = vld [vmem:[%s1 + $0x72c] sm:$0xf]
      %v662 = vld [vmem:[%s1 + $0x730] sm:$0xf]
      %v663 = vld [vmem:[%s1 + $0x734] sm:$0xf]
      %v664 = vld [vmem:[%s1 + $0x738] sm:$0xf]
      %v665 = vld [vmem:[%s1 + $0x73c] sm:$0xf]
      %v666 = vld [vmem:[%s1 + $0x740] sm:$0xf]
      %v667 = vld [vmem:[%s1 + $0x744] sm:$0xf]
      %v668 = vld [vmem:[%s1 + $0x748] sm:$0xf]
      %v669 = vld [vmem:[%s1 + $0x74c] sm:$0xf]
      %v670 = vld [vmem:[%s1 + $0x750] sm:$0xf]
      %v671 = vld [vmem:[%s1 + $0x754] sm:$0xf]
      %v672 = vld [vmem:[%s1 + $0x758] sm:$0xf]
      %v673 = vld [vmem:[%s1 + $0x75c] sm:$0xf]
      %v674 = vld [vmem:[%s1 + $0x760] sm:$0xf]
      %v675 = vld [vmem:[%s1 + $0x764] sm:$0xf]
      %v676 = vld [vmem:[%s1 + $0x768] sm:$0xf]
      %v677 = vld [vmem:[%s1 + $0x76c] sm:$0xf]
      %v678 = vld [vmem:[%s1 + $0x770] sm:$0xf]
      %v679 = vld [vmem:[%s1 + $0x774] sm:$0xf]
      %v680 = vld [vmem:[%s1 + $0x778] sm:$0xf]
      %v681 = vld [vmem:[%s1 + $0x77c] sm:$0xf]
      %v682 = vld [vmem:[%s1 + $0x780] sm:$0xf]
      %v683 = vld [vmem:[%s1 + $0x784] sm:$0xf]
      %v684 = vld [vmem:[%s1 + $0x788] sm:$0xf]
      %v685 = vld [vmem:[%s1 + $0x78c] sm:$0xf]
      %v686 = vld [vmem:[%s1 + $0x790] sm:$0xf]
      %v687 = vld [vmem:[%s1 + $0x794] sm:$0xf]
      %v688 = vld [vmem:[%s1 + $0x798] sm:$0xf]
      %v689 = vld [vmem:[%s1 + $0x79c] sm:$0xf]
      %v690 = vld [vmem:[%s1 + $0x7a0] sm:$0xf]
      %v691 = vld [vmem:[%s1 + $0x7a4] sm:$0xf]
      %v692 = vld [vmem:[%s1 + $0x7a8] sm:$0xf]
      %v693 = vld [vmem:[%s1 + $0x7ac] sm:$0xf]
      %v694 = vld [vmem:[%s1 + $0x7b0] sm:$0xf]
      %v695 = vld [vmem:[%s1 + $0x7b4] sm:$0xf]
      %v696 = vld [vmem:[%s1 + $0x7b8] sm:$0xf]
      %v697 = vld [vmem:[%s1 + $0x7bc] sm:$0xf]
      %v698 = vld [vmem:[%s1 + $0x7c0] sm:$0xf]
      %v699 = vld [vmem:[%s1 + $0x7c4] sm:$0xf]
      %v700 = vld [vmem:[%s1 + $0x7c8] sm:$0xf]
      %v701 = vld [vmem:[%s1 + $0x7cc] sm:$0xf]
      %v702 = vld [vmem:[%s1 + $0x7d0] sm:$0xf]
      %v703 = vld [vmem:[%s1 + $0x7d4] sm:$0xf]
      %v704 = vld [vmem:[%s1 + $0x7d8] sm:$0xf]
      %v705 = vld [vmem:[%s1 + $0x7dc] sm:$0xf]
      %v706 = vld [vmem:[%s1 + $0x7e0] sm:$0xf]
      %v707 = vld [vmem:[%s1 + $0x7e4] sm:$0xf]
      %v708 = vld [vmem:[%s1 + $0x7e8] sm:$0xf]
      %v709 = vld [vmem:[%s1 + $0x7ec] sm:$0xf]
      %v710 = vld [vmem:[%s1 + $0x7f0] sm:$0xf]
      %v711 = vld [vmem:[%s1 + $0x7f4] sm:$0xf]
      %v712 = vld [vmem:[%s1 + $0x7f8] sm:$0xf]
      %v713 = vld [vmem:[%s1 + $0x7fc] sm:$0xf]
      %v714 = vld [vmem:[%s2] sm:$0x1]
      %v716 = vlaneseq
      %v717 = vshrl.u32 %v716, 7
      %v718 = vsub.s32 0, %v717
      %v719 = vrot.slane %v714, %v718
      %v737 = vunpack.c.l.b16 %v186
      %v738 = vunpack.c.h.b16 %v186
      %v739 = vunpack.c.l.b16 %v187
      %v740 = vunpack.c.h.b16 %v187
      %v741 = vunpack.c.l.b16 %v188
      %v742 = vunpack.c.h.b16 %v188
      %v743 = vunpack.c.l.b16 %v189
      %v744 = vunpack.c.h.b16 %v189
      %v745 = vunpack.c.l.b16 %v190
      %v746 = vunpack.c.h.b16 %v190
      %v747 = vunpack.c.l.b16 %v191
      %v748 = vunpack.c.h.b16 %v191
      %v749 = vunpack.c.l.b16 %v192
      %v750 = vunpack.c.h.b16 %v192
      %v751 = vunpack.c.l.b16 %v193
      %v752 = vunpack.c.h.b16 %v193
      %v753 = vunpack.c.l.b16 %v194
      %v754 = vunpack.c.h.b16 %v194
      %v755 = vunpack.c.l.b16 %v195
      %v756 = vunpack.c.h.b16 %v195
      %v757 = vunpack.c.l.b16 %v196
      %v758 = vunpack.c.h.b16 %v196
      %v759 = vunpack.c.l.b16 %v197
      %v760 = vunpack.c.h.b16 %v197
      %v761 = vunpack.c.l.b16 %v198
      %v762 = vunpack.c.h.b16 %v198
      %v763 = vunpack.c.l.b16 %v199
      %v764 = vunpack.c.h.b16 %v199
      %v765 = vunpack.c.l.b16 %v200
      %v766 = vunpack.c.h.b16 %v200
      %v767 = vunpack.c.l.b16 %v201
      %v768 = vunpack.c.h.b16 %v201
      %v769 = vpack.c.b16 %v737, %v737
      %v770 = vpack.c.b16 %v738, %v738
      %v771 = vpack.c.b16 %v739, %v739
      %v772 = vpack.c.b16 %v740, %v740
      %v773 = vpack.c.b16 %v741, %v741
      %v774 = vpack.c.b16 %v742, %v742
      %v775 = vpack.c.b16 %v743, %v743
      %v776 = vpack.c.b16 %v744, %v744
      %v777 = vpack.c.b16 %v745, %v745
      %v778 = vpack.c.b16 %v746, %v746
      %v779 = vpack.c.b16 %v747, %v747
      %v780 = vpack.c.b16 %v748, %v748
      %v781 = vpack.c.b16 %v749, %v749
      %v782 = vpack.c.b16 %v750, %v750
      %v783 = vpack.c.b16 %v751, %v751
      %v784 = vpack.c.b16 %v752, %v752
      %v785 = vpack.c.b16 %v753, %v753
      %v786 = vpack.c.b16 %v754, %v754
      %v787 = vpack.c.b16 %v755, %v755
      %v788 = vpack.c.b16 %v756, %v756
      %v789 = vpack.c.b16 %v757, %v757
      %v790 = vpack.c.b16 %v758, %v758
      %v791 = vpack.c.b16 %v759, %v759
      %v792 = vpack.c.b16 %v760, %v760
      %v793 = vpack.c.b16 %v761, %v761
      %v794 = vpack.c.b16 %v762, %v762
      %v795 = vpack.c.b16 %v763, %v763
      %v796 = vpack.c.b16 %v764, %v764
      %v797 = vpack.c.b16 %v765, %v765
      %v798 = vpack.c.b16 %v766, %v766
      %v799 = vpack.c.b16 %v767, %v767
      %v800 = vpack.c.b16 %v768, %v768
      %v1345 = vunpack.c.l.b16 %v202
      %v1346 = vunpack.c.l.b16 %v203
      %v1347 = vunpack.c.l.b16 %v204
      %v1348 = vunpack.c.l.b16 %v205
      %v1349 = vunpack.c.l.b16 %v206
      %v1350 = vunpack.c.l.b16 %v207
      %v1351 = vunpack.c.l.b16 %v208
      %v1352 = vunpack.c.l.b16 %v209
      %v1353 = vunpack.c.l.b16 %v210
      %v1354 = vunpack.c.l.b16 %v211
      %v1355 = vunpack.c.l.b16 %v212
      %v1356 = vunpack.c.l.b16 %v213
      %v1357 = vunpack.c.l.b16 %v214
      %v1358 = vunpack.c.l.b16 %v215
      %v1359 = vunpack.c.l.b16 %v216
      %v1360 = vunpack.c.l.b16 %v217
      %v1361 = vunpack.c.l.b16 %v218
      %v1362 = vunpack.c.l.b16 %v219
      %v1363 = vunpack.c.l.b16 %v220
      %v1364 = vunpack.c.l.b16 %v221
      %v1365 = vunpack.c.l.b16 %v222
      %v1366 = vunpack.c.l.b16 %v223
      %v1367 = vunpack.c.l.b16 %v224
      %v1368 = vunpack.c.l.b16 %v225
      %v1369 = vunpack.c.l.b16 %v226
      %v1370 = vunpack.c.l.b16 %v227
      %v1371 = vunpack.c.l.b16 %v228
      %v1372 = vunpack.c.l.b16 %v229
      %v1373 = vunpack.c.l.b16 %v230
      %v1374 = vunpack.c.l.b16 %v231
      %v1375 = vunpack.c.l.b16 %v232
      %v1376 = vunpack.c.l.b16 %v233
      %v1377 = vunpack.c.l.b16 %v234
      %v1378 = vunpack.c.l.b16 %v235
      %v1379 = vunpack.c.l.b16 %v236
      %v1380 = vunpack.c.l.b16 %v237
      %v1381 = vunpack.c.l.b16 %v238
      %v1382 = vunpack.c.l.b16 %v239
      %v1383 = vunpack.c.l.b16 %v240
      %v1384 = vunpack.c.l.b16 %v241
      %v1385 = vunpack.c.l.b16 %v242
      %v1386 = vunpack.c.l.b16 %v243
      %v1387 = vunpack.c.l.b16 %v244
      %v1388 = vunpack.c.l.b16 %v245
      %v1389 = vunpack.c.l.b16 %v246
      %v1390 = vunpack.c.l.b16 %v247
      %v1391 = vunpack.c.l.b16 %v248
      %v1392 = vunpack.c.l.b16 %v249
      %v1393 = vunpack.c.l.b16 %v250
      %v1394 = vunpack.c.l.b16 %v251
      %v1395 = vunpack.c.l.b16 %v252
      %v1396 = vunpack.c.l.b16 %v253
      %v1397 = vunpack.c.l.b16 %v254
      %v1398 = vunpack.c.l.b16 %v255
      %v1399 = vunpack.c.l.b16 %v256
      %v1400 = vunpack.c.l.b16 %v257
      %v1401 = vunpack.c.l.b16 %v258
      %v1402 = vunpack.c.l.b16 %v259
      %v1403 = vunpack.c.l.b16 %v260
      %v1404 = vunpack.c.l.b16 %v261
      %v1405 = vunpack.c.l.b16 %v262
      %v1406 = vunpack.c.l.b16 %v263
      %v1407 = vunpack.c.l.b16 %v264
      %v1408 = vunpack.c.l.b16 %v265
      %v1409 = vunpack.c.l.b16 %v266
      %v1410 = vunpack.c.l.b16 %v267
      %v1411 = vunpack.c.l.b16 %v268
      %v1412 = vunpack.c.l.b16 %v269
      %v1413 = vunpack.c.l.b16 %v270
      %v1414 = vunpack.c.l.b16 %v271
      %v1415 = vunpack.c.l.b16 %v272
      %v1416 = vunpack.c.l.b16 %v273
      %v1417 = vunpack.c.l.b16 %v274
      %v1418 = vunpack.c.l.b16 %v275
      %v1419 = vunpack.c.l.b16 %v276
      %v1420 = vunpack.c.l.b16 %v277
      %v1421 = vunpack.c.l.b16 %v278
      %v1422 = vunpack.c.l.b16 %v279
      %v1423 = vunpack.c.l.b16 %v280
      %v1424 = vunpack.c.l.b16 %v281
      %v1425 = vunpack.c.l.b16 %v282
      %v1426 = vunpack.c.l.b16 %v283
      %v1427 = vunpack.c.l.b16 %v284
      %v1428 = vunpack.c.l.b16 %v285
      %v1429 = vunpack.c.l.b16 %v286
      %v1430 = vunpack.c.l.b16 %v287
      %v1431 = vunpack.c.l.b16 %v288
      %v1432 = vunpack.c.l.b16 %v289
      %v1433 = vunpack.c.l.b16 %v290
      %v1434 = vunpack.c.l.b16 %v291
      %v1435 = vunpack.c.l.b16 %v292
      %v1436 = vunpack.c.l.b16 %v293
      %v1437 = vunpack.c.l.b16 %v294
      %v1438 = vunpack.c.l.b16 %v295
      %v1439 = vunpack.c.l.b16 %v296
      %v1440 = vunpack.c.l.b16 %v297
      %v1441 = vunpack.c.l.b16 %v298
      %v1442 = vunpack.c.l.b16 %v299
      %v1443 = vunpack.c.l.b16 %v300
      %v1444 = vunpack.c.l.b16 %v301
      %v1445 = vunpack.c.l.b16 %v302
      %v1446 = vunpack.c.l.b16 %v303
      %v1447 = vunpack.c.l.b16 %v304
      %v1448 = vunpack.c.l.b16 %v305
      %v1449 = vunpack.c.l.b16 %v306
      %v1450 = vunpack.c.l.b16 %v307
      %v1451 = vunpack.c.l.b16 %v308
      %v1452 = vunpack.c.l.b16 %v309
      %v1453 = vunpack.c.l.b16 %v310
      %v1454 = vunpack.c.l.b16 %v311
      %v1455 = vunpack.c.l.b16 %v312
      %v1456 = vunpack.c.l.b16 %v313
      %v1457 = vunpack.c.l.b16 %v314
      %v1458 = vunpack.c.l.b16 %v315
      %v1459 = vunpack.c.l.b16 %v316
      %v1460 = vunpack.c.l.b16 %v317
      %v1461 = vunpack.c.l.b16 %v318
      %v1462 = vunpack.c.l.b16 %v319
      %v1463 = vunpack.c.l.b16 %v320
      %v1464 = vunpack.c.l.b16 %v321
      %v1465 = vunpack.c.l.b16 %v322
      %v1466 = vunpack.c.l.b16 %v323
      %v1467 = vunpack.c.l.b16 %v324
      %v1468 = vunpack.c.l.b16 %v325
      %v1469 = vunpack.c.l.b16 %v326
      %v1470 = vunpack.c.l.b16 %v327
      %v1471 = vunpack.c.l.b16 %v328
      %v1472 = vunpack.c.l.b16 %v329
      %v1473 = vunpack.c.l.b16 %v330
      %v1474 = vunpack.c.l.b16 %v331
      %v1475 = vunpack.c.l.b16 %v332
      %v1476 = vunpack.c.l.b16 %v333
      %v1477 = vunpack.c.l.b16 %v334
      %v1478 = vunpack.c.l.b16 %v335
      %v1479 = vunpack.c.l.b16 %v336
      %v1480 = vunpack.c.l.b16 %v337
      %v1481 = vunpack.c.l.b16 %v338
      %v1482 = vunpack.c.l.b16 %v339
      %v1483 = vunpack.c.l.b16 %v340
      %v1484 = vunpack.c.l.b16 %v341
      %v1485 = vunpack.c.l.b16 %v342
      %v1486 = vunpack.c.l.b16 %v343
      %v1487 = vunpack.c.l.b16 %v344
      %v1488 = vunpack.c.l.b16 %v345
      %v1489 = vunpack.c.l.b16 %v346
      %v1490 = vunpack.c.l.b16 %v347
      %v1491 = vunpack.c.l.b16 %v348
      %v1492 = vunpack.c.l.b16 %v349
      %v1493 = vunpack.c.l.b16 %v350
      %v1494 = vunpack.c.l.b16 %v351
      %v1495 = vunpack.c.l.b16 %v352
      %v1496 = vunpack.c.l.b16 %v353
      %v1497 = vunpack.c.l.b16 %v354
      %v1498 = vunpack.c.l.b16 %v355
      %v1499 = vunpack.c.l.b16 %v356
      %v1500 = vunpack.c.l.b16 %v357
      %v1501 = vunpack.c.l.b16 %v358
      %v1502 = vunpack.c.l.b16 %v359
      %v1503 = vunpack.c.l.b16 %v360
      %v1504 = vunpack.c.l.b16 %v361
      %v1505 = vunpack.c.l.b16 %v362
      %v1506 = vunpack.c.l.b16 %v363
      %v1507 = vunpack.c.l.b16 %v364
      %v1508 = vunpack.c.l.b16 %v365
      %v1509 = vunpack.c.l.b16 %v366
      %v1510 = vunpack.c.l.b16 %v367
      %v1511 = vunpack.c.l.b16 %v368
      %v1512 = vunpack.c.l.b16 %v369
      %v1513 = vunpack.c.l.b16 %v370
      %v1514 = vunpack.c.l.b16 %v371
      %v1515 = vunpack.c.l.b16 %v372
      %v1516 = vunpack.c.l.b16 %v373
      %v1517 = vunpack.c.l.b16 %v374
      %v1518 = vunpack.c.l.b16 %v375
      %v1519 = vunpack.c.l.b16 %v376
      %v1520 = vunpack.c.l.b16 %v377
      %v1521 = vunpack.c.l.b16 %v378
      %v1522 = vunpack.c.l.b16 %v379
      %v1523 = vunpack.c.l.b16 %v380
      %v1524 = vunpack.c.l.b16 %v381
      %v1525 = vunpack.c.l.b16 %v382
      %v1526 = vunpack.c.l.b16 %v383
      %v1527 = vunpack.c.l.b16 %v384
      %v1528 = vunpack.c.l.b16 %v385
      %v1529 = vunpack.c.l.b16 %v386
      %v1530 = vunpack.c.l.b16 %v387
      %v1531 = vunpack.c.l.b16 %v388
      %v1532 = vunpack.c.l.b16 %v389
      %v1533 = vunpack.c.l.b16 %v390
      %v1534 = vunpack.c.l.b16 %v391
      %v1535 = vunpack.c.l.b16 %v392
      %v1536 = vunpack.c.l.b16 %v393
      %v1537 = vunpack.c.l.b16 %v394
      %v1538 = vunpack.c.l.b16 %v395
      %v1539 = vunpack.c.l.b16 %v396
      %v1540 = vunpack.c.l.b16 %v397
      %v1541 = vunpack.c.l.b16 %v398
      %v1542 = vunpack.c.l.b16 %v399
      %v1543 = vunpack.c.l.b16 %v400
      %v1544 = vunpack.c.l.b16 %v401
      %v1545 = vunpack.c.l.b16 %v402
      %v1546 = vunpack.c.l.b16 %v403
      %v1547 = vunpack.c.l.b16 %v404
      %v1548 = vunpack.c.l.b16 %v405
      %v1549 = vunpack.c.l.b16 %v406
      %v1550 = vunpack.c.l.b16 %v407
      %v1551 = vunpack.c.l.b16 %v408
      %v1552 = vunpack.c.l.b16 %v409
      %v1553 = vunpack.c.l.b16 %v410
      %v1554 = vunpack.c.l.b16 %v411
      %v1555 = vunpack.c.l.b16 %v412
      %v1556 = vunpack.c.l.b16 %v413
      %v1557 = vunpack.c.l.b16 %v414
      %v1558 = vunpack.c.l.b16 %v415
      %v1559 = vunpack.c.l.b16 %v416
      %v1560 = vunpack.c.l.b16 %v417
      %v1561 = vunpack.c.l.b16 %v418
      %v1562 = vunpack.c.l.b16 %v419
      %v1563 = vunpack.c.l.b16 %v420
      %v1564 = vunpack.c.l.b16 %v421
      %v1565 = vunpack.c.l.b16 %v422
      %v1566 = vunpack.c.l.b16 %v423
      %v1567 = vunpack.c.l.b16 %v424
      %v1568 = vunpack.c.l.b16 %v425
      %v1569 = vunpack.c.l.b16 %v426
      %v1570 = vunpack.c.l.b16 %v427
      %v1571 = vunpack.c.l.b16 %v428
      %v1572 = vunpack.c.l.b16 %v429
      %v1573 = vunpack.c.l.b16 %v430
      %v1574 = vunpack.c.l.b16 %v431
      %v1575 = vunpack.c.l.b16 %v432
      %v1576 = vunpack.c.l.b16 %v433
      %v1577 = vunpack.c.l.b16 %v434
      %v1578 = vunpack.c.l.b16 %v435
      %v1579 = vunpack.c.l.b16 %v436
      %v1580 = vunpack.c.l.b16 %v437
      %v1581 = vunpack.c.l.b16 %v438
      %v1582 = vunpack.c.l.b16 %v439
      %v1583 = vunpack.c.l.b16 %v440
      %v1584 = vunpack.c.l.b16 %v441
      %v1585 = vunpack.c.l.b16 %v442
      %v1586 = vunpack.c.l.b16 %v443
      %v1587 = vunpack.c.l.b16 %v444
      %v1588 = vunpack.c.l.b16 %v445
      %v1589 = vunpack.c.l.b16 %v446
      %v1590 = vunpack.c.l.b16 %v447
      %v1591 = vunpack.c.l.b16 %v448
      %v1592 = vunpack.c.l.b16 %v449
      %v1593 = vunpack.c.l.b16 %v450
      %v1594 = vunpack.c.l.b16 %v451
      %v1595 = vunpack.c.l.b16 %v452
      %v1596 = vunpack.c.l.b16 %v453
      %v1597 = vunpack.c.l.b16 %v454
      %v1598 = vunpack.c.l.b16 %v455
      %v1599 = vunpack.c.l.b16 %v456
      %v1600 = vunpack.c.l.b16 %v457
      %v1601 = vunpack.c.l.b16 %v458
      %v1602 = vunpack.c.l.b16 %v459
      %v1603 = vunpack.c.l.b16 %v460
      %v1604 = vunpack.c.l.b16 %v461
      %v1605 = vunpack.c.l.b16 %v462
      %v1606 = vunpack.c.l.b16 %v463
      %v1607 = vunpack.c.l.b16 %v464
      %v1608 = vunpack.c.l.b16 %v465
      %v1609 = vunpack.c.l.b16 %v466
      %v1610 = vunpack.c.l.b16 %v467
      %v1611 = vunpack.c.l.b16 %v468
      %v1612 = vunpack.c.l.b16 %v469
      %v1613 = vunpack.c.l.b16 %v470
      %v1614 = vunpack.c.l.b16 %v471
      %v1615 = vunpack.c.l.b16 %v472
      %v1616 = vunpack.c.l.b16 %v473
      %v1617 = vunpack.c.l.b16 %v474
      %v1618 = vunpack.c.l.b16 %v475
      %v1619 = vunpack.c.l.b16 %v476
      %v1620 = vunpack.c.l.b16 %v477
      %v1621 = vunpack.c.l.b16 %v478
      %v1622 = vunpack.c.l.b16 %v479
      %v1623 = vunpack.c.l.b16 %v480
      %v1624 = vunpack.c.l.b16 %v481
      %v1625 = vunpack.c.l.b16 %v482
      %v1626 = vunpack.c.l.b16 %v483
      %v1627 = vunpack.c.l.b16 %v484
      %v1628 = vunpack.c.l.b16 %v485
      %v1629 = vunpack.c.l.b16 %v486
      %v1630 = vunpack.c.l.b16 %v487
      %v1631 = vunpack.c.l.b16 %v488
      %v1632 = vunpack.c.l.b16 %v489
      %v1633 = vunpack.c.l.b16 %v490
      %v1634 = vunpack.c.l.b16 %v491
      %v1635 = vunpack.c.l.b16 %v492
      %v1636 = vunpack.c.l.b16 %v493
      %v1637 = vunpack.c.l.b16 %v494
      %v1638 = vunpack.c.l.b16 %v495
      %v1639 = vunpack.c.l.b16 %v496
      %v1640 = vunpack.c.l.b16 %v497
      %v1641 = vunpack.c.l.b16 %v498
      %v1642 = vunpack.c.l.b16 %v499
      %v1643 = vunpack.c.l.b16 %v500
      %v1644 = vunpack.c.l.b16 %v501
      %v1645 = vunpack.c.l.b16 %v502
      %v1646 = vunpack.c.l.b16 %v503
      %v1647 = vunpack.c.l.b16 %v504
      %v1648 = vunpack.c.l.b16 %v505
      %v1649 = vunpack.c.l.b16 %v506
      %v1650 = vunpack.c.l.b16 %v507
      %v1651 = vunpack.c.l.b16 %v508
      %v1652 = vunpack.c.l.b16 %v509
      %v1653 = vunpack.c.l.b16 %v510
      %v1654 = vunpack.c.l.b16 %v511
      %v1655 = vunpack.c.l.b16 %v512
      %v1656 = vunpack.c.l.b16 %v513
      %v1657 = vunpack.c.l.b16 %v514
      %v1658 = vunpack.c.l.b16 %v515
      %v1659 = vunpack.c.l.b16 %v516
      %v1660 = vunpack.c.l.b16 %v517
      %v1661 = vunpack.c.l.b16 %v518
      %v1662 = vunpack.c.l.b16 %v519
      %v1663 = vunpack.c.l.b16 %v520
      %v1664 = vunpack.c.l.b16 %v521
      %v1665 = vunpack.c.l.b16 %v522
      %v1666 = vunpack.c.l.b16 %v523
      %v1667 = vunpack.c.l.b16 %v524
      %v1668 = vunpack.c.l.b16 %v525
      %v1669 = vunpack.c.l.b16 %v526
      %v1670 = vunpack.c.l.b16 %v527
      %v1671 = vunpack.c.l.b16 %v528
      %v1672 = vunpack.c.l.b16 %v529
      %v1673 = vunpack.c.l.b16 %v530
      %v1674 = vunpack.c.l.b16 %v531
      %v1675 = vunpack.c.l.b16 %v532
      %v1676 = vunpack.c.l.b16 %v533
      %v1677 = vunpack.c.l.b16 %v534
      %v1678 = vunpack.c.l.b16 %v535
      %v1679 = vunpack.c.l.b16 %v536
      %v1680 = vunpack.c.l.b16 %v537
      %v1681 = vunpack.c.l.b16 %v538
      %v1682 = vunpack.c.l.b16 %v539
      %v1683 = vunpack.c.l.b16 %v540
      %v1684 = vunpack.c.l.b16 %v541
      %v1685 = vunpack.c.l.b16 %v542
      %v1686 = vunpack.c.l.b16 %v543
      %v1687 = vunpack.c.l.b16 %v544
      %v1688 = vunpack.c.l.b16 %v545
      %v1689 = vunpack.c.l.b16 %v546
      %v1690 = vunpack.c.l.b16 %v547
      %v1691 = vunpack.c.l.b16 %v548
      %v1692 = vunpack.c.l.b16 %v549
      %v1693 = vunpack.c.l.b16 %v550
      %v1694 = vunpack.c.l.b16 %v551
      %v1695 = vunpack.c.l.b16 %v552
      %v1696 = vunpack.c.l.b16 %v553
      %v1697 = vunpack.c.l.b16 %v554
      %v1698 = vunpack.c.l.b16 %v555
      %v1699 = vunpack.c.l.b16 %v556
      %v1700 = vunpack.c.l.b16 %v557
      %v1701 = vunpack.c.l.b16 %v558
      %v1702 = vunpack.c.l.b16 %v559
      %v1703 = vunpack.c.l.b16 %v560
      %v1704 = vunpack.c.l.b16 %v561
      %v1705 = vunpack.c.l.b16 %v562
      %v1706 = vunpack.c.l.b16 %v563
      %v1707 = vunpack.c.l.b16 %v564
      %v1708 = vunpack.c.l.b16 %v565
      %v1709 = vunpack.c.l.b16 %v566
      %v1710 = vunpack.c.l.b16 %v567
      %v1711 = vunpack.c.l.b16 %v568
      %v1712 = vunpack.c.l.b16 %v569
      %v1713 = vunpack.c.l.b16 %v570
      %v1714 = vunpack.c.l.b16 %v571
      %v1715 = vunpack.c.l.b16 %v572
      %v1716 = vunpack.c.l.b16 %v573
      %v1717 = vunpack.c.l.b16 %v574
      %v1718 = vunpack.c.l.b16 %v575
      %v1719 = vunpack.c.l.b16 %v576
      %v1720 = vunpack.c.l.b16 %v577
      %v1721 = vunpack.c.l.b16 %v578
      %v1722 = vunpack.c.l.b16 %v579
      %v1723 = vunpack.c.l.b16 %v580
      %v1724 = vunpack.c.l.b16 %v581
      %v1725 = vunpack.c.l.b16 %v582
      %v1726 = vunpack.c.l.b16 %v583
      %v1727 = vunpack.c.l.b16 %v584
      %v1728 = vunpack.c.l.b16 %v585
      %v1729 = vunpack.c.l.b16 %v586
      %v1730 = vunpack.c.l.b16 %v587
      %v1731 = vunpack.c.l.b16 %v588
      %v1732 = vunpack.c.l.b16 %v589
      %v1733 = vunpack.c.l.b16 %v590
      %v1734 = vunpack.c.l.b16 %v591
      %v1735 = vunpack.c.l.b16 %v592
      %v1736 = vunpack.c.l.b16 %v593
      %v1737 = vunpack.c.l.b16 %v594
      %v1738 = vunpack.c.l.b16 %v595
      %v1739 = vunpack.c.l.b16 %v596
      %v1740 = vunpack.c.l.b16 %v597
      %v1741 = vunpack.c.l.b16 %v598
      %v1742 = vunpack.c.l.b16 %v599
      %v1743 = vunpack.c.l.b16 %v600
      %v1744 = vunpack.c.l.b16 %v601
      %v1745 = vunpack.c.l.b16 %v602
      %v1746 = vunpack.c.l.b16 %v603
      %v1747 = vunpack.c.l.b16 %v604
      %v1748 = vunpack.c.l.b16 %v605
      %v1749 = vunpack.c.l.b16 %v606
      %v1750 = vunpack.c.l.b16 %v607
      %v1751 = vunpack.c.l.b16 %v608
      %v1752 = vunpack.c.l.b16 %v609
      %v1753 = vunpack.c.l.b16 %v610
      %v1754 = vunpack.c.l.b16 %v611
      %v1755 = vunpack.c.l.b16 %v612
      %v1756 = vunpack.c.l.b16 %v613
      %v1757 = vunpack.c.l.b16 %v614
      %v1758 = vunpack.c.l.b16 %v615
      %v1759 = vunpack.c.l.b16 %v616
      %v1760 = vunpack.c.l.b16 %v617
      %v1761 = vunpack.c.l.b16 %v618
      %v1762 = vunpack.c.l.b16 %v619
      %v1763 = vunpack.c.l.b16 %v620
      %v1764 = vunpack.c.l.b16 %v621
      %v1765 = vunpack.c.l.b16 %v622
      %v1766 = vunpack.c.l.b16 %v623
      %v1767 = vunpack.c.l.b16 %v624
      %v1768 = vunpack.c.l.b16 %v625
      %v1769 = vunpack.c.l.b16 %v626
      %v1770 = vunpack.c.l.b16 %v627
      %v1771 = vunpack.c.l.b16 %v628
      %v1772 = vunpack.c.l.b16 %v629
      %v1773 = vunpack.c.l.b16 %v630
      %v1774 = vunpack.c.l.b16 %v631
      %v1775 = vunpack.c.l.b16 %v632
      %v1776 = vunpack.c.l.b16 %v633
      %v1777 = vunpack.c.l.b16 %v634
      %v1778 = vunpack.c.l.b16 %v635
      %v1779 = vunpack.c.l.b16 %v636
      %v1780 = vunpack.c.l.b16 %v637
      %v1781 = vunpack.c.l.b16 %v638
      %v1782 = vunpack.c.l.b16 %v639
      %v1783 = vunpack.c.l.b16 %v640
      %v1784 = vunpack.c.l.b16 %v641
      %v1785 = vunpack.c.l.b16 %v642
      %v1786 = vunpack.c.l.b16 %v643
      %v1787 = vunpack.c.l.b16 %v644
      %v1788 = vunpack.c.l.b16 %v645
      %v1789 = vunpack.c.l.b16 %v646
      %v1790 = vunpack.c.l.b16 %v647
      %v1791 = vunpack.c.l.b16 %v648
      %v1792 = vunpack.c.l.b16 %v649
      %v1793 = vunpack.c.l.b16 %v650
      %v1794 = vunpack.c.l.b16 %v651
      %v1795 = vunpack.c.l.b16 %v652
      %v1796 = vunpack.c.l.b16 %v653
      %v1797 = vunpack.c.l.b16 %v654
      %v1798 = vunpack.c.l.b16 %v655
      %v1799 = vunpack.c.l.b16 %v656
      %v1800 = vunpack.c.l.b16 %v657
      %v1801 = vunpack.c.l.b16 %v658
      %v1802 = vunpack.c.l.b16 %v659
      %v1803 = vunpack.c.l.b16 %v660
      %v1804 = vunpack.c.l.b16 %v661
      %v1805 = vunpack.c.l.b16 %v662
      %v1806 = vunpack.c.l.b16 %v663
      %v1807 = vunpack.c.l.b16 %v664
      %v1808 = vunpack.c.l.b16 %v665
      %v1809 = vunpack.c.l.b16 %v666
      %v1810 = vunpack.c.l.b16 %v667
      %v1811 = vunpack.c.l.b16 %v668
      %v1812 = vunpack.c.l.b16 %v669
      %v1813 = vunpack.c.l.b16 %v670
      %v1814 = vunpack.c.l.b16 %v671
      %v1815 = vunpack.c.l.b16 %v672
      %v1816 = vunpack.c.l.b16 %v673
      %v1817 = vunpack.c.l.b16 %v674
      %v1818 = vunpack.c.l.b16 %v675
      %v1819 = vunpack.c.l.b16 %v676
      %v1820 = vunpack.c.l.b16 %v677
      %v1821 = vunpack.c.l.b16 %v678
      %v1822 = vunpack.c.l.b16 %v679
      %v1823 = vunpack.c.l.b16 %v680
      %v1824 = vunpack.c.l.b16 %v681
      %v1825 = vunpack.c.l.b16 %v682
      %v1826 = vunpack.c.l.b16 %v683
      %v1827 = vunpack.c.l.b16 %v684
      %v1828 = vunpack.c.l.b16 %v685
      %v1829 = vunpack.c.l.b16 %v686
      %v1830 = vunpack.c.l.b16 %v687
      %v1831 = vunpack.c.l.b16 %v688
      %v1832 = vunpack.c.l.b16 %v689
      %v1833 = vunpack.c.l.b16 %v690
      %v1834 = vunpack.c.l.b16 %v691
      %v1835 = vunpack.c.l.b16 %v692
      %v1836 = vunpack.c.l.b16 %v693
      %v1837 = vunpack.c.l.b16 %v694
      %v1838 = vunpack.c.l.b16 %v695
      %v1839 = vunpack.c.l.b16 %v696
      %v1840 = vunpack.c.l.b16 %v697
      %v1841 = vunpack.c.l.b16 %v698
      %v1842 = vunpack.c.l.b16 %v699
      %v1843 = vunpack.c.l.b16 %v700
      %v1844 = vunpack.c.l.b16 %v701
      %v1845 = vunpack.c.l.b16 %v702
      %v1846 = vunpack.c.l.b16 %v703
      %v1847 = vunpack.c.l.b16 %v704
      %v1848 = vunpack.c.l.b16 %v705
      %v1849 = vunpack.c.l.b16 %v706
      %v1850 = vunpack.c.l.b16 %v707
      %v1851 = vunpack.c.l.b16 %v708
      %v1852 = vunpack.c.l.b16 %v709
      %v1853 = vunpack.c.l.b16 %v710
      %v1854 = vunpack.c.l.b16 %v711
      %v1855 = vunpack.c.l.b16 %v712
      %v1856 = vunpack.c.l.b16 %v713
      %v1857 = vpack.c.b16 %v1346, %v1345
      %v1858 = vpack.c.b16 %v1348, %v1347
      %v1859 = vpack.c.b16 %v1350, %v1349
      %v1860 = vpack.c.b16 %v1352, %v1351
      %v1861 = vpack.c.b16 %v1354, %v1353
      %v1862 = vpack.c.b16 %v1356, %v1355
      %v1863 = vpack.c.b16 %v1358, %v1357
      %v1864 = vpack.c.b16 %v1360, %v1359
      %v1865 = vpack.c.b16 %v1362, %v1361
      %v1866 = vpack.c.b16 %v1364, %v1363
      %v1867 = vpack.c.b16 %v1366, %v1365
      %v1868 = vpack.c.b16 %v1368, %v1367
      %v1869 = vpack.c.b16 %v1370, %v1369
      %v1870 = vpack.c.b16 %v1372, %v1371
      %v1871 = vpack.c.b16 %v1374, %v1373
      %v1872 = vpack.c.b16 %v1376, %v1375
      %v1873 = vpack.c.b16 %v1378, %v1377
      %v1874 = vpack.c.b16 %v1380, %v1379
      %v1875 = vpack.c.b16 %v1382, %v1381
      %v1876 = vpack.c.b16 %v1384, %v1383
      %v1877 = vpack.c.b16 %v1386, %v1385
      %v1878 = vpack.c.b16 %v1388, %v1387
      %v1879 = vpack.c.b16 %v1390, %v1389
      %v1880 = vpack.c.b16 %v1392, %v1391
      %v1881 = vpack.c.b16 %v1394, %v1393
      %v1882 = vpack.c.b16 %v1396, %v1395
      %v1883 = vpack.c.b16 %v1398, %v1397
      %v1884 = vpack.c.b16 %v1400, %v1399
      %v1885 = vpack.c.b16 %v1402, %v1401
      %v1886 = vpack.c.b16 %v1404, %v1403
      %v1887 = vpack.c.b16 %v1406, %v1405
      %v1888 = vpack.c.b16 %v1408, %v1407
      %v1889 = vpack.c.b16 %v1410, %v1409
      %v1890 = vpack.c.b16 %v1412, %v1411
      %v1891 = vpack.c.b16 %v1414, %v1413
      %v1892 = vpack.c.b16 %v1416, %v1415
      %v1893 = vpack.c.b16 %v1418, %v1417
      %v1894 = vpack.c.b16 %v1420, %v1419
      %v1895 = vpack.c.b16 %v1422, %v1421
      %v1896 = vpack.c.b16 %v1424, %v1423
      %v1897 = vpack.c.b16 %v1426, %v1425
      %v1898 = vpack.c.b16 %v1428, %v1427
      %v1899 = vpack.c.b16 %v1430, %v1429
      %v1900 = vpack.c.b16 %v1432, %v1431
      %v1901 = vpack.c.b16 %v1434, %v1433
      %v1902 = vpack.c.b16 %v1436, %v1435
      %v1903 = vpack.c.b16 %v1438, %v1437
      %v1904 = vpack.c.b16 %v1440, %v1439
      %v1905 = vpack.c.b16 %v1442, %v1441
      %v1906 = vpack.c.b16 %v1444, %v1443
      %v1907 = vpack.c.b16 %v1446, %v1445
      %v1908 = vpack.c.b16 %v1448, %v1447
      %v1909 = vpack.c.b16 %v1450, %v1449
      %v1910 = vpack.c.b16 %v1452, %v1451
      %v1911 = vpack.c.b16 %v1454, %v1453
      %v1912 = vpack.c.b16 %v1456, %v1455
      %v1913 = vpack.c.b16 %v1458, %v1457
      %v1914 = vpack.c.b16 %v1460, %v1459
      %v1915 = vpack.c.b16 %v1462, %v1461
      %v1916 = vpack.c.b16 %v1464, %v1463
      %v1917 = vpack.c.b16 %v1466, %v1465
      %v1918 = vpack.c.b16 %v1468, %v1467
      %v1919 = vpack.c.b16 %v1470, %v1469
      %v1920 = vpack.c.b16 %v1472, %v1471
      %v1921 = vpack.c.b16 %v1474, %v1473
      %v1922 = vpack.c.b16 %v1476, %v1475
      %v1923 = vpack.c.b16 %v1478, %v1477
      %v1924 = vpack.c.b16 %v1480, %v1479
      %v1925 = vpack.c.b16 %v1482, %v1481
      %v1926 = vpack.c.b16 %v1484, %v1483
      %v1927 = vpack.c.b16 %v1486, %v1485
      %v1928 = vpack.c.b16 %v1488, %v1487
      %v1929 = vpack.c.b16 %v1490, %v1489
      %v1930 = vpack.c.b16 %v1492, %v1491
      %v1931 = vpack.c.b16 %v1494, %v1493
      %v1932 = vpack.c.b16 %v1496, %v1495
      %v1933 = vpack.c.b16 %v1498, %v1497
      %v1934 = vpack.c.b16 %v1500, %v1499
      %v1935 = vpack.c.b16 %v1502, %v1501
      %v1936 = vpack.c.b16 %v1504, %v1503
      %v1937 = vpack.c.b16 %v1506, %v1505
      %v1938 = vpack.c.b16 %v1508, %v1507
      %v1939 = vpack.c.b16 %v1510, %v1509
      %v1940 = vpack.c.b16 %v1512, %v1511
      %v1941 = vpack.c.b16 %v1514, %v1513
      %v1942 = vpack.c.b16 %v1516, %v1515
      %v1943 = vpack.c.b16 %v1518, %v1517
      %v1944 = vpack.c.b16 %v1520, %v1519
      %v1945 = vpack.c.b16 %v1522, %v1521
      %v1946 = vpack.c.b16 %v1524, %v1523
      %v1947 = vpack.c.b16 %v1526, %v1525
      %v1948 = vpack.c.b16 %v1528, %v1527
      %v1949 = vpack.c.b16 %v1530, %v1529
      %v1950 = vpack.c.b16 %v1532, %v1531
      %v1951 = vpack.c.b16 %v1534, %v1533
      %v1952 = vpack.c.b16 %v1536, %v1535
      %v1953 = vpack.c.b16 %v1538, %v1537
      %v1954 = vpack.c.b16 %v1540, %v1539
      %v1955 = vpack.c.b16 %v1542, %v1541
      %v1956 = vpack.c.b16 %v1544, %v1543
      %v1957 = vpack.c.b16 %v1546, %v1545
      %v1958 = vpack.c.b16 %v1548, %v1547
      %v1959 = vpack.c.b16 %v1550, %v1549
      %v1960 = vpack.c.b16 %v1552, %v1551
      %v1961 = vpack.c.b16 %v1554, %v1553
      %v1962 = vpack.c.b16 %v1556, %v1555
      %v1963 = vpack.c.b16 %v1558, %v1557
      %v1964 = vpack.c.b16 %v1560, %v1559
      %v1965 = vpack.c.b16 %v1562, %v1561
      %v1966 = vpack.c.b16 %v1564, %v1563
      %v1967 = vpack.c.b16 %v1566, %v1565
      %v1968 = vpack.c.b16 %v1568, %v1567
      %v1969 = vpack.c.b16 %v1570, %v1569
      %v1970 = vpack.c.b16 %v1572, %v1571
      %v1971 = vpack.c.b16 %v1574, %v1573
      %v1972 = vpack.c.b16 %v1576, %v1575
      %v1973 = vpack.c.b16 %v1578, %v1577
      %v1974 = vpack.c.b16 %v1580, %v1579
      %v1975 = vpack.c.b16 %v1582, %v1581
      %v1976 = vpack.c.b16 %v1584, %v1583
      %v1977 = vpack.c.b16 %v1586, %v1585
      %v1978 = vpack.c.b16 %v1588, %v1587
      %v1979 = vpack.c.b16 %v1590, %v1589
      %v1980 = vpack.c.b16 %v1592, %v1591
      %v1981 = vpack.c.b16 %v1594, %v1593
      %v1982 = vpack.c.b16 %v1596, %v1595
      %v1983 = vpack.c.b16 %v1598, %v1597
      %v1984 = vpack.c.b16 %v1600, %v1599
      %v1985 = vpack.c.b16 %v1602, %v1601
      %v1986 = vpack.c.b16 %v1604, %v1603
      %v1987 = vpack.c.b16 %v1606, %v1605
      %v1988 = vpack.c.b16 %v1608, %v1607
      %v1989 = vpack.c.b16 %v1610, %v1609
      %v1990 = vpack.c.b16 %v1612, %v1611
      %v1991 = vpack.c.b16 %v1614, %v1613
      %v1992 = vpack.c.b16 %v1616, %v1615
      %v1993 = vpack.c.b16 %v1618, %v1617
      %v1994 = vpack.c.b16 %v1620, %v1619
      %v1995 = vpack.c.b16 %v1622, %v1621
      %v1996 = vpack.c.b16 %v1624, %v1623
      %v1997 = vpack.c.b16 %v1626, %v1625
      %v1998 = vpack.c.b16 %v1628, %v1627
      %v1999 = vpack.c.b16 %v1630, %v1629
      %v2000 = vpack.c.b16 %v1632, %v1631
      %v2001 = vpack.c.b16 %v1634, %v1633
      %v2002 = vpack.c.b16 %v1636, %v1635
      %v2003 = vpack.c.b16 %v1638, %v1637
      %v2004 = vpack.c.b16 %v1640, %v1639
      %v2005 = vpack.c.b16 %v1642, %v1641
      %v2006 = vpack.c.b16 %v1644, %v1643
      %v2007 = vpack.c.b16 %v1646, %v1645
      %v2008 = vpack.c.b16 %v1648, %v1647
      %v2009 = vpack.c.b16 %v1650, %v1649
      %v2010 = vpack.c.b16 %v1652, %v1651
      %v2011 = vpack.c.b16 %v1654, %v1653
      %v2012 = vpack.c.b16 %v1656, %v1655
      %v2013 = vpack.c.b16 %v1658, %v1657
      %v2014 = vpack.c.b16 %v1660, %v1659
      %v2015 = vpack.c.b16 %v1662, %v1661
      %v2016 = vpack.c.b16 %v1664, %v1663
      %v2017 = vpack.c.b16 %v1666, %v1665
      %v2018 = vpack.c.b16 %v1668, %v1667
      %v2019 = vpack.c.b16 %v1670, %v1669
      %v2020 = vpack.c.b16 %v1672, %v1671
      %v2021 = vpack.c.b16 %v1674, %v1673
      %v2022 = vpack.c.b16 %v1676, %v1675
      %v2023 = vpack.c.b16 %v1678, %v1677
      %v2024 = vpack.c.b16 %v1680, %v1679
      %v2025 = vpack.c.b16 %v1682, %v1681
      %v2026 = vpack.c.b16 %v1684, %v1683
      %v2027 = vpack.c.b16 %v1686, %v1685
      %v2028 = vpack.c.b16 %v1688, %v1687
      %v2029 = vpack.c.b16 %v1690, %v1689
      %v2030 = vpack.c.b16 %v1692, %v1691
      %v2031 = vpack.c.b16 %v1694, %v1693
      %v2032 = vpack.c.b16 %v1696, %v1695
      %v2033 = vpack.c.b16 %v1698, %v1697
      %v2034 = vpack.c.b16 %v1700, %v1699
      %v2035 = vpack.c.b16 %v1702, %v1701
      %v2036 = vpack.c.b16 %v1704, %v1703
      %v2037 = vpack.c.b16 %v1706, %v1705
      %v2038 = vpack.c.b16 %v1708, %v1707
      %v2039 = vpack.c.b16 %v1710, %v1709
      %v2040 = vpack.c.b16 %v1712, %v1711
      %v2041 = vpack.c.b16 %v1714, %v1713
      %v2042 = vpack.c.b16 %v1716, %v1715
      %v2043 = vpack.c.b16 %v1718, %v1717
      %v2044 = vpack.c.b16 %v1720, %v1719
      %v2045 = vpack.c.b16 %v1722, %v1721
      %v2046 = vpack.c.b16 %v1724, %v1723
      %v2047 = vpack.c.b16 %v1726, %v1725
      %v2048 = vpack.c.b16 %v1728, %v1727
      %v2049 = vpack.c.b16 %v1730, %v1729
      %v2050 = vpack.c.b16 %v1732, %v1731
      %v2051 = vpack.c.b16 %v1734, %v1733
      %v2052 = vpack.c.b16 %v1736, %v1735
      %v2053 = vpack.c.b16 %v1738, %v1737
      %v2054 = vpack.c.b16 %v1740, %v1739
      %v2055 = vpack.c.b16 %v1742, %v1741
      %v2056 = vpack.c.b16 %v1744, %v1743
      %v2057 = vpack.c.b16 %v1746, %v1745
      %v2058 = vpack.c.b16 %v1748, %v1747
      %v2059 = vpack.c.b16 %v1750, %v1749
      %v2060 = vpack.c.b16 %v1752, %v1751
      %v2061 = vpack.c.b16 %v1754, %v1753
      %v2062 = vpack.c.b16 %v1756, %v1755
      %v2063 = vpack.c.b16 %v1758, %v1757
      %v2064 = vpack.c.b16 %v1760, %v1759
      %v2065 = vpack.c.b16 %v1762, %v1761
      %v2066 = vpack.c.b16 %v1764, %v1763
      %v2067 = vpack.c.b16 %v1766, %v1765
      %v2068 = vpack.c.b16 %v1768, %v1767
      %v2069 = vpack.c.b16 %v1770, %v1769
      %v2070 = vpack.c.b16 %v1772, %v1771
      %v2071 = vpack.c.b16 %v1774, %v1773
      %v2072 = vpack.c.b16 %v1776, %v1775
      %v2073 = vpack.c.b16 %v1778, %v1777
      %v2074 = vpack.c.b16 %v1780, %v1779
      %v2075 = vpack.c.b16 %v1782, %v1781
      %v2076 = vpack.c.b16 %v1784, %v1783
      %v2077 = vpack.c.b16 %v1786, %v1785
      %v2078 = vpack.c.b16 %v1788, %v1787
      %v2079 = vpack.c.b16 %v1790, %v1789
      %v2080 = vpack.c.b16 %v1792, %v1791
      %v2081 = vpack.c.b16 %v1794, %v1793
      %v2082 = vpack.c.b16 %v1796, %v1795
      %v2083 = vpack.c.b16 %v1798, %v1797
      %v2084 = vpack.c.b16 %v1800, %v1799
      %v2085 = vpack.c.b16 %v1802, %v1801
      %v2086 = vpack.c.b16 %v1804, %v1803
      %v2087 = vpack.c.b16 %v1806, %v1805
      %v2088 = vpack.c.b16 %v1808, %v1807
      %v2089 = vpack.c.b16 %v1810, %v1809
      %v2090 = vpack.c.b16 %v1812, %v1811
      %v2091 = vpack.c.b16 %v1814, %v1813
      %v2092 = vpack.c.b16 %v1816, %v1815
      %v2093 = vpack.c.b16 %v1818, %v1817
      %v2094 = vpack.c.b16 %v1820, %v1819
      %v2095 = vpack.c.b16 %v1822, %v1821
      %v2096 = vpack.c.b16 %v1824, %v1823
      %v2097 = vpack.c.b16 %v1826, %v1825
      %v2098 = vpack.c.b16 %v1828, %v1827
      %v2099 = vpack.c.b16 %v1830, %v1829
      %v2100 = vpack.c.b16 %v1832, %v1831
      %v2101 = vpack.c.b16 %v1834, %v1833
      %v2102 = vpack.c.b16 %v1836, %v1835
      %v2103 = vpack.c.b16 %v1838, %v1837
      %v2104 = vpack.c.b16 %v1840, %v1839
      %v2105 = vpack.c.b16 %v1842, %v1841
      %v2106 = vpack.c.b16 %v1844, %v1843
      %v2107 = vpack.c.b16 %v1846, %v1845
      %v2108 = vpack.c.b16 %v1848, %v1847
      %v2109 = vpack.c.b16 %v1850, %v1849
      %v2110 = vpack.c.b16 %v1852, %v1851
      %v2111 = vpack.c.b16 %v1854, %v1853
      %v2112 = vpack.c.b16 %v1856, %v1855
      %2369 = vmatprep.subr.bf16.mxu0 0
      %2370 = vmatpush1.bf16.msra.mxu0 %v1864
      %2371 = vmatprep.subr.bf16.mxu0 0
      %2372 = vmatpush1.bf16.msra.mxu0 %v1863
      %2373 = vmatprep.subr.bf16.mxu0 0
      %2374 = vmatpush1.bf16.msra.mxu0 %v1862
      %2375 = vmatprep.subr.bf16.mxu0 0
      %2376 = vmatpush1.bf16.msra.mxu0 %v1861
      %2377 = vmatprep.subr.bf16.mxu0 0
      %2378 = vmatpush1.bf16.msra.mxu0 %v1860
      %2379 = vmatprep.subr.bf16.mxu0 0
      %2380 = vmatpush1.bf16.msra.mxu0 %v1859
      %2381 = vmatprep.subr.bf16.mxu0 0
      %2382 = vmatpush1.bf16.msra.mxu0 %v1858
      %2383 = vmatprep.subr.bf16.mxu0 0
      %2384 = vmatpush1.bf16.msra.mxu0 %v1857
      %2385 = vmatprep.subr.bf16.mxu0 0
      %2386 = vmatpush2.bf16.msra.mxu0 %v1872
      %2387 = vmatprep.subr.bf16.mxu0 0
      %2388 = vmatpush2.bf16.msra.mxu0 %v1871
      %2389 = vmatprep.subr.bf16.mxu0 0
      %2390 = vmatpush2.bf16.msra.mxu0 %v1870
      %2391 = vmatprep.subr.bf16.mxu0 0
      %2392 = vmatpush2.bf16.msra.mxu0 %v1869
      %2393 = vmatprep.subr.bf16.mxu0 0
      %2394 = vmatpush2.bf16.msra.mxu0 %v1868
      %2395 = vmatprep.subr.bf16.mxu0 0
      %2396 = vmatpush2.bf16.msra.mxu0 %v1867
      %2397 = vmatprep.subr.bf16.mxu0 0
      %2398 = vmatpush2.bf16.msra.mxu0 %v1866
      %2399 = vmatprep.subr.bf16.mxu0 0
      %2400 = vmatpush2.bf16.msra.mxu0 %v1865
      %2401 = vmatprep.mubr.bf16.mxu0 %v770
      %2402 = vmatmul.mubr.bf16.gmra.mxu0 %v769
      %v2403 = vpop.f32.mrf.mxu0
      %v2404 = vadd.f32 %v719, %v2403
      %v2405 = vpop.f32.mrf.mxu0
      %v2406 = vpop.f32.mrf.mxu0
      %v2407 = vpop.f32.mrf.mxu0
      %2408 = vdwg.mxu0
      %2409 = vmatprep.subr.bf16.mxu0 0
      %2410 = vmatpush1.bf16.msra.mxu0 %v1880
      %2411 = vmatprep.subr.bf16.mxu0 0
      %2412 = vmatpush1.bf16.msra.mxu0 %v1879
      %2413 = vmatprep.subr.bf16.mxu0 0
      %2414 = vmatpush1.bf16.msra.mxu0 %v1878
      %2415 = vmatprep.subr.bf16.mxu0 0
      %2416 = vmatpush1.bf16.msra.mxu0 %v1877
      %2417 = vmatprep.subr.bf16.mxu0 0
      %2418 = vmatpush1.bf16.msra.mxu0 %v1876
      %2419 = vmatprep.subr.bf16.mxu0 0
      %2420 = vmatpush1.bf16.msra.mxu0 %v1875
      %2421 = vmatprep.subr.bf16.mxu0 0
      %2422 = vmatpush1.bf16.msra.mxu0 %v1874
      %2423 = vmatprep.subr.bf16.mxu0 0
      %2424 = vmatpush1.bf16.msra.mxu0 %v1873
      %2425 = vmatprep.subr.bf16.mxu0 0
      %2426 = vmatpush2.bf16.msra.mxu0 %v1888
      %2427 = vmatprep.subr.bf16.mxu0 0
      %2428 = vmatpush2.bf16.msra.mxu0 %v1887
      %2429 = vmatprep.subr.bf16.mxu0 0
      %2430 = vmatpush2.bf16.msra.mxu0 %v1886
      %2431 = vmatprep.subr.bf16.mxu0 0
      %2432 = vmatpush2.bf16.msra.mxu0 %v1885
      %2433 = vmatprep.subr.bf16.mxu0 0
      %2434 = vmatpush2.bf16.msra.mxu0 %v1884
      %2435 = vmatprep.subr.bf16.mxu0 0
      %2436 = vmatpush2.bf16.msra.mxu0 %v1883
      %2437 = vmatprep.subr.bf16.mxu0 0
      %2438 = vmatpush2.bf16.msra.mxu0 %v1882
      %2439 = vmatprep.subr.bf16.mxu0 0
      %2440 = vmatpush2.bf16.msra.mxu0 %v1881
      %2441 = vmatprep.mubr.bf16.mxu0 %v772
      %2442 = vmatmul.mubr.bf16.gmra.mxu0 %v771
      %v2443 = vpop.f32.mrf.mxu0
      %v2444 = vadd.f32 %v2404, %v2443
      %v2445 = vpop.f32.mrf.mxu0
      %v2446 = vpop.f32.mrf.mxu0
      %v2447 = vpop.f32.mrf.mxu0
      %2448 = vdwg.mxu0
      %2449 = vmatprep.subr.bf16.mxu0 0
      %2450 = vmatpush1.bf16.msra.mxu0 %v1896
      %2451 = vmatprep.subr.bf16.mxu0 0
      %2452 = vmatpush1.bf16.msra.mxu0 %v1895
      %2453 = vmatprep.subr.bf16.mxu0 0
      %2454 = vmatpush1.bf16.msra.mxu0 %v1894
      %2455 = vmatprep.subr.bf16.mxu0 0
      %2456 = vmatpush1.bf16.msra.mxu0 %v1893
      %2457 = vmatprep.subr.bf16.mxu0 0
      %2458 = vmatpush1.bf16.msra.mxu0 %v1892
      %2459 = vmatprep.subr.bf16.mxu0 0
      %2460 = vmatpush1.bf16.msra.mxu0 %v1891
      %2461 = vmatprep.subr.bf16.mxu0 0
      %2462 = vmatpush1.bf16.msra.mxu0 %v1890
      %2463 = vmatprep.subr.bf16.mxu0 0
      %2464 = vmatpush1.bf16.msra.mxu0 %v1889
      %2465 = vmatprep.subr.bf16.mxu0 0
      %2466 = vmatpush2.bf16.msra.mxu0 %v1904
      %2467 = vmatprep.subr.bf16.mxu0 0
      %2468 = vmatpush2.bf16.msra.mxu0 %v1903
      %2469 = vmatprep.subr.bf16.mxu0 0
      %2470 = vmatpush2.bf16.msra.mxu0 %v1902
      %2471 = vmatprep.subr.bf16.mxu0 0
      %2472 = vmatpush2.bf16.msra.mxu0 %v1901
      %2473 = vmatprep.subr.bf16.mxu0 0
      %2474 = vmatpush2.bf16.msra.mxu0 %v1900
      %2475 = vmatprep.subr.bf16.mxu0 0
      %2476 = vmatpush2.bf16.msra.mxu0 %v1899
      %2477 = vmatprep.subr.bf16.mxu0 0
      %2478 = vmatpush2.bf16.msra.mxu0 %v1898
      %2479 = vmatprep.subr.bf16.mxu0 0
      %2480 = vmatpush2.bf16.msra.mxu0 %v1897
      %2481 = vmatprep.mubr.bf16.mxu0 %v774
      %2482 = vmatmul.mubr.bf16.gmra.mxu0 %v773
      %v2483 = vpop.f32.mrf.mxu0
      %v2484 = vadd.f32 %v2444, %v2483
      %v2485 = vpop.f32.mrf.mxu0
      %v2486 = vpop.f32.mrf.mxu0
      %v2487 = vpop.f32.mrf.mxu0
      %2488 = vdwg.mxu0
      %2489 = vmatprep.subr.bf16.mxu0 0
      %2490 = vmatpush1.bf16.msra.mxu0 %v1912
      %2491 = vmatprep.subr.bf16.mxu0 0
      %2492 = vmatpush1.bf16.msra.mxu0 %v1911
      %2493 = vmatprep.subr.bf16.mxu0 0
      %2494 = vmatpush1.bf16.msra.mxu0 %v1910
      %2495 = vmatprep.subr.bf16.mxu0 0
      %2496 = vmatpush1.bf16.msra.mxu0 %v1909
      %2497 = vmatprep.subr.bf16.mxu0 0
      %2498 = vmatpush1.bf16.msra.mxu0 %v1908
      %2499 = vmatprep.subr.bf16.mxu0 0
      %2500 = vmatpush1.bf16.msra.mxu0 %v1907
      %2501 = vmatprep.subr.bf16.mxu0 0
      %2502 = vmatpush1.bf16.msra.mxu0 %v1906
      %2503 = vmatprep.subr.bf16.mxu0 0
      %2504 = vmatpush1.bf16.msra.mxu0 %v1905
      %2505 = vmatprep.subr.bf16.mxu0 0
      %2506 = vmatpush2.bf16.msra.mxu0 %v1920
      %2507 = vmatprep.subr.bf16.mxu0 0
      %2508 = vmatpush2.bf16.msra.mxu0 %v1919
      %2509 = vmatprep.subr.bf16.mxu0 0
      %2510 = vmatpush2.bf16.msra.mxu0 %v1918
      %2511 = vmatprep.subr.bf16.mxu0 0
      %2512 = vmatpush2.bf16.msra.mxu0 %v1917
      %2513 = vmatprep.subr.bf16.mxu0 0
      %2514 = vmatpush2.bf16.msra.mxu0 %v1916
      %2515 = vmatprep.subr.bf16.mxu0 0
      %2516 = vmatpush2.bf16.msra.mxu0 %v1915
      %2517 = vmatprep.subr.bf16.mxu0 0
      %2518 = vmatpush2.bf16.msra.mxu0 %v1914
      %2519 = vmatprep.subr.bf16.mxu0 0
      %2520 = vmatpush2.bf16.msra.mxu0 %v1913
      %2521 = vmatprep.mubr.bf16.mxu0 %v776
      %2522 = vmatmul.mubr.bf16.gmra.mxu0 %v775
      %v2523 = vpop.f32.mrf.mxu0
      %v2524 = vadd.f32 %v2484, %v2523
      %v2525 = vpop.f32.mrf.mxu0
      %v2526 = vpop.f32.mrf.mxu0
      %v2527 = vpop.f32.mrf.mxu0
      %2528 = vdwg.mxu0
      %2529 = vmatprep.subr.bf16.mxu0 0
      %2530 = vmatpush1.bf16.msra.mxu0 %v1928
      %2531 = vmatprep.subr.bf16.mxu0 0
      %2532 = vmatpush1.bf16.msra.mxu0 %v1927
      %2533 = vmatprep.subr.bf16.mxu0 0
      %2534 = vmatpush1.bf16.msra.mxu0 %v1926
      %2535 = vmatprep.subr.bf16.mxu0 0
      %2536 = vmatpush1.bf16.msra.mxu0 %v1925
      %2537 = vmatprep.subr.bf16.mxu0 0
      %2538 = vmatpush1.bf16.msra.mxu0 %v1924
      %2539 = vmatprep.subr.bf16.mxu0 0
      %2540 = vmatpush1.bf16.msra.mxu0 %v1923
      %2541 = vmatprep.subr.bf16.mxu0 0
      %2542 = vmatpush1.bf16.msra.mxu0 %v1922
      %2543 = vmatprep.subr.bf16.mxu0 0
      %2544 = vmatpush1.bf16.msra.mxu0 %v1921
      %2545 = vmatprep.subr.bf16.mxu0 0
      %2546 = vmatpush2.bf16.msra.mxu0 %v1936
      %2547 = vmatprep.subr.bf16.mxu0 0
      %2548 = vmatpush2.bf16.msra.mxu0 %v1935
      %2549 = vmatprep.subr.bf16.mxu0 0
      %2550 = vmatpush2.bf16.msra.mxu0 %v1934
      %2551 = vmatprep.subr.bf16.mxu0 0
      %2552 = vmatpush2.bf16.msra.mxu0 %v1933
      %2553 = vmatprep.subr.bf16.mxu0 0
      %2554 = vmatpush2.bf16.msra.mxu0 %v1932
      %2555 = vmatprep.subr.bf16.mxu0 0
      %2556 = vmatpush2.bf16.msra.mxu0 %v1931
      %2557 = vmatprep.subr.bf16.mxu0 0
      %2558 = vmatpush2.bf16.msra.mxu0 %v1930
      %2559 = vmatprep.subr.bf16.mxu0 0
      %2560 = vmatpush2.bf16.msra.mxu0 %v1929
      %2561 = vmatprep.mubr.bf16.mxu0 %v778
      %2562 = vmatmul.mubr.bf16.gmra.mxu0 %v777
      %v2563 = vpop.f32.mrf.mxu0
      %v2564 = vadd.f32 %v2524, %v2563
      %v2565 = vpop.f32.mrf.mxu0
      %v2566 = vpop.f32.mrf.mxu0
      %v2567 = vpop.f32.mrf.mxu0
      %2568 = vdwg.mxu0
      %2569 = vmatprep.subr.bf16.mxu0 0
      %2570 = vmatpush1.bf16.msra.mxu0 %v1944
      %2571 = vmatprep.subr.bf16.mxu0 0
      %2572 = vmatpush1.bf16.msra.mxu0 %v1943
      %2573 = vmatprep.subr.bf16.mxu0 0
      %2574 = vmatpush1.bf16.msra.mxu0 %v1942
      %2575 = vmatprep.subr.bf16.mxu0 0
      %2576 = vmatpush1.bf16.msra.mxu0 %v1941
      %2577 = vmatprep.subr.bf16.mxu0 0
      %2578 = vmatpush1.bf16.msra.mxu0 %v1940
      %2579 = vmatprep.subr.bf16.mxu0 0
      %2580 = vmatpush1.bf16.msra.mxu0 %v1939
      %2581 = vmatprep.subr.bf16.mxu0 0
      %2582 = vmatpush1.bf16.msra.mxu0 %v1938
      %2583 = vmatprep.subr.bf16.mxu0 0
      %2584 = vmatpush1.bf16.msra.mxu0 %v1937
      %2585 = vmatprep.subr.bf16.mxu0 0
      %2586 = vmatpush2.bf16.msra.mxu0 %v1952
      %2587 = vmatprep.subr.bf16.mxu0 0
      %2588 = vmatpush2.bf16.msra.mxu0 %v1951
      %2589 = vmatprep.subr.bf16.mxu0 0
      %2590 = vmatpush2.bf16.msra.mxu0 %v1950
      %2591 = vmatprep.subr.bf16.mxu0 0
      %2592 = vmatpush2.bf16.msra.mxu0 %v1949
      %2593 = vmatprep.subr.bf16.mxu0 0
      %2594 = vmatpush2.bf16.msra.mxu0 %v1948
      %2595 = vmatprep.subr.bf16.mxu0 0
      %2596 = vmatpush2.bf16.msra.mxu0 %v1947
      %2597 = vmatprep.subr.bf16.mxu0 0
      %2598 = vmatpush2.bf16.msra.mxu0 %v1946
      %2599 = vmatprep.subr.bf16.mxu0 0
      %2600 = vmatpush2.bf16.msra.mxu0 %v1945
      %2601 = vmatprep.mubr.bf16.mxu0 %v780
      %2602 = vmatmul.mubr.bf16.gmra.mxu0 %v779
      %v2603 = vpop.f32.mrf.mxu0
      %v2604 = vadd.f32 %v2564, %v2603
      %v2605 = vpop.f32.mrf.mxu0
      %v2606 = vpop.f32.mrf.mxu0
      %v2607 = vpop.f32.mrf.mxu0
      %2608 = vdwg.mxu0
      %2609 = vmatprep.subr.bf16.mxu0 0
      %2610 = vmatpush1.bf16.msra.mxu0 %v1960
      %2611 = vmatprep.subr.bf16.mxu0 0
      %2612 = vmatpush1.bf16.msra.mxu0 %v1959
      %2613 = vmatprep.subr.bf16.mxu0 0
      %2614 = vmatpush1.bf16.msra.mxu0 %v1958
      %2615 = vmatprep.subr.bf16.mxu0 0
      %2616 = vmatpush1.bf16.msra.mxu0 %v1957
      %2617 = vmatprep.subr.bf16.mxu0 0
      %2618 = vmatpush1.bf16.msra.mxu0 %v1956
      %2619 = vmatprep.subr.bf16.mxu0 0
      %2620 = vmatpush1.bf16.msra.mxu0 %v1955
      %2621 = vmatprep.subr.bf16.mxu0 0
      %2622 = vmatpush1.bf16.msra.mxu0 %v1954
      %2623 = vmatprep.subr.bf16.mxu0 0
      %2624 = vmatpush1.bf16.msra.mxu0 %v1953
      %2625 = vmatprep.subr.bf16.mxu0 0
      %2626 = vmatpush2.bf16.msra.mxu0 %v1968
      %2627 = vmatprep.subr.bf16.mxu0 0
      %2628 = vmatpush2.bf16.msra.mxu0 %v1967
      %2629 = vmatprep.subr.bf16.mxu0 0
      %2630 = vmatpush2.bf16.msra.mxu0 %v1966
      %2631 = vmatprep.subr.bf16.mxu0 0
      %2632 = vmatpush2.bf16.msra.mxu0 %v1965
      %2633 = vmatprep.subr.bf16.mxu0 0
      %2634 = vmatpush2.bf16.msra.mxu0 %v1964
      %2635 = vmatprep.subr.bf16.mxu0 0
      %2636 = vmatpush2.bf16.msra.mxu0 %v1963
      %2637 = vmatprep.subr.bf16.mxu0 0
      %2638 = vmatpush2.bf16.msra.mxu0 %v1962
      %2639 = vmatprep.subr.bf16.mxu0 0
      %2640 = vmatpush2.bf16.msra.mxu0 %v1961
      %2641 = vmatprep.mubr.bf16.mxu0 %v782
      %2642 = vmatmul.mubr.bf16.gmra.mxu0 %v781
      %v2643 = vpop.f32.mrf.mxu0
      %v2644 = vadd.f32 %v2604, %v2643
      %v2645 = vpop.f32.mrf.mxu0
      %v2646 = vpop.f32.mrf.mxu0
      %v2647 = vpop.f32.mrf.mxu0
      %2648 = vdwg.mxu0
      %2649 = vmatprep.subr.bf16.mxu0 0
      %2650 = vmatpush1.bf16.msra.mxu0 %v1976
      %2651 = vmatprep.subr.bf16.mxu0 0
      %2652 = vmatpush1.bf16.msra.mxu0 %v1975
      %2653 = vmatprep.subr.bf16.mxu0 0
      %2654 = vmatpush1.bf16.msra.mxu0 %v1974
      %2655 = vmatprep.subr.bf16.mxu0 0
      %2656 = vmatpush1.bf16.msra.mxu0 %v1973
      %2657 = vmatprep.subr.bf16.mxu0 0
      %2658 = vmatpush1.bf16.msra.mxu0 %v1972
      %2659 = vmatprep.subr.bf16.mxu0 0
      %2660 = vmatpush1.bf16.msra.mxu0 %v1971
      %2661 = vmatprep.subr.bf16.mxu0 0
      %2662 = vmatpush1.bf16.msra.mxu0 %v1970
      %2663 = vmatprep.subr.bf16.mxu0 0
      %2664 = vmatpush1.bf16.msra.mxu0 %v1969
      %2665 = vmatprep.subr.bf16.mxu0 0
      %2666 = vmatpush2.bf16.msra.mxu0 %v1984
      %2667 = vmatprep.subr.bf16.mxu0 0
      %2668 = vmatpush2.bf16.msra.mxu0 %v1983
      %2669 = vmatprep.subr.bf16.mxu0 0
      %2670 = vmatpush2.bf16.msra.mxu0 %v1982
      %2671 = vmatprep.subr.bf16.mxu0 0
      %2672 = vmatpush2.bf16.msra.mxu0 %v1981
      %2673 = vmatprep.subr.bf16.mxu0 0
      %2674 = vmatpush2.bf16.msra.mxu0 %v1980
      %2675 = vmatprep.subr.bf16.mxu0 0
      %2676 = vmatpush2.bf16.msra.mxu0 %v1979
      %2677 = vmatprep.subr.bf16.mxu0 0
      %2678 = vmatpush2.bf16.msra.mxu0 %v1978
      %2679 = vmatprep.subr.bf16.mxu0 0
      %2680 = vmatpush2.bf16.msra.mxu0 %v1977
      %2681 = vmatprep.mubr.bf16.mxu0 %v784
      %2682 = vmatmul.mubr.bf16.gmra.mxu0 %v783
      %v2683 = vpop.f32.mrf.mxu0
      %v2684 = vadd.f32 %v2644, %v2683
      %v2685 = vpop.f32.mrf.mxu0
      %v2686 = vpop.f32.mrf.mxu0
      %v2687 = vpop.f32.mrf.mxu0
      %2688 = vdwg.mxu0
      %2689 = vmatprep.subr.bf16.mxu0 0
      %2690 = vmatpush1.bf16.msra.mxu0 %v1992
      %2691 = vmatprep.subr.bf16.mxu0 0
      %2692 = vmatpush1.bf16.msra.mxu0 %v1991
      %2693 = vmatprep.subr.bf16.mxu0 0
      %2694 = vmatpush1.bf16.msra.mxu0 %v1990
      %2695 = vmatprep.subr.bf16.mxu0 0
      %2696 = vmatpush1.bf16.msra.mxu0 %v1989
      %2697 = vmatprep.subr.bf16.mxu0 0
      %2698 = vmatpush1.bf16.msra.mxu0 %v1988
      %2699 = vmatprep.subr.bf16.mxu0 0
      %2700 = vmatpush1.bf16.msra.mxu0 %v1987
      %2701 = vmatprep.subr.bf16.mxu0 0
      %2702 = vmatpush1.bf16.msra.mxu0 %v1986
      %2703 = vmatprep.subr.bf16.mxu0 0
      %2704 = vmatpush1.bf16.msra.mxu0 %v1985
      %2705 = vmatprep.subr.bf16.mxu0 0
      %2706 = vmatpush2.bf16.msra.mxu0 %v2000
      %2707 = vmatprep.subr.bf16.mxu0 0
      %2708 = vmatpush2.bf16.msra.mxu0 %v1999
      %2709 = vmatprep.subr.bf16.mxu0 0
      %2710 = vmatpush2.bf16.msra.mxu0 %v1998
      %2711 = vmatprep.subr.bf16.mxu0 0
      %2712 = vmatpush2.bf16.msra.mxu0 %v1997
      %2713 = vmatprep.subr.bf16.mxu0 0
      %2714 = vmatpush2.bf16.msra.mxu0 %v1996
      %2715 = vmatprep.subr.bf16.mxu0 0
      %2716 = vmatpush2.bf16.msra.mxu0 %v1995
      %2717 = vmatprep.subr.bf16.mxu0 0
      %2718 = vmatpush2.bf16.msra.mxu0 %v1994
      %2719 = vmatprep.subr.bf16.mxu0 0
      %2720 = vmatpush2.bf16.msra.mxu0 %v1993
      %2721 = vmatprep.mubr.bf16.mxu0 %v786
      %2722 = vmatmul.mubr.bf16.gmra.mxu0 %v785
      %v2723 = vpop.f32.mrf.mxu0
      %v2724 = vadd.f32 %v2684, %v2723
      %v2725 = vpop.f32.mrf.mxu0
      %v2726 = vpop.f32.mrf.mxu0
      %v2727 = vpop.f32.mrf.mxu0
      %2728 = vdwg.mxu0
      %2729 = vmatprep.subr.bf16.mxu0 0
      %2730 = vmatpush1.bf16.msra.mxu0 %v2008
      %2731 = vmatprep.subr.bf16.mxu0 0
      %2732 = vmatpush1.bf16.msra.mxu0 %v2007
      %2733 = vmatprep.subr.bf16.mxu0 0
      %2734 = vmatpush1.bf16.msra.mxu0 %v2006
      %2735 = vmatprep.subr.bf16.mxu0 0
      %2736 = vmatpush1.bf16.msra.mxu0 %v2005
      %2737 = vmatprep.subr.bf16.mxu0 0
      %2738 = vmatpush1.bf16.msra.mxu0 %v2004
      %2739 = vmatprep.subr.bf16.mxu0 0
      %2740 = vmatpush1.bf16.msra.mxu0 %v2003
      %2741 = vmatprep.subr.bf16.mxu0 0
      %2742 = vmatpush1.bf16.msra.mxu0 %v2002
      %2743 = vmatprep.subr.bf16.mxu0 0
      %2744 = vmatpush1.bf16.msra.mxu0 %v2001
      %2745 = vmatprep.subr.bf16.mxu0 0
      %2746 = vmatpush2.bf16.msra.mxu0 %v2016
      %2747 = vmatprep.subr.bf16.mxu0 0
      %2748 = vmatpush2.bf16.msra.mxu0 %v2015
      %2749 = vmatprep.subr.bf16.mxu0 0
      %2750 = vmatpush2.bf16.msra.mxu0 %v2014
      %2751 = vmatprep.subr.bf16.mxu0 0
      %2752 = vmatpush2.bf16.msra.mxu0 %v2013
      %2753 = vmatprep.subr.bf16.mxu0 0
      %2754 = vmatpush2.bf16.msra.mxu0 %v2012
      %2755 = vmatprep.subr.bf16.mxu0 0
      %2756 = vmatpush2.bf16.msra.mxu0 %v2011
      %2757 = vmatprep.subr.bf16.mxu0 0
      %2758 = vmatpush2.bf16.msra.mxu0 %v2010
      %2759 = vmatprep.subr.bf16.mxu0 0
      %2760 = vmatpush2.bf16.msra.mxu0 %v2009
      %2761 = vmatprep.mubr.bf16.mxu0 %v788
      %2762 = vmatmul.mubr.bf16.gmra.mxu0 %v787
      %v2763 = vpop.f32.mrf.mxu0
      %v2764 = vadd.f32 %v2724, %v2763
      %v2765 = vpop.f32.mrf.mxu0
      %v2766 = vpop.f32.mrf.mxu0
      %v2767 = vpop.f32.mrf.mxu0
      %2768 = vdwg.mxu0
      %2769 = vmatprep.subr.bf16.mxu0 0
      %2770 = vmatpush1.bf16.msra.mxu0 %v2024
      %2771 = vmatprep.subr.bf16.mxu0 0
      %2772 = vmatpush1.bf16.msra.mxu0 %v2023
      %2773 = vmatprep.subr.bf16.mxu0 0
      %2774 = vmatpush1.bf16.msra.mxu0 %v2022
      %2775 = vmatprep.subr.bf16.mxu0 0
      %2776 = vmatpush1.bf16.msra.mxu0 %v2021
      %2777 = vmatprep.subr.bf16.mxu0 0
      %2778 = vmatpush1.bf16.msra.mxu0 %v2020
      %2779 = vmatprep.subr.bf16.mxu0 0
      %2780 = vmatpush1.bf16.msra.mxu0 %v2019
      %2781 = vmatprep.subr.bf16.mxu0 0
      %2782 = vmatpush1.bf16.msra.mxu0 %v2018
      %2783 = vmatprep.subr.bf16.mxu0 0
      %2784 = vmatpush1.bf16.msra.mxu0 %v2017
      %2785 = vmatprep.subr.bf16.mxu0 0
      %2786 = vmatpush2.bf16.msra.mxu0 %v2032
      %2787 = vmatprep.subr.bf16.mxu0 0
      %2788 = vmatpush2.bf16.msra.mxu0 %v2031
      %2789 = vmatprep.subr.bf16.mxu0 0
      %2790 = vmatpush2.bf16.msra.mxu0 %v2030
      %2791 = vmatprep.subr.bf16.mxu0 0
      %2792 = vmatpush2.bf16.msra.mxu0 %v2029
      %2793 = vmatprep.subr.bf16.mxu0 0
      %2794 = vmatpush2.bf16.msra.mxu0 %v2028
      %2795 = vmatprep.subr.bf16.mxu0 0
      %2796 = vmatpush2.bf16.msra.mxu0 %v2027
      %2797 = vmatprep.subr.bf16.mxu0 0
      %2798 = vmatpush2.bf16.msra.mxu0 %v2026
      %2799 = vmatprep.subr.bf16.mxu0 0
      %2800 = vmatpush2.bf16.msra.mxu0 %v2025
      %2801 = vmatprep.mubr.bf16.mxu0 %v790
      %2802 = vmatmul.mubr.bf16.gmra.mxu0 %v789
      %v2803 = vpop.f32.mrf.mxu0
      %v2804 = vadd.f32 %v2764, %v2803
      %v2805 = vpop.f32.mrf.mxu0
      %v2806 = vpop.f32.mrf.mxu0
      %v2807 = vpop.f32.mrf.mxu0
      %2808 = vdwg.mxu0
      %2809 = vmatprep.subr.bf16.mxu0 0
      %2810 = vmatpush1.bf16.msra.mxu0 %v2040
      %2811 = vmatprep.subr.bf16.mxu0 0
      %2812 = vmatpush1.bf16.msra.mxu0 %v2039
      %2813 = vmatprep.subr.bf16.mxu0 0
      %2814 = vmatpush1.bf16.msra.mxu0 %v2038
      %2815 = vmatprep.subr.bf16.mxu0 0
      %2816 = vmatpush1.bf16.msra.mxu0 %v2037
      %2817 = vmatprep.subr.bf16.mxu0 0
      %2818 = vmatpush1.bf16.msra.mxu0 %v2036
      %2819 = vmatprep.subr.bf16.mxu0 0
      %2820 = vmatpush1.bf16.msra.mxu0 %v2035
      %2821 = vmatprep.subr.bf16.mxu0 0
      %2822 = vmatpush1.bf16.msra.mxu0 %v2034
      %2823 = vmatprep.subr.bf16.mxu0 0
      %2824 = vmatpush1.bf16.msra.mxu0 %v2033
      %2825 = vmatprep.subr.bf16.mxu0 0
      %2826 = vmatpush2.bf16.msra.mxu0 %v2048
      %2827 = vmatprep.subr.bf16.mxu0 0
      %2828 = vmatpush2.bf16.msra.mxu0 %v2047
      %2829 = vmatprep.subr.bf16.mxu0 0
      %2830 = vmatpush2.bf16.msra.mxu0 %v2046
      %2831 = vmatprep.subr.bf16.mxu0 0
      %2832 = vmatpush2.bf16.msra.mxu0 %v2045
      %2833 = vmatprep.subr.bf16.mxu0 0
      %2834 = vmatpush2.bf16.msra.mxu0 %v2044
      %2835 = vmatprep.subr.bf16.mxu0 0
      %2836 = vmatpush2.bf16.msra.mxu0 %v2043
      %2837 = vmatprep.subr.bf16.mxu0 0
      %2838 = vmatpush2.bf16.msra.mxu0 %v2042
      %2839 = vmatprep.subr.bf16.mxu0 0
      %2840 = vmatpush2.bf16.msra.mxu0 %v2041
      %2841 = vmatprep.mubr.bf16.mxu0 %v792
      %2842 = vmatmul.mubr.bf16.gmra.mxu0 %v791
      %v2843 = vpop.f32.mrf.mxu0
      %v2844 = vadd.f32 %v2804, %v2843
      %v2845 = vpop.f32.mrf.mxu0
      %v2846 = vpop.f32.mrf.mxu0
      %v2847 = vpop.f32.mrf.mxu0
      %2848 = vdwg.mxu0
      %2849 = vmatprep.subr.bf16.mxu0 0
      %2850 = vmatpush1.bf16.msra.mxu0 %v2056
      %2851 = vmatprep.subr.bf16.mxu0 0
      %2852 = vmatpush1.bf16.msra.mxu0 %v2055
      %2853 = vmatprep.subr.bf16.mxu0 0
      %2854 = vmatpush1.bf16.msra.mxu0 %v2054
      %2855 = vmatprep.subr.bf16.mxu0 0
      %2856 = vmatpush1.bf16.msra.mxu0 %v2053
      %2857 = vmatprep.subr.bf16.mxu0 0
      %2858 = vmatpush1.bf16.msra.mxu0 %v2052
      %2859 = vmatprep.subr.bf16.mxu0 0
      %2860 = vmatpush1.bf16.msra.mxu0 %v2051
      %2861 = vmatprep.subr.bf16.mxu0 0
      %2862 = vmatpush1.bf16.msra.mxu0 %v2050
      %2863 = vmatprep.subr.bf16.mxu0 0
      %2864 = vmatpush1.bf16.msra.mxu0 %v2049
      %2865 = vmatprep.subr.bf16.mxu0 0
      %2866 = vmatpush2.bf16.msra.mxu0 %v2064
      %2867 = vmatprep.subr.bf16.mxu0 0
      %2868 = vmatpush2.bf16.msra.mxu0 %v2063
      %2869 = vmatprep.subr.bf16.mxu0 0
      %2870 = vmatpush2.bf16.msra.mxu0 %v2062
      %2871 = vmatprep.subr.bf16.mxu0 0
      %2872 = vmatpush2.bf16.msra.mxu0 %v2061
      %2873 = vmatprep.subr.bf16.mxu0 0
      %2874 = vmatpush2.bf16.msra.mxu0 %v2060
      %2875 = vmatprep.subr.bf16.mxu0 0
      %2876 = vmatpush2.bf16.msra.mxu0 %v2059
      %2877 = vmatprep.subr.bf16.mxu0 0
      %2878 = vmatpush2.bf16.msra.mxu0 %v2058
      %2879 = vmatprep.subr.bf16.mxu0 0
      %2880 = vmatpush2.bf16.msra.mxu0 %v2057
      %2881 = vmatprep.mubr.bf16.mxu0 %v794
      %2882 = vmatmul.mubr.bf16.gmra.mxu0 %v793
      %v2883 = vpop.f32.mrf.mxu0
      %v2884 = vadd.f32 %v2844, %v2883
      %v2885 = vpop.f32.mrf.mxu0
      %v2886 = vpop.f32.mrf.mxu0
      %v2887 = vpop.f32.mrf.mxu0
      %2888 = vdwg.mxu0
      %2889 = vmatprep.subr.bf16.mxu0 0
      %2890 = vmatpush1.bf16.msra.mxu0 %v2072
      %2891 = vmatprep.subr.bf16.mxu0 0
      %2892 = vmatpush1.bf16.msra.mxu0 %v2071
      %2893 = vmatprep.subr.bf16.mxu0 0
      %2894 = vmatpush1.bf16.msra.mxu0 %v2070
      %2895 = vmatprep.subr.bf16.mxu0 0
      %2896 = vmatpush1.bf16.msra.mxu0 %v2069
      %2897 = vmatprep.subr.bf16.mxu0 0
      %2898 = vmatpush1.bf16.msra.mxu0 %v2068
      %2899 = vmatprep.subr.bf16.mxu0 0
      %2900 = vmatpush1.bf16.msra.mxu0 %v2067
      %2901 = vmatprep.subr.bf16.mxu0 0
      %2902 = vmatpush1.bf16.msra.mxu0 %v2066
      %2903 = vmatprep.subr.bf16.mxu0 0
      %2904 = vmatpush1.bf16.msra.mxu0 %v2065
      %2905 = vmatprep.subr.bf16.mxu0 0
      %2906 = vmatpush2.bf16.msra.mxu0 %v2080
      %2907 = vmatprep.subr.bf16.mxu0 0
      %2908 = vmatpush2.bf16.msra.mxu0 %v2079
      %2909 = vmatprep.subr.bf16.mxu0 0
      %2910 = vmatpush2.bf16.msra.mxu0 %v2078
      %2911 = vmatprep.subr.bf16.mxu0 0
      %2912 = vmatpush2.bf16.msra.mxu0 %v2077
      %2913 = vmatprep.subr.bf16.mxu0 0
      %2914 = vmatpush2.bf16.msra.mxu0 %v2076
      %2915 = vmatprep.subr.bf16.mxu0 0
      %2916 = vmatpush2.bf16.msra.mxu0 %v2075
      %2917 = vmatprep.subr.bf16.mxu0 0
      %2918 = vmatpush2.bf16.msra.mxu0 %v2074
      %2919 = vmatprep.subr.bf16.mxu0 0
      %2920 = vmatpush2.bf16.msra.mxu0 %v2073
      %2921 = vmatprep.mubr.bf16.mxu0 %v796
      %2922 = vmatmul.mubr.bf16.gmra.mxu0 %v795
      %v2923 = vpop.f32.mrf.mxu0
      %v2924 = vadd.f32 %v2884, %v2923
      %v2925 = vpop.f32.mrf.mxu0
      %v2926 = vpop.f32.mrf.mxu0
      %v2927 = vpop.f32.mrf.mxu0
      %2928 = vdwg.mxu0
      %2929 = vmatprep.subr.bf16.mxu0 0
      %2930 = vmatpush1.bf16.msra.mxu0 %v2088
      %2931 = vmatprep.subr.bf16.mxu0 0
      %2932 = vmatpush1.bf16.msra.mxu0 %v2087
      %2933 = vmatprep.subr.bf16.mxu0 0
      %2934 = vmatpush1.bf16.msra.mxu0 %v2086
      %2935 = vmatprep.subr.bf16.mxu0 0
      %2936 = vmatpush1.bf16.msra.mxu0 %v2085
      %2937 = vmatprep.subr.bf16.mxu0 0
      %2938 = vmatpush1.bf16.msra.mxu0 %v2084
      %2939 = vmatprep.subr.bf16.mxu0 0
      %2940 = vmatpush1.bf16.msra.mxu0 %v2083
      %2941 = vmatprep.subr.bf16.mxu0 0
      %2942 = vmatpush1.bf16.msra.mxu0 %v2082
      %2943 = vmatprep.subr.bf16.mxu0 0
      %2944 = vmatpush1.bf16.msra.mxu0 %v2081
      %2945 = vmatprep.subr.bf16.mxu0 0
      %2946 = vmatpush2.bf16.msra.mxu0 %v2096
      %2947 = vmatprep.subr.bf16.mxu0 0
      %2948 = vmatpush2.bf16.msra.mxu0 %v2095
      %2949 = vmatprep.subr.bf16.mxu0 0
      %2950 = vmatpush2.bf16.msra.mxu0 %v2094
      %2951 = vmatprep.subr.bf16.mxu0 0
      %2952 = vmatpush2.bf16.msra.mxu0 %v2093
      %2953 = vmatprep.subr.bf16.mxu0 0
      %2954 = vmatpush2.bf16.msra.mxu0 %v2092
      %2955 = vmatprep.subr.bf16.mxu0 0
      %2956 = vmatpush2.bf16.msra.mxu0 %v2091
      %2957 = vmatprep.subr.bf16.mxu0 0
      %2958 = vmatpush2.bf16.msra.mxu0 %v2090
      %2959 = vmatprep.subr.bf16.mxu0 0
      %2960 = vmatpush2.bf16.msra.mxu0 %v2089
      %2961 = vmatprep.mubr.bf16.mxu0 %v798
      %2962 = vmatmul.mubr.bf16.gmra.mxu0 %v797
      %v2963 = vpop.f32.mrf.mxu0
      %v2964 = vadd.f32 %v2924, %v2963
      %v2965 = vpop.f32.mrf.mxu0
      %v2966 = vpop.f32.mrf.mxu0
      %v2967 = vpop.f32.mrf.mxu0
      %2968 = vdwg.mxu0
      %2969 = vmatprep.subr.bf16.mxu0 0
      %2970 = vmatpush1.bf16.msra.mxu0 %v2104
      %2971 = vmatprep.subr.bf16.mxu0 0
      %2972 = vmatpush1.bf16.msra.mxu0 %v2103
      %2973 = vmatprep.subr.bf16.mxu0 0
      %2974 = vmatpush1.bf16.msra.mxu0 %v2102
      %2975 = vmatprep.subr.bf16.mxu0 0
      %2976 = vmatpush1.bf16.msra.mxu0 %v2101
      %2977 = vmatprep.subr.bf16.mxu0 0
      %2978 = vmatpush1.bf16.msra.mxu0 %v2100
      %2979 = vmatprep.subr.bf16.mxu0 0
      %2980 = vmatpush1.bf16.msra.mxu0 %v2099
      %2981 = vmatprep.subr.bf16.mxu0 0
      %2982 = vmatpush1.bf16.msra.mxu0 %v2098
      %2983 = vmatprep.subr.bf16.mxu0 0
      %2984 = vmatpush1.bf16.msra.mxu0 %v2097
      %2985 = vmatprep.subr.bf16.mxu0 0
      %2986 = vmatpush2.bf16.msra.mxu0 %v2112
      %2987 = vmatprep.subr.bf16.mxu0 0
      %2988 = vmatpush2.bf16.msra.mxu0 %v2111
      %2989 = vmatprep.subr.bf16.mxu0 0
      %2990 = vmatpush2.bf16.msra.mxu0 %v2110
      %2991 = vmatprep.subr.bf16.mxu0 0
      %2992 = vmatpush2.bf16.msra.mxu0 %v2109
      %2993 = vmatprep.subr.bf16.mxu0 0
      %2994 = vmatpush2.bf16.msra.mxu0 %v2108
      %2995 = vmatprep.subr.bf16.mxu0 0
      %2996 = vmatpush2.bf16.msra.mxu0 %v2107
      %2997 = vmatprep.subr.bf16.mxu0 0
      %2998 = vmatpush2.bf16.msra.mxu0 %v2106
      %2999 = vmatprep.subr.bf16.mxu0 0
      %3000 = vmatpush2.bf16.msra.mxu0 %v2105
      %3001 = vmatprep.mubr.bf16.mxu0 %v800
      %3002 = vmatmul.mubr.bf16.gmra.mxu0 %v799
      %v3003 = vpop.f32.mrf.mxu0
      %v3004 = vadd.f32 %v2964, %v3003
      %v3005 = vpop.f32.mrf.mxu0
      %v3006 = vpop.f32.mrf.mxu0
      %v3007 = vpop.f32.mrf.mxu0
      %3008 = vdwg.mxu0
      %vm3009 = vcmask 31744
      %3010 = vst.msk [vmem:[%s168] sm:$0xff] %vm3009, %v3004
      %p3011 = scmp.lt.s32.totalorder %s14, 1
      %s3012 = scalar_select %p3011, %s14, 1
      %s3013 = smul.addr %s3012, 8
      %s3014 = scalar_lea.vmem %s3, %s3013
      // Predicated region
      $region33: #{tpu_custom_call.1} parent=31 // pred_check
        %p3015 = pneg %p100
      $region34: #{tpu_custom_call.1} parent=31 // pred_check_branch
        %3017 = sbr.rel (%p3015) target = $region36
      $region35: #{tpu_custom_call.1} parent=31 // pred_region
        _
      $region36: #{tpu_custom_call.1} parent=31 // pred_fallthru
        _
    $region32: #{tpu_custom_call.1} parent=5 // pred_fallthru
      _
    %p3018 = scmp.le.s32.totalorder 2, %s9
    // Predicated region
    $region37: #{tpu_custom_call.1} parent=5 // pred_check
      %p3019 = pneg %p3018
    $region38: #{tpu_custom_call.1} parent=5 // pred_check_branch
      %3021 = sbr.rel (%p3019) target = $region40
    $region39: #{tpu_custom_call.1} parent=5 // pred_region
      %s3022 = ssub.s32 %s9, 2
      // Predicated region
      $region41: #{tpu_custom_call.1} parent=39 // pred_check
        %p3023 = pneg %p106
      $region42: #{tpu_custom_call.1} parent=39 // pred_check_branch
        %3025 = sbr.rel (%p3023) target = $region44
      $region43: #{tpu_custom_call.1} parent=39 // pred_region
        %p3026 = scmp.lt.s32.totalorder %s15, 1
        %s3027 = scalar_select %p3026, %s15, 1
        %s3028 = smul.addr %s3027, 8
        %s3029 = scalar_lea.vmem %s3, %s3028
      $region44: #{tpu_custom_call.1} parent=39 // pred_fallthru
        _
    $region40: #{tpu_custom_call.1} parent=5 // pred_fallthru
      _
  $region6: #{tpu_custom_call.1} parent=0 // loop_footer
    %s13 = sadd.s32 1, %s9
  $region7: #{tpu_custom_call.1} parent=0 // loop_footer_branch
    %8 = sbr.rel target = $region3
  $region8: #{tpu_custom_call.1} parent=0 // loop_exit
    _

</llo_original>
